<compile_context>
chip_gen: v7x
topology: tpu7x:2x2x1
jax: 0.10.0
libtpu: 0.0.40
codegen_flags: <defaults>
</compile_context>

<pallas_src>
import math
from functools import partial

import jax
import jax.numpy as jnp
from jax.experimental import pallas as pl
from jax.experimental.pallas import tpu as pltpu

F32 = jnp.float32
FP = 128  # lane-padded feature width (x_sz = z_sz = h_sz = out_sz = y_sz <= FP)


def _round_up(v, m):
    return ((v + m - 1) // m) * m


# ----------------------------------------------------------------------------
# fused forward kernel: embed -> h_init -> (diffusion + GDU) x (depth+1) ->
# masked log_softmax.  Single grid step, everything lives in VMEM.
# ----------------------------------------------------------------------------
def _difnet_fused_kernel(adj_ref, x_ref, wemb_ref, bemb_ref, wh_ref, bh_ref,
                         w1_ref, b1_ref, w2_ref, b2_ref, o_ref,
                         *, fp, depth, y_sz):
    adj = adj_ref[...]

    # x_res = sigmoid(raw_x_embedding(x));  residual_type == 'raw'
    x_res = jax.nn.sigmoid(
        jnp.dot(x_ref[...], wemb_ref[...], preferred_element_type=F32)
        + bemb_ref[...])

    # h = h_init(x_res);  z = adj @ h   (initial diffusion: no relu / dropout)
    h = jnp.dot(x_res, wh_ref[...], preferred_element_type=F32) + bh_ref[...]
    z = jnp.dot(adj, h, preferred_element_type=F32)

    def gdu(layer, x, zz, hh):
        # fused gate matmuls, one lane-aligned block per input (no concat):
        #   pre = x @ W1x + z @ W1z + h @ W1h + b1   -> cols [f | e | g | r | hp]
        pre = (jnp.dot(x,  w1_ref[layer, 0], preferred_element_type=F32)
               + jnp.dot(zz, w1_ref[layer, 1], preferred_element_type=F32)
               + jnp.dot(hh, w1_ref[layer, 2], preferred_element_type=F32)
               + b1_ref[layer])
        f = jax.nn.sigmoid(pre[:, 0 * fp:1 * fp])   # forget gate (on z)
        e = jax.nn.sigmoid(pre[:, 1 * fp:2 * fp])   # evidence gate (on x)
        g = jax.nn.sigmoid(pre[:, 2 * fp:3 * fp])   # output gate
        r = jax.nn.sigmoid(pre[:, 3 * fp:4 * fp])   # residual gate
        hp = pre[:, 4 * fp:5 * fp]                  # projected-h residual
        # candidate: u = tanh((e*x) @ W2x + (f*z) @ W2z + h @ W2h + b2)
        u = jnp.tanh(
            jnp.dot(e * x,  w2_ref[layer, 0], preferred_element_type=F32)
            + jnp.dot(f * zz, w2_ref[layer, 1], preferred_element_type=F32)
            + jnp.dot(hh,     w2_ref[layer, 2], preferred_element_type=F32)
            + b2_ref[layer])
        return g * u + r * hp

    # layer 0 uses the non-relu'd initial z
    h = gdu(0, x_res, z, h)

    # layers 1..depth-1 and the output GDU (layer == depth) share the pattern:
    #   z = relu(adj @ h); h = gdu(layer)(x_res, z, h)
    # TODO(synk): training-mode dropout(p=0.5) on z is elided (eval == identity).
    for layer in range(1, depth + 1):
        z = jnp.maximum(jnp.dot(adj, h, preferred_element_type=F32), 0.0)
        h = gdu(layer, x_res, z, h)

    # log_softmax over the y_sz valid class columns (rest is lane padding)
    col = jax.lax.broadcasted_iota(jnp.int32, h.shape, 1)
    logits = jnp.where(col < y_sz, h, -1e30)
    m = jnp.max(logits, axis=1, keepdims=True)
    s = jnp.log(jnp.sum(jnp.exp(logits - m), axis=1, keepdims=True))
    o_ref[...] = logits - m - s


# ----------------------------------------------------------------------------
# deterministic parameter construction (uniform(-stdv, stdv) like init_weights)
# packed directly into the fused / lane-padded layout.
# ----------------------------------------------------------------------------
def _linear(key, fan_in, fan_out):
    kw, kb = jax.random.split(key)
    ws = 1.0 / math.sqrt(fan_in)    # torch weight [out, in] -> size(1) = in
    bs = 1.0 / math.sqrt(fan_out)   # bias 1-D -> size(0) = out
    w = jax.random.uniform(kw, (fan_in, fan_out), F32, minval=-ws, maxval=ws)
    b = jax.random.uniform(kb, (fan_out,), F32, minval=-bs, maxval=bs)
    return w, b


def _pad_wb(w, b, rows, cols):
    wp = jnp.zeros((rows, cols), F32).at[: w.shape[0], : w.shape[1]].set(w)
    bp = jnp.zeros((1, cols), F32).at[0, : b.shape[0]].set(b)
    return wp, bp


def _gdu_packed(key, x_sz, z_sz, h_sz, out_sz, fp):
    ks = jax.random.split(key, 6)

    def tri_gate(kk, osz):
        k3 = jax.random.split(kk, 3)
        wx, b = _linear(k3[0], x_sz, osz)
        wz, _ = _linear(k3[1], z_sz, osz)
        wh, _ = _linear(k3[2], h_sz, osz)
        bx = jnp.zeros((fp, fp), F32).at[:x_sz, :osz].set(wx)
        bz = jnp.zeros((fp, fp), F32).at[:z_sz, :osz].set(wz)
        bh = jnp.zeros((fp, fp), F32).at[:h_sz, :osz].set(wh)
        bp = jnp.zeros((1, fp), F32).at[0, :osz].set(b)
        return (bx, bz, bh), bp

    (fx, fz, fh), bf = tri_gate(ks[0], z_sz)       # forget gate (gates z)
    (ex, ez, eh), be = tri_gate(ks[1], x_sz)       # evidence gate (gates x)
    (gx, gz, gh), bg = tri_gate(ks[2], out_sz)     # output gate
    (rx, rz, rh), br = tri_gate(ks[3], out_sz)     # residual gate
    (ux, uz, uh), bu = tri_gate(ks[4], out_sz)     # tanh candidate
    whp_r, bhp_r = _linear(ks[5], h_sz, out_sz)    # projected-h residual
    hpx = jnp.zeros((fp, fp), F32)
    hpz = jnp.zeros((fp, fp), F32)
    hph = jnp.zeros((fp, fp), F32).at[:h_sz, :out_sz].set(whp_r)
    bhp = jnp.zeros((1, fp), F32).at[0, :out_sz].set(bhp_r)

    # per-input-block packing: w1[blk] : [fp, 5*fp] with cols = [f|e|g|r|hp]
    w1 = jnp.stack([
        jnp.concatenate([fx, ex, gx, rx, hpx], axis=1),
        jnp.concatenate([fz, ez, gz, rz, hpz], axis=1),
        jnp.concatenate([fh, eh, gh, rh, hph], axis=1),
    ])                                                   # [3, fp, 5*fp]
    b1 = jnp.concatenate([bf, be, bg, br, bhp], axis=1)  # [1, 5*fp]
    w2 = jnp.stack([ux, uz, uh])                         # [3, fp, fp]
    b2 = bu                                              # [1, fp]
    return w1, b1, w2, b2


def init_difnet_params(key, x_raw_sz, x_sz, z_sz, h_sz, out_sz, y_sz, depth):
    assert max(x_sz, z_sz, h_sz, out_sz, y_sz) <= FP
    xr_pad = _round_up(x_raw_sz, 128)
    keys = jax.random.split(key, depth + 3)
    w_emb, b_emb = _pad_wb(*_linear(keys[0], x_raw_sz, x_sz), xr_pad, FP)
    w_h, b_h = _pad_wb(*_linear(keys[1], x_sz, x_sz), FP, FP)
    layers = [_gdu_packed(keys[2 + i], x_sz, z_sz, h_sz, out_sz, FP)
              for i in range(depth)]
    layers.append(_gdu_packed(keys[2 + depth], x_sz, z_sz, h_sz, y_sz, FP))
    return {
        "emb": (w_emb, b_emb),
        "h_init": (w_h, b_h),
        "w1": jnp.stack([l[0] for l in layers]),   # [depth+1, 3, FP, 5*FP]
        "b1": jnp.stack([l[1] for l in layers]),   # [depth+1, 1, 5*FP]
        "w2": jnp.stack([l[2] for l in layers]),   # [depth+1, 3, FP, FP]
        "b2": jnp.stack([l[3] for l in layers]),   # [depth+1, 1, FP]
    }


# ----------------------------------------------------------------------------
# forward pass (single pallas_call)
# ----------------------------------------------------------------------------
@partial(jax.jit, static_argnames=("y_sz", "depth"))
def difnet_forward(params, adj, x, *, y_sz, depth):
    n, xr = x.shape
    w_emb, b_emb = params["emb"]
    w_h, b_h = params["h_init"]
    xr_pad = w_emb.shape[0]
    n_pad = max(_round_up(n, 8), 8)

    adj_p = jnp.zeros((n_pad, n_pad), F32).at[:n, :n].set(adj.astype(F32))
    x_p = jnp.zeros((n_pad, xr_pad), F32).at[:n, :xr].set(x.astype(F32))

    kernel = partial(_difnet_fused_kernel, fp=FP, depth=depth, y_sz=y_sz)
    vmem_spec = pl.BlockSpec(memory_space=pltpu.MemorySpace.VMEM)
    out = pl.pallas_call(
        kernel,
        out_shape=jax.ShapeDtypeStruct((n_pad, FP), F32),
        in_specs=[vmem_spec] * 10,
        out_specs=vmem_spec,
        compiler_params=pltpu.CompilerParams(vmem_limit_bytes=64 * 1024 * 1024),
    )(adj_p, x_p, w_emb, b_emb, w_h, b_h,
      params["w1"], params["b1"], params["w2"], params["b2"])
    return out[:n, :y_sz]


# ----------------------------------------------------------------------------
# pure-JAX reference (same packed params / same math) for a lowering check
# ----------------------------------------------------------------------------
def _reference_forward(params, adj, x, *, y_sz, depth):
    hi = jax.lax.Precision.HIGHEST
    dot = lambda a, b: jnp.dot(a, b, precision=hi)
    w_emb, b_emb = params["emb"]
    w_h, b_h = params["h_init"]
    n, xr = x.shape
    xr_pad = w_emb.shape[0]
    n_pad = max(_round_up(n, 8), 8)
    adj_p = jnp.zeros((n_pad, n_pad), F32).at[:n, :n].set(adj)
    x_p = jnp.zeros((n_pad, xr_pad), F32).at[:n, :xr].set(x)

    x_res = jax.nn.sigmoid(dot(x_p, w_emb) + b_emb)
    h = dot(x_res, w_h) + b_h
    z = dot(adj_p, h)

    def gdu(l, x_, z_, h_):
        w1, b1 = params["w1"][l], params["b1"][l]
        w2, b2 = params["w2"][l], params["b2"][l]
        pre = dot(x_, w1[0]) + dot(z_, w1[1]) + dot(h_, w1[2]) + b1
        f = jax.nn.sigmoid(pre[:, 0:FP])
        e = jax.nn.sigmoid(pre[:, FP:2 * FP])
        g = jax.nn.sigmoid(pre[:, 2 * FP:3 * FP])
        r = jax.nn.sigmoid(pre[:, 3 * FP:4 * FP])
        hp = pre[:, 4 * FP:5 * FP]
        u = jnp.tanh(dot(e * x_, w2[0]) + dot(f * z_, w2[1])
                     + dot(h_, w2[2]) + b2)
        return g * u + r * hp

    h = gdu(0, x_res, z, h)
    for l in range(1, depth + 1):
        z = jnp.maximum(dot(adj_p, h), 0.0)
        h = gdu(l, x_res, z, h)
    return jax.nn.log_softmax(h[:n, :y_sz], axis=1)


# ----------------------------------------------------------------------------
if __name__ == "__main__":
    # small, conv-free graph sizes implied by the module's forward
    graph_sz = 8        # N nodes
    x_raw_sz = 16       # raw feature dim
    x_sz = z_sz = h_sz = out_sz = 32
    y_sz = 8            # classes
    depth = 2

    key = jax.random.PRNGKey(0)
    k_adj, k_x, k_par = jax.random.split(key, 3)

    # dense (row-normalized) adjacency and raw node features
    a = jax.random.uniform(k_adj, (graph_sz, graph_sz), F32)
    a = (a > 0.5).astype(F32) + jnp.eye(graph_sz, dtype=F32)
    adj = a / jnp.sum(a, axis=1, keepdims=True)
    x = jax.random.normal(k_x, (graph_sz, x_raw_sz), F32)

    params = init_difnet_params(k_par, x_raw_sz, x_sz, z_sz, h_sz, out_sz,
                                y_sz, depth)

    out = difnet_forward(params, adj, x, y_sz=y_sz, depth=depth)
    out = jax.block_until_ready(out)

    assert out.shape == (graph_sz, y_sz)
    # log_softmax rows must sum (in prob space) to 1
    assert jnp.allclose(jnp.sum(jnp.exp(out), axis=1), 1.0, atol=1e-4)
    # check the Pallas lowering against a plain-JAX reference on the same params
    ref = _reference_forward(params, adj, x, y_sz=y_sz, depth=depth)
    assert jnp.allclose(out, ref, atol=2e-2, rtol=2e-2)
    print("KERNEL_OK")
</pallas_src>

<mosaic_0001>
module attributes {stable_mosaic.version = 11 : i64} {
  func.func @_difnet_fused_kernel(%arg0: memref<8x8xf32, #tpu.memory_space<vmem>>, %arg1: memref<8x128xf32, #tpu.memory_space<vmem>>, %arg2: memref<128x128xf32, #tpu.memory_space<vmem>>, %arg3: memref<1x128xf32, #tpu.memory_space<vmem>>, %arg4: memref<128x128xf32, #tpu.memory_space<vmem>>, %arg5: memref<1x128xf32, #tpu.memory_space<vmem>>, %arg6: memref<3x3x128x640xf32, #tpu.memory_space<vmem>>, %arg7: memref<3x1x640xf32, #tpu.memory_space<vmem>>, %arg8: memref<3x3x128x128xf32, #tpu.memory_space<vmem>>, %arg9: memref<3x1x128xf32, #tpu.memory_space<vmem>>, %arg10: memref<8x128xf32, #tpu.memory_space<vmem>>) attributes {dimension_semantics = [], scalar_prefetch = 0 : i64, scratch_operands = 0 : i64, tpu.core_type = #tpu.core_type<tc>} {
    %c0 = arith.constant 0 : index
    %c0_0 = arith.constant 0 : index
    %0 = vector.load %arg0[%c0, %c0_0] : memref<8x8xf32, #tpu.memory_space<vmem>>, vector<8x8xf32>
    %c0_1 = arith.constant 0 : index
    %c0_2 = arith.constant 0 : index
    %1 = vector.load %arg1[%c0_1, %c0_2] : memref<8x128xf32, #tpu.memory_space<vmem>>, vector<8x128xf32>
    %c0_3 = arith.constant 0 : index
    %c0_4 = arith.constant 0 : index
    %2 = vector.load %arg2[%c0_3, %c0_4] : memref<128x128xf32, #tpu.memory_space<vmem>>, vector<128x128xf32>
    %cst = arith.constant dense<0.000000e+00> : vector<8x128xf32>
    %3 = tpu.matmul %1, %2, %cst {dimension_numbers = #tpu.dot_dimension_numbers<[1], [0], [0], [1], [0, 0, 1, 1], [], []>} : vector<8x128xf32>, vector<128x128xf32>, vector<8x128xf32> -> vector<8x128xf32>
    %c0_5 = arith.constant 0 : index
    %c0_6 = arith.constant 0 : index
    %4 = vector.load %arg3[%c0_5, %c0_6] : memref<1x128xf32, #tpu.memory_space<vmem>>, vector<1x128xf32>
    %5 = vector.broadcast %4 : vector<1x128xf32> to vector<8x128xf32>
    %6 = arith.addf %3, %5 : vector<8x128xf32>
    %7 = arith.negf %6 : vector<8x128xf32>
    %8 = math.exp %7 : vector<8x128xf32>
    %cst_7 = arith.constant 1.000000e+00 : f32
    %9 = vector.broadcast %cst_7 : f32 to vector<8x128xf32>
    %10 = arith.addf %9, %8 : vector<8x128xf32>
    %11 = arith.divf %9, %10 : vector<8x128xf32>
    %c0_8 = arith.constant 0 : index
    %c0_9 = arith.constant 0 : index
    %12 = vector.load %arg4[%c0_8, %c0_9] : memref<128x128xf32, #tpu.memory_space<vmem>>, vector<128x128xf32>
    %cst_10 = arith.constant dense<0.000000e+00> : vector<8x128xf32>
    %13 = tpu.matmul %11, %12, %cst_10 {dimension_numbers = #tpu.dot_dimension_numbers<[1], [0], [0], [1], [0, 0, 1, 1], [], []>} : vector<8x128xf32>, vector<128x128xf32>, vector<8x128xf32> -> vector<8x128xf32>
    %c0_11 = arith.constant 0 : index
    %c0_12 = arith.constant 0 : index
    %14 = vector.load %arg5[%c0_11, %c0_12] : memref<1x128xf32, #tpu.memory_space<vmem>>, vector<1x128xf32>
    %15 = vector.broadcast %14 : vector<1x128xf32> to vector<8x128xf32>
    %16 = arith.addf %13, %15 : vector<8x128xf32>
    %cst_13 = arith.constant dense<0.000000e+00> : vector<8x128xf32>
    %17 = tpu.matmul %0, %16, %cst_13 {dimension_numbers = #tpu.dot_dimension_numbers<[1], [0], [0], [1], [0, 0, 1, 1], [], []>} : vector<8x8xf32>, vector<8x128xf32>, vector<8x128xf32> -> vector<8x128xf32>
    %c0_14 = arith.constant 0 : index
    %c0_15 = arith.constant 0 : index
    %c0_16 = arith.constant 0 : index
    %c0_17 = arith.constant 0 : index
    %18 = vector.load %arg6[%c0_14, %c0_15, %c0_16, %c0_17] : memref<3x3x128x640xf32, #tpu.memory_space<vmem>>, vector<1x1x128x640xf32>
    %19 = vector.shape_cast %18 : vector<1x1x128x640xf32> to vector<128x640xf32>
    %cst_18 = arith.constant dense<0.000000e+00> : vector<8x640xf32>
    %20 = tpu.matmul %11, %19, %cst_18 {dimension_numbers = #tpu.dot_dimension_numbers<[1], [0], [0], [1], [0, 0, 1, 1], [], []>} : vector<8x128xf32>, vector<128x640xf32>, vector<8x640xf32> -> vector<8x640xf32>
    %c0_19 = arith.constant 0 : index
    %c1 = arith.constant 1 : index
    %c0_20 = arith.constant 0 : index
    %c0_21 = arith.constant 0 : index
    %21 = vector.load %arg6[%c0_19, %c1, %c0_20, %c0_21] : memref<3x3x128x640xf32, #tpu.memory_space<vmem>>, vector<1x1x128x640xf32>
    %22 = vector.shape_cast %21 : vector<1x1x128x640xf32> to vector<128x640xf32>
    %cst_22 = arith.constant dense<0.000000e+00> : vector<8x640xf32>
    %23 = tpu.matmul %17, %22, %cst_22 {dimension_numbers = #tpu.dot_dimension_numbers<[1], [0], [0], [1], [0, 0, 1, 1], [], []>} : vector<8x128xf32>, vector<128x640xf32>, vector<8x640xf32> -> vector<8x640xf32>
    %24 = arith.addf %20, %23 : vector<8x640xf32>
    %c0_23 = arith.constant 0 : index
    %c2 = arith.constant 2 : index
    %c0_24 = arith.constant 0 : index
    %c0_25 = arith.constant 0 : index
    %25 = vector.load %arg6[%c0_23, %c2, %c0_24, %c0_25] : memref<3x3x128x640xf32, #tpu.memory_space<vmem>>, vector<1x1x128x640xf32>
    %26 = vector.shape_cast %25 : vector<1x1x128x640xf32> to vector<128x640xf32>
    %cst_26 = arith.constant dense<0.000000e+00> : vector<8x640xf32>
    %27 = tpu.matmul %16, %26, %cst_26 {dimension_numbers = #tpu.dot_dimension_numbers<[1], [0], [0], [1], [0, 0, 1, 1], [], []>} : vector<8x128xf32>, vector<128x640xf32>, vector<8x640xf32> -> vector<8x640xf32>
    %28 = arith.addf %24, %27 : vector<8x640xf32>
    %c0_27 = arith.constant 0 : index
    %c0_28 = arith.constant 0 : index
    %c0_29 = arith.constant 0 : index
    %29 = vector.load %arg7[%c0_27, %c0_28, %c0_29] : memref<3x1x640xf32, #tpu.memory_space<vmem>>, vector<1x1x640xf32>
    %30 = vector.shape_cast %29 : vector<1x1x640xf32> to vector<1x640xf32>
    %31 = vector.broadcast %30 : vector<1x640xf32> to vector<8x640xf32>
    %32 = arith.addf %28, %31 : vector<8x640xf32>
    %33 = vector.extract_strided_slice %32 {offsets = [0, 0], sizes = [8, 128], strides = [1, 1]} : vector<8x640xf32> to vector<8x128xf32>
    %34 = arith.negf %33 : vector<8x128xf32>
    %35 = math.exp %34 : vector<8x128xf32>
    %cst_30 = arith.constant 1.000000e+00 : f32
    %36 = vector.broadcast %cst_30 : f32 to vector<8x128xf32>
    %37 = arith.addf %36, %35 : vector<8x128xf32>
    %38 = arith.divf %36, %37 : vector<8x128xf32>
    %39 = vector.extract_strided_slice %32 {offsets = [0, 128], sizes = [8, 128], strides = [1, 1]} : vector<8x640xf32> to vector<8x128xf32>
    %40 = arith.negf %39 : vector<8x128xf32>
    %41 = math.exp %40 : vector<8x128xf32>
    %cst_31 = arith.constant 1.000000e+00 : f32
    %42 = vector.broadcast %cst_31 : f32 to vector<8x128xf32>
    %43 = arith.addf %42, %41 : vector<8x128xf32>
    %44 = arith.divf %42, %43 : vector<8x128xf32>
    %45 = vector.extract_strided_slice %32 {offsets = [0, 256], sizes = [8, 128], strides = [1, 1]} : vector<8x640xf32> to vector<8x128xf32>
    %46 = arith.negf %45 : vector<8x128xf32>
    %47 = math.exp %46 : vector<8x128xf32>
    %cst_32 = arith.constant 1.000000e+00 : f32
    %48 = vector.broadcast %cst_32 : f32 to vector<8x128xf32>
    %49 = arith.addf %48, %47 : vector<8x128xf32>
    %50 = arith.divf %48, %49 : vector<8x128xf32>
    %51 = vector.extract_strided_slice %32 {offsets = [0, 384], sizes = [8, 128], strides = [1, 1]} : vector<8x640xf32> to vector<8x128xf32>
    %52 = arith.negf %51 : vector<8x128xf32>
    %53 = math.exp %52 : vector<8x128xf32>
    %cst_33 = arith.constant 1.000000e+00 : f32
    %54 = vector.broadcast %cst_33 : f32 to vector<8x128xf32>
    %55 = arith.addf %54, %53 : vector<8x128xf32>
    %56 = arith.divf %54, %55 : vector<8x128xf32>
    %57 = vector.extract_strided_slice %32 {offsets = [0, 512], sizes = [8, 128], strides = [1, 1]} : vector<8x640xf32> to vector<8x128xf32>
    %58 = arith.mulf %44, %11 : vector<8x128xf32>
    %c0_34 = arith.constant 0 : index
    %c0_35 = arith.constant 0 : index
    %c0_36 = arith.constant 0 : index
    %c0_37 = arith.constant 0 : index
    %59 = vector.load %arg8[%c0_34, %c0_35, %c0_36, %c0_37] : memref<3x3x128x128xf32, #tpu.memory_space<vmem>>, vector<1x1x128x128xf32>
    %60 = vector.shape_cast %59 : vector<1x1x128x128xf32> to vector<128x128xf32>
    %cst_38 = arith.constant dense<0.000000e+00> : vector<8x128xf32>
    %61 = tpu.matmul %58, %60, %cst_38 {dimension_numbers = #tpu.dot_dimension_numbers<[1], [0], [0], [1], [0, 0, 1, 1], [], []>} : vector<8x128xf32>, vector<128x128xf32>, vector<8x128xf32> -> vector<8x128xf32>
    %62 = arith.mulf %38, %17 : vector<8x128xf32>
    %c0_39 = arith.constant 0 : index
    %c1_40 = arith.constant 1 : index
    %c0_41 = arith.constant 0 : index
    %c0_42 = arith.constant 0 : index
    %63 = vector.load %arg8[%c0_39, %c1_40, %c0_41, %c0_42] : memref<3x3x128x128xf32, #tpu.memory_space<vmem>>, vector<1x1x128x128xf32>
    %64 = vector.shape_cast %63 : vector<1x1x128x128xf32> to vector<128x128xf32>
    %cst_43 = arith.constant dense<0.000000e+00> : vector<8x128xf32>
    %65 = tpu.matmul %62, %64, %cst_43 {dimension_numbers = #tpu.dot_dimension_numbers<[1], [0], [0], [1], [0, 0, 1, 1], [], []>} : vector<8x128xf32>, vector<128x128xf32>, vector<8x128xf32> -> vector<8x128xf32>
    %66 = arith.addf %61, %65 : vector<8x128xf32>
    %c0_44 = arith.constant 0 : index
    %c2_45 = arith.constant 2 : index
    %c0_46 = arith.constant 0 : index
    %c0_47 = arith.constant 0 : index
    %67 = vector.load %arg8[%c0_44, %c2_45, %c0_46, %c0_47] : memref<3x3x128x128xf32, #tpu.memory_space<vmem>>, vector<1x1x128x128xf32>
    %68 = vector.shape_cast %67 : vector<1x1x128x128xf32> to vector<128x128xf32>
    %cst_48 = arith.constant dense<0.000000e+00> : vector<8x128xf32>
    %69 = tpu.matmul %16, %68, %cst_48 {dimension_numbers = #tpu.dot_dimension_numbers<[1], [0], [0], [1], [0, 0, 1, 1], [], []>} : vector<8x128xf32>, vector<128x128xf32>, vector<8x128xf32> -> vector<8x128xf32>
    %70 = arith.addf %66, %69 : vector<8x128xf32>
    %c0_49 = arith.constant 0 : index
    %c0_50 = arith.constant 0 : index
    %c0_51 = arith.constant 0 : index
    %71 = vector.load %arg9[%c0_49, %c0_50, %c0_51] : memref<3x1x128xf32, #tpu.memory_space<vmem>>, vector<1x1x128xf32>
    %72 = vector.shape_cast %71 : vector<1x1x128xf32> to vector<1x128xf32>
    %73 = vector.broadcast %72 : vector<1x128xf32> to vector<8x128xf32>
    %74 = arith.addf %70, %73 : vector<8x128xf32>
    %75 = math.tanh %74 : vector<8x128xf32>
    %76 = arith.mulf %50, %75 : vector<8x128xf32>
    %77 = arith.mulf %56, %57 : vector<8x128xf32>
    %78 = arith.addf %76, %77 : vector<8x128xf32>
    %cst_52 = arith.constant dense<0.000000e+00> : vector<8x128xf32>
    %79 = tpu.matmul %0, %78, %cst_52 {dimension_numbers = #tpu.dot_dimension_numbers<[1], [0], [0], [1], [0, 0, 1, 1], [], []>} : vector<8x8xf32>, vector<8x128xf32>, vector<8x128xf32> -> vector<8x128xf32>
    %cst_53 = arith.constant 0.000000e+00 : f32
    %80 = vector.broadcast %cst_53 : f32 to vector<8x128xf32>
    %81 = arith.maximumf %79, %80 : vector<8x128xf32>
    %c1_54 = arith.constant 1 : index
    %c0_55 = arith.constant 0 : index
    %c0_56 = arith.constant 0 : index
    %c0_57 = arith.constant 0 : index
    %82 = vector.load %arg6[%c1_54, %c0_55, %c0_56, %c0_57] : memref<3x3x128x640xf32, #tpu.memory_space<vmem>>, vector<1x1x128x640xf32>
    %83 = vector.shape_cast %82 : vector<1x1x128x640xf32> to vector<128x640xf32>
    %cst_58 = arith.constant dense<0.000000e+00> : vector<8x640xf32>
    %84 = tpu.matmul %11, %83, %cst_58 {dimension_numbers = #tpu.dot_dimension_numbers<[1], [0], [0], [1], [0, 0, 1, 1], [], []>} : vector<8x128xf32>, vector<128x640xf32>, vector<8x640xf32> -> vector<8x640xf32>
    %c1_59 = arith.constant 1 : index
    %c1_60 = arith.constant 1 : index
    %c0_61 = arith.constant 0 : index
    %c0_62 = arith.constant 0 : index
    %85 = vector.load %arg6[%c1_59, %c1_60, %c0_61, %c0_62] : memref<3x3x128x640xf32, #tpu.memory_space<vmem>>, vector<1x1x128x640xf32>
    %86 = vector.shape_cast %85 : vector<1x1x128x640xf32> to vector<128x640xf32>
    %cst_63 = arith.constant dense<0.000000e+00> : vector<8x640xf32>
    %87 = tpu.matmul %81, %86, %cst_63 {dimension_numbers = #tpu.dot_dimension_numbers<[1], [0], [0], [1], [0, 0, 1, 1], [], []>} : vector<8x128xf32>, vector<128x640xf32>, vector<8x640xf32> -> vector<8x640xf32>
    %88 = arith.addf %84, %87 : vector<8x640xf32>
    %c1_64 = arith.constant 1 : index
    %c2_65 = arith.constant 2 : index
    %c0_66 = arith.constant 0 : index
    %c0_67 = arith.constant 0 : index
    %89 = vector.load %arg6[%c1_64, %c2_65, %c0_66, %c0_67] : memref<3x3x128x640xf32, #tpu.memory_space<vmem>>, vector<1x1x128x640xf32>
    %90 = vector.shape_cast %89 : vector<1x1x128x640xf32> to vector<128x640xf32>
    %cst_68 = arith.constant dense<0.000000e+00> : vector<8x640xf32>
    %91 = tpu.matmul %78, %90, %cst_68 {dimension_numbers = #tpu.dot_dimension_numbers<[1], [0], [0], [1], [0, 0, 1, 1], [], []>} : vector<8x128xf32>, vector<128x640xf32>, vector<8x640xf32> -> vector<8x640xf32>
    %92 = arith.addf %88, %91 : vector<8x640xf32>
    %c1_69 = arith.constant 1 : index
    %c0_70 = arith.constant 0 : index
    %c0_71 = arith.constant 0 : index
    %93 = vector.load %arg7[%c1_69, %c0_70, %c0_71] : memref<3x1x640xf32, #tpu.memory_space<vmem>>, vector<1x1x640xf32>
    %94 = vector.shape_cast %93 : vector<1x1x640xf32> to vector<1x640xf32>
    %95 = vector.broadcast %94 : vector<1x640xf32> to vector<8x640xf32>
    %96 = arith.addf %92, %95 : vector<8x640xf32>
    %97 = vector.extract_strided_slice %96 {offsets = [0, 0], sizes = [8, 128], strides = [1, 1]} : vector<8x640xf32> to vector<8x128xf32>
    %98 = arith.negf %97 : vector<8x128xf32>
    %99 = math.exp %98 : vector<8x128xf32>
    %cst_72 = arith.constant 1.000000e+00 : f32
    %100 = vector.broadcast %cst_72 : f32 to vector<8x128xf32>
    %101 = arith.addf %100, %99 : vector<8x128xf32>
    %102 = arith.divf %100, %101 : vector<8x128xf32>
    %103 = vector.extract_strided_slice %96 {offsets = [0, 128], sizes = [8, 128], strides = [1, 1]} : vector<8x640xf32> to vector<8x128xf32>
    %104 = arith.negf %103 : vector<8x128xf32>
    %105 = math.exp %104 : vector<8x128xf32>
    %cst_73 = arith.constant 1.000000e+00 : f32
    %106 = vector.broadcast %cst_73 : f32 to vector<8x128xf32>
    %107 = arith.addf %106, %105 : vector<8x128xf32>
    %108 = arith.divf %106, %107 : vector<8x128xf32>
    %109 = vector.extract_strided_slice %96 {offsets = [0, 256], sizes = [8, 128], strides = [1, 1]} : vector<8x640xf32> to vector<8x128xf32>
    %110 = arith.negf %109 : vector<8x128xf32>
    %111 = math.exp %110 : vector<8x128xf32>
    %cst_74 = arith.constant 1.000000e+00 : f32
    %112 = vector.broadcast %cst_74 : f32 to vector<8x128xf32>
    %113 = arith.addf %112, %111 : vector<8x128xf32>
    %114 = arith.divf %112, %113 : vector<8x128xf32>
    %115 = vector.extract_strided_slice %96 {offsets = [0, 384], sizes = [8, 128], strides = [1, 1]} : vector<8x640xf32> to vector<8x128xf32>
    %116 = arith.negf %115 : vector<8x128xf32>
    %117 = math.exp %116 : vector<8x128xf32>
    %cst_75 = arith.constant 1.000000e+00 : f32
    %118 = vector.broadcast %cst_75 : f32 to vector<8x128xf32>
    %119 = arith.addf %118, %117 : vector<8x128xf32>
    %120 = arith.divf %118, %119 : vector<8x128xf32>
    %121 = vector.extract_strided_slice %96 {offsets = [0, 512], sizes = [8, 128], strides = [1, 1]} : vector<8x640xf32> to vector<8x128xf32>
    %122 = arith.mulf %108, %11 : vector<8x128xf32>
    %c1_76 = arith.constant 1 : index
    %c0_77 = arith.constant 0 : index
    %c0_78 = arith.constant 0 : index
    %c0_79 = arith.constant 0 : index
    %123 = vector.load %arg8[%c1_76, %c0_77, %c0_78, %c0_79] : memref<3x3x128x128xf32, #tpu.memory_space<vmem>>, vector<1x1x128x128xf32>
    %124 = vector.shape_cast %123 : vector<1x1x128x128xf32> to vector<128x128xf32>
    %cst_80 = arith.constant dense<0.000000e+00> : vector<8x128xf32>
    %125 = tpu.matmul %122, %124, %cst_80 {dimension_numbers = #tpu.dot_dimension_numbers<[1], [0], [0], [1], [0, 0, 1, 1], [], []>} : vector<8x128xf32>, vector<128x128xf32>, vector<8x128xf32> -> vector<8x128xf32>
    %126 = arith.mulf %102, %81 : vector<8x128xf32>
    %c1_81 = arith.constant 1 : index
    %c1_82 = arith.constant 1 : index
    %c0_83 = arith.constant 0 : index
    %c0_84 = arith.constant 0 : index
    %127 = vector.load %arg8[%c1_81, %c1_82, %c0_83, %c0_84] : memref<3x3x128x128xf32, #tpu.memory_space<vmem>>, vector<1x1x128x128xf32>
    %128 = vector.shape_cast %127 : vector<1x1x128x128xf32> to vector<128x128xf32>
    %cst_85 = arith.constant dense<0.000000e+00> : vector<8x128xf32>
    %129 = tpu.matmul %126, %128, %cst_85 {dimension_numbers = #tpu.dot_dimension_numbers<[1], [0], [0], [1], [0, 0, 1, 1], [], []>} : vector<8x128xf32>, vector<128x128xf32>, vector<8x128xf32> -> vector<8x128xf32>
    %130 = arith.addf %125, %129 : vector<8x128xf32>
    %c1_86 = arith.constant 1 : index
    %c2_87 = arith.constant 2 : index
    %c0_88 = arith.constant 0 : index
    %c0_89 = arith.constant 0 : index
    %131 = vector.load %arg8[%c1_86, %c2_87, %c0_88, %c0_89] : memref<3x3x128x128xf32, #tpu.memory_space<vmem>>, vector<1x1x128x128xf32>
    %132 = vector.shape_cast %131 : vector<1x1x128x128xf32> to vector<128x128xf32>
    %cst_90 = arith.constant dense<0.000000e+00> : vector<8x128xf32>
    %133 = tpu.matmul %78, %132, %cst_90 {dimension_numbers = #tpu.dot_dimension_numbers<[1], [0], [0], [1], [0, 0, 1, 1], [], []>} : vector<8x128xf32>, vector<128x128xf32>, vector<8x128xf32> -> vector<8x128xf32>
    %134 = arith.addf %130, %133 : vector<8x128xf32>
    %c1_91 = arith.constant 1 : index
    %c0_92 = arith.constant 0 : index
    %c0_93 = arith.constant 0 : index
    %135 = vector.load %arg9[%c1_91, %c0_92, %c0_93] : memref<3x1x128xf32, #tpu.memory_space<vmem>>, vector<1x1x128xf32>
    %136 = vector.shape_cast %135 : vector<1x1x128xf32> to vector<1x128xf32>
    %137 = vector.broadcast %136 : vector<1x128xf32> to vector<8x128xf32>
    %138 = arith.addf %134, %137 : vector<8x128xf32>
    %139 = math.tanh %138 : vector<8x128xf32>
    %140 = arith.mulf %114, %139 : vector<8x128xf32>
    %141 = arith.mulf %120, %121 : vector<8x128xf32>
    %142 = arith.addf %140, %141 : vector<8x128xf32>
    %cst_94 = arith.constant dense<0.000000e+00> : vector<8x128xf32>
    %143 = tpu.matmul %0, %142, %cst_94 {dimension_numbers = #tpu.dot_dimension_numbers<[1], [0], [0], [1], [0, 0, 1, 1], [], []>} : vector<8x8xf32>, vector<8x128xf32>, vector<8x128xf32> -> vector<8x128xf32>
    %cst_95 = arith.constant 0.000000e+00 : f32
    %144 = vector.broadcast %cst_95 : f32 to vector<8x128xf32>
    %145 = arith.maximumf %143, %144 : vector<8x128xf32>
    %c2_96 = arith.constant 2 : index
    %c0_97 = arith.constant 0 : index
    %c0_98 = arith.constant 0 : index
    %c0_99 = arith.constant 0 : index
    %146 = vector.load %arg6[%c2_96, %c0_97, %c0_98, %c0_99] : memref<3x3x128x640xf32, #tpu.memory_space<vmem>>, vector<1x1x128x640xf32>
    %147 = vector.shape_cast %146 : vector<1x1x128x640xf32> to vector<128x640xf32>
    %cst_100 = arith.constant dense<0.000000e+00> : vector<8x640xf32>
    %148 = tpu.matmul %11, %147, %cst_100 {dimension_numbers = #tpu.dot_dimension_numbers<[1], [0], [0], [1], [0, 0, 1, 1], [], []>} : vector<8x128xf32>, vector<128x640xf32>, vector<8x640xf32> -> vector<8x640xf32>
    %c2_101 = arith.constant 2 : index
    %c1_102 = arith.constant 1 : index
    %c0_103 = arith.constant 0 : index
    %c0_104 = arith.constant 0 : index
    %149 = vector.load %arg6[%c2_101, %c1_102, %c0_103, %c0_104] : memref<3x3x128x640xf32, #tpu.memory_space<vmem>>, vector<1x1x128x640xf32>
    %150 = vector.shape_cast %149 : vector<1x1x128x640xf32> to vector<128x640xf32>
    %cst_105 = arith.constant dense<0.000000e+00> : vector<8x640xf32>
    %151 = tpu.matmul %145, %150, %cst_105 {dimension_numbers = #tpu.dot_dimension_numbers<[1], [0], [0], [1], [0, 0, 1, 1], [], []>} : vector<8x128xf32>, vector<128x640xf32>, vector<8x640xf32> -> vector<8x640xf32>
    %152 = arith.addf %148, %151 : vector<8x640xf32>
    %c2_106 = arith.constant 2 : index
    %c2_107 = arith.constant 2 : index
    %c0_108 = arith.constant 0 : index
    %c0_109 = arith.constant 0 : index
    %153 = vector.load %arg6[%c2_106, %c2_107, %c0_108, %c0_109] : memref<3x3x128x640xf32, #tpu.memory_space<vmem>>, vector<1x1x128x640xf32>
    %154 = vector.shape_cast %153 : vector<1x1x128x640xf32> to vector<128x640xf32>
    %cst_110 = arith.constant dense<0.000000e+00> : vector<8x640xf32>
    %155 = tpu.matmul %142, %154, %cst_110 {dimension_numbers = #tpu.dot_dimension_numbers<[1], [0], [0], [1], [0, 0, 1, 1], [], []>} : vector<8x128xf32>, vector<128x640xf32>, vector<8x640xf32> -> vector<8x640xf32>
    %156 = arith.addf %152, %155 : vector<8x640xf32>
    %c2_111 = arith.constant 2 : index
    %c0_112 = arith.constant 0 : index
    %c0_113 = arith.constant 0 : index
    %157 = vector.load %arg7[%c2_111, %c0_112, %c0_113] : memref<3x1x640xf32, #tpu.memory_space<vmem>>, vector<1x1x640xf32>
    %158 = vector.shape_cast %157 : vector<1x1x640xf32> to vector<1x640xf32>
    %159 = vector.broadcast %158 : vector<1x640xf32> to vector<8x640xf32>
    %160 = arith.addf %156, %159 : vector<8x640xf32>
    %161 = vector.extract_strided_slice %160 {offsets = [0, 0], sizes = [8, 128], strides = [1, 1]} : vector<8x640xf32> to vector<8x128xf32>
    %162 = arith.negf %161 : vector<8x128xf32>
    %163 = math.exp %162 : vector<8x128xf32>
    %cst_114 = arith.constant 1.000000e+00 : f32
    %164 = vector.broadcast %cst_114 : f32 to vector<8x128xf32>
    %165 = arith.addf %164, %163 : vector<8x128xf32>
    %166 = arith.divf %164, %165 : vector<8x128xf32>
    %167 = vector.extract_strided_slice %160 {offsets = [0, 128], sizes = [8, 128], strides = [1, 1]} : vector<8x640xf32> to vector<8x128xf32>
    %168 = arith.negf %167 : vector<8x128xf32>
    %169 = math.exp %168 : vector<8x128xf32>
    %cst_115 = arith.constant 1.000000e+00 : f32
    %170 = vector.broadcast %cst_115 : f32 to vector<8x128xf32>
    %171 = arith.addf %170, %169 : vector<8x128xf32>
    %172 = arith.divf %170, %171 : vector<8x128xf32>
    %173 = vector.extract_strided_slice %160 {offsets = [0, 256], sizes = [8, 128], strides = [1, 1]} : vector<8x640xf32> to vector<8x128xf32>
    %174 = arith.negf %173 : vector<8x128xf32>
    %175 = math.exp %174 : vector<8x128xf32>
    %cst_116 = arith.constant 1.000000e+00 : f32
    %176 = vector.broadcast %cst_116 : f32 to vector<8x128xf32>
    %177 = arith.addf %176, %175 : vector<8x128xf32>
    %178 = arith.divf %176, %177 : vector<8x128xf32>
    %179 = vector.extract_strided_slice %160 {offsets = [0, 384], sizes = [8, 128], strides = [1, 1]} : vector<8x640xf32> to vector<8x128xf32>
    %180 = arith.negf %179 : vector<8x128xf32>
    %181 = math.exp %180 : vector<8x128xf32>
    %cst_117 = arith.constant 1.000000e+00 : f32
    %182 = vector.broadcast %cst_117 : f32 to vector<8x128xf32>
    %183 = arith.addf %182, %181 : vector<8x128xf32>
    %184 = arith.divf %182, %183 : vector<8x128xf32>
    %185 = vector.extract_strided_slice %160 {offsets = [0, 512], sizes = [8, 128], strides = [1, 1]} : vector<8x640xf32> to vector<8x128xf32>
    %186 = arith.mulf %172, %11 : vector<8x128xf32>
    %c2_118 = arith.constant 2 : index
    %c0_119 = arith.constant 0 : index
    %c0_120 = arith.constant 0 : index
    %c0_121 = arith.constant 0 : index
    %187 = vector.load %arg8[%c2_118, %c0_119, %c0_120, %c0_121] : memref<3x3x128x128xf32, #tpu.memory_space<vmem>>, vector<1x1x128x128xf32>
    %188 = vector.shape_cast %187 : vector<1x1x128x128xf32> to vector<128x128xf32>
    %cst_122 = arith.constant dense<0.000000e+00> : vector<8x128xf32>
    %189 = tpu.matmul %186, %188, %cst_122 {dimension_numbers = #tpu.dot_dimension_numbers<[1], [0], [0], [1], [0, 0, 1, 1], [], []>} : vector<8x128xf32>, vector<128x128xf32>, vector<8x128xf32> -> vector<8x128xf32>
    %190 = arith.mulf %166, %145 : vector<8x128xf32>
    %c2_123 = arith.constant 2 : index
    %c1_124 = arith.constant 1 : index
    %c0_125 = arith.constant 0 : index
    %c0_126 = arith.constant 0 : index
    %191 = vector.load %arg8[%c2_123, %c1_124, %c0_125, %c0_126] : memref<3x3x128x128xf32, #tpu.memory_space<vmem>>, vector<1x1x128x128xf32>
    %192 = vector.shape_cast %191 : vector<1x1x128x128xf32> to vector<128x128xf32>
    %cst_127 = arith.constant dense<0.000000e+00> : vector<8x128xf32>
    %193 = tpu.matmul %190, %192, %cst_127 {dimension_numbers = #tpu.dot_dimension_numbers<[1], [0], [0], [1], [0, 0, 1, 1], [], []>} : vector<8x128xf32>, vector<128x128xf32>, vector<8x128xf32> -> vector<8x128xf32>
    %194 = arith.addf %189, %193 : vector<8x128xf32>
    %c2_128 = arith.constant 2 : index
    %c2_129 = arith.constant 2 : index
    %c0_130 = arith.constant 0 : index
    %c0_131 = arith.constant 0 : index
    %195 = vector.load %arg8[%c2_128, %c2_129, %c0_130, %c0_131] : memref<3x3x128x128xf32, #tpu.memory_space<vmem>>, vector<1x1x128x128xf32>
    %196 = vector.shape_cast %195 : vector<1x1x128x128xf32> to vector<128x128xf32>
    %cst_132 = arith.constant dense<0.000000e+00> : vector<8x128xf32>
    %197 = tpu.matmul %142, %196, %cst_132 {dimension_numbers = #tpu.dot_dimension_numbers<[1], [0], [0], [1], [0, 0, 1, 1], [], []>} : vector<8x128xf32>, vector<128x128xf32>, vector<8x128xf32> -> vector<8x128xf32>
    %198 = arith.addf %194, %197 : vector<8x128xf32>
    %c2_133 = arith.constant 2 : index
    %c0_134 = arith.constant 0 : index
    %c0_135 = arith.constant 0 : index
    %199 = vector.load %arg9[%c2_133, %c0_134, %c0_135] : memref<3x1x128xf32, #tpu.memory_space<vmem>>, vector<1x1x128xf32>
    %200 = vector.shape_cast %199 : vector<1x1x128xf32> to vector<1x128xf32>
    %201 = vector.broadcast %200 : vector<1x128xf32> to vector<8x128xf32>
    %202 = arith.addf %198, %201 : vector<8x128xf32>
    %203 = math.tanh %202 : vector<8x128xf32>
    %204 = arith.mulf %178, %203 : vector<8x128xf32>
    %205 = arith.mulf %184, %185 : vector<8x128xf32>
    %206 = arith.addf %204, %205 : vector<8x128xf32>
    %207 = tpu.iota {dimensions = array<i32: 1>} : vector<8x128xi32>
    %c8_i32 = arith.constant 8 : i32
    %208 = vector.broadcast %c8_i32 : i32 to vector<8x128xi32>
    %209 = arith.cmpi slt, %207, %208 : vector<8x128xi32>
    %cst_136 = arith.constant -1.000000e+30 : f32
    %210 = vector.broadcast %cst_136 : f32 to vector<8x128xf32>
    %211 = arith.select %209, %206, %210 : vector<8x128xi1>, vector<8x128xf32>
    %cst_137 = arith.constant dense<0xFF800000> : vector<8xf32>
    %212 = vector.multi_reduction <maximumf>, %211, %cst_137 [1] : vector<8x128xf32> to vector<8xf32>
    %213 = vector.shape_cast %212 : vector<8xf32> to vector<8x1xf32>
    %214 = vector.broadcast %213 : vector<8x1xf32> to vector<8x128xf32>
    %215 = arith.subf %211, %214 : vector<8x128xf32>
    %216 = math.exp %215 : vector<8x128xf32>
    %cst_138 = arith.constant dense<0.000000e+00> : vector<8xf32>
    %217 = vector.multi_reduction <add>, %216, %cst_138 [1] : vector<8x128xf32> to vector<8xf32>
    %218 = vector.shape_cast %217 : vector<8xf32> to vector<8x1xf32>
    %219 = math.log %218 : vector<8x1xf32>
    %220 = vector.broadcast %213 : vector<8x1xf32> to vector<8x128xf32>
    %221 = arith.subf %211, %220 : vector<8x128xf32>
    %222 = vector.broadcast %219 : vector<8x1xf32> to vector<8x128xf32>
    %223 = arith.subf %221, %222 : vector<8x128xf32>
    %c0_139 = arith.constant 0 : index
    %c0_140 = arith.constant 0 : index
    %224 = vector.load %arg10[%c0_139, %c0_140] : memref<8x128xf32, #tpu.memory_space<vmem>>, vector<8x128xf32>
    tpu.vector_store %arg10[%c0_139, %c0_140], %223 {strides = array<i32>} : memref<8x128xf32, #tpu.memory_space<vmem>>, vector<8x128xf32>,
    return
  }
}

</mosaic_0001>

<llo_original>
// kernel: difnet_forward.1
$region0: #{difnet_forward.1}
  #allocation0 [shape = 'u32[]', space=smem, size = 0x4, offset = 0x4, fixed_abs, tag = 'smem constant byte address 0x4 - core index']
  #allocation1 [shape = 'u32[144,128]{1,0:T(1,128)}', space=vmem, size = 0x12000, scoped, tag = 'internal scratch']
  %s0 = inlined_call_operand.hbm [shape: f32[8,8], index: 0, kind: input, shape index: {}]
  %s1 = inlined_call_operand.hbm [shape: f32[8,128], index: 1, kind: input, shape index: {}]
  %s2 = inlined_call_operand.hbm [shape: f32[128,128], index: 2, kind: input, shape index: {}]
  %s3 = inlined_call_operand.hbm [shape: f32[1,128], index: 3, kind: input, shape index: {}]
  %s4 = inlined_call_operand.hbm [shape: f32[128,128], index: 4, kind: input, shape index: {}]
  %s5 = inlined_call_operand.hbm [shape: f32[1,128], index: 5, kind: input, shape index: {}]
  %s6 = inlined_call_operand.hbm [shape: f32[3,3,128,640], index: 6, kind: input, shape index: {}]
  %s7 = inlined_call_operand.hbm [shape: f32[3,1,640], index: 7, kind: input, shape index: {}]
  %s8 = inlined_call_operand.hbm [shape: f32[3,3,128,128], index: 8, kind: input, shape index: {}]
  %s9 = inlined_call_operand.hbm [shape: f32[3,1,128], index: 9, kind: input, shape index: {}]
  %s10 = inlined_call_operand.hbm [shape: f32[8,128], index: 10, kind: output, shape index: {}]
  %s11 = sld [smem:[#allocation0]]
  $region90: #{difnet_forward.1} parent=0
    _
  %s13 = ssub.s32 1, %s11
  %s14 = scalar_select 0, %s13, %s11
  $region1: #{difnet_forward.1} parent=0
    #allocation2 [shape = 'u8[4096]{0}', space=vmem, size = 0x1000, scoped, tag = 'input window, operand 0, single buffered']
    #allocation3 [shape = 's32[1]{0}', space=sflag, size = 0x4, scoped, tag = 'scoped memory for difnet_forward.1']
    #allocation4 [shape = 's32[1]{0}', space=sflag, size = 0x4, scoped, tag = 'scoped memory for difnet_forward.1']
    #allocation5 [shape = 'u8[4096]{0}', space=vmem, size = 0x1000, scoped, tag = 'input window, operand 1, single buffered']
    #allocation6 [shape = 's32[1]{0}', space=sflag, size = 0x4, scoped, tag = 'scoped memory for difnet_forward.1']
    #allocation7 [shape = 'u8[65536]{0}', space=vmem, size = 0x10000, scoped, tag = 'input window, operand 2, single buffered']
    #allocation8 [shape = 'u8[512]{0}', space=vmem, size = 0x400, scoped, tag = 'input window, operand 3, single buffered']
    #allocation9 [shape = 's32[1]{0}', space=sflag, size = 0x4, scoped, tag = 'scoped memory for difnet_forward.1']
    #allocation10 [shape = 'u8[65536]{0}', space=vmem, size = 0x10000, scoped, tag = 'input window, operand 4, single buffered']
    #allocation11 [shape = 'u8[512]{0}', space=vmem, size = 0x400, scoped, tag = 'input window, operand 5, single buffered']
    #allocation12 [shape = 's32[1]{0}', space=sflag, size = 0x4, scoped, tag = 'scoped memory for difnet_forward.1']
    #allocation13 [shape = 'u8[2949120]{0}', space=vmem, size = 0x2d0000, scoped, tag = 'input window, operand 6, single buffered']
    #allocation14 [shape = 'u8[7680]{0}', space=vmem, size = 0x2000, scoped, tag = 'input window, operand 7, single buffered']
    #allocation15 [shape = 's32[1]{0}', space=sflag, size = 0x4, scoped, tag = 'scoped memory for difnet_forward.1']
    #allocation16 [shape = 'u8[589824]{0}', space=vmem, size = 0x90000, scoped, tag = 'input window, operand 8, single buffered']
    #allocation17 [shape = 'u8[1536]{0}', space=vmem, size = 0x800, scoped, tag = 'input window, operand 9, single buffered']
    #allocation18 [shape = 's32[1]{0}', space=sflag, size = 0x4, scoped, tag = 'scoped memory for difnet_forward.1']
    #allocation19 [shape = 'u8[4096]{0}', space=vmem, size = 0x1000, scoped, tag = 'output window, operand 0, single buffered']
    %15 = vsyncpa [#allocation3], 0
    %16 = vsyncpa [#allocation6], 0
    %17 = vsyncpa [#allocation9], 0
    %18 = vsyncpa [#allocation12], 0
    %19 = vsyncpa [#allocation15], 0
    %20 = vsyncpa [#allocation18], 0
    %21 = vsyncpa [#allocation4], 0
    // Predicated region
    $region2: #{difnet_forward.1} parent=1 // pred_check
      _
    $region3: #{difnet_forward.1} parent=1 // pred_check_branch
      %23 = sbr.rel (0) target = $region5
    $region4: #{difnet_forward.1} parent=1 // pred_region
      %s25 = ssub.s32 128, 128
      %26 = vsyncadd [#allocation3], %s25
      %s28 = sshll.u32 [#allocation2], 4
      %s29 = int_to_ptr.vmem [resolvable:$true] %s28
      %31 = dma.hbm_to_vmem [thread:$0]  %s0, 128, %s29, [#allocation3]
    $region5: #{difnet_forward.1} parent=1 // pred_fallthru
      _
    // Predicated region
    $region6: #{difnet_forward.1} parent=1 // pred_check
      _
    $region7: #{difnet_forward.1} parent=1 // pred_check_branch
      %33 = sbr.rel (0) target = $region9
    $region8: #{difnet_forward.1} parent=1 // pred_region
      %s35 = ssub.s32 128, 128
      %36 = vsyncadd [#allocation6], %s35
      %s38 = sshll.u32 [#allocation5], 4
      %s39 = int_to_ptr.vmem [resolvable:$true] %s38
      %41 = dma.hbm_to_vmem [thread:$0]  %s1, 128, %s39, [#allocation6]
    $region9: #{difnet_forward.1} parent=1 // pred_fallthru
      _
    // Predicated region
    $region10: #{difnet_forward.1} parent=1 // pred_check
      _
    $region11: #{difnet_forward.1} parent=1 // pred_check_branch
      %43 = sbr.rel (0) target = $region13
    $region12: #{difnet_forward.1} parent=1 // pred_region
      %s45 = ssub.s32 2048, 2048
      %46 = vsyncadd [#allocation6], %s45
      %s47 = sshll.u32 [#allocation7], 4
      %s48 = int_to_ptr.vmem [resolvable:$true] %s47
      %53 = dma.hbm_to_vmem [thread:$0]  %s2, 2048, %s48, [#allocation6], 128, 128, 8
    $region13: #{difnet_forward.1} parent=1 // pred_fallthru
      _
    // Predicated region
    $region14: #{difnet_forward.1} parent=1 // pred_check
      _
    $region15: #{difnet_forward.1} parent=1 // pred_check_branch
      %55 = sbr.rel (0) target = $region17
    $region16: #{difnet_forward.1} parent=1 // pred_region
      %s57 = ssub.s32 16, 16
      %58 = vsyncadd [#allocation9], %s57
      %s60 = sshll.u32 [#allocation8], 4
      %s61 = int_to_ptr.vmem [resolvable:$true] %s60
      %63 = dma.hbm_to_vmem [thread:$0]  %s3, 16, %s61, [#allocation9]
    $region17: #{difnet_forward.1} parent=1 // pred_fallthru
      _
    // Predicated region
    $region18: #{difnet_forward.1} parent=1 // pred_check
      _
    $region19: #{difnet_forward.1} parent=1 // pred_check_branch
      %65 = sbr.rel (0) target = $region21
    $region20: #{difnet_forward.1} parent=1 // pred_region
      %s67 = ssub.s32 2048, 2048
      %68 = vsyncadd [#allocation9], %s67
      %s69 = sshll.u32 [#allocation10], 4
      %s70 = int_to_ptr.vmem [resolvable:$true] %s69
      %75 = dma.hbm_to_vmem [thread:$0]  %s4, 2048, %s70, [#allocation9], 128, 128, 8
    $region21: #{difnet_forward.1} parent=1 // pred_fallthru
      _
    // Predicated region
    $region22: #{difnet_forward.1} parent=1 // pred_check
      _
    $region23: #{difnet_forward.1} parent=1 // pred_check_branch
      %77 = sbr.rel (0) target = $region25
    $region24: #{difnet_forward.1} parent=1 // pred_region
      %s79 = ssub.s32 16, 16
      %80 = vsyncadd [#allocation12], %s79
      %s82 = sshll.u32 [#allocation11], 4
      %s83 = int_to_ptr.vmem [resolvable:$true] %s82
      %85 = dma.hbm_to_vmem [thread:$0]  %s5, 16, %s83, [#allocation12]
    $region25: #{difnet_forward.1} parent=1 // pred_fallthru
      _
    // Predicated region
    $region26: #{difnet_forward.1} parent=1 // pred_check
      _
    $region27: #{difnet_forward.1} parent=1 // pred_check_branch
      %87 = sbr.rel (0) target = $region29
    $region28: #{difnet_forward.1} parent=1 // pred_region
      %s89 = ssub.s32 92160, 92160
      %90 = vsyncadd [#allocation12], %s89
      %s91 = sshll.u32 [#allocation13], 4
      %s92 = int_to_ptr.vmem [resolvable:$true] %s91
      %97 = dma.hbm_to_vmem [thread:$0]  %s6, 92160, %s92, [#allocation12], 640, 640, 40
    $region29: #{difnet_forward.1} parent=1 // pred_fallthru
      _
    // Predicated region
    $region30: #{difnet_forward.1} parent=1 // pred_check
      _
    $region31: #{difnet_forward.1} parent=1 // pred_check_branch
      %99 = sbr.rel (0) target = $region33
    $region32: #{difnet_forward.1} parent=1 // pred_region
      %s101 = ssub.s32 240, 240
      %102 = vsyncadd [#allocation15], %s101
      %s103 = sshll.u32 [#allocation14], 4
      %s104 = int_to_ptr.vmem [resolvable:$true] %s103
      %109 = dma.hbm_to_vmem [thread:$0]  %s7, 240, %s104, [#allocation15], 80, 80, 5
    $region33: #{difnet_forward.1} parent=1 // pred_fallthru
      _
    // Predicated region
    $region34: #{difnet_forward.1} parent=1 // pred_check
      _
    $region35: #{difnet_forward.1} parent=1 // pred_check_branch
      %111 = sbr.rel (0) target = $region37
    $region36: #{difnet_forward.1} parent=1 // pred_region
      %s113 = ssub.s32 18432, 18432
      %114 = vsyncadd [#allocation15], %s113
      %s115 = sshll.u32 [#allocation16], 4
      %s116 = int_to_ptr.vmem [resolvable:$true] %s115
      %121 = dma.hbm_to_vmem [thread:$0]  %s8, 18432, %s116, [#allocation15], 128, 128, 8
    $region37: #{difnet_forward.1} parent=1 // pred_fallthru
      _
    // Predicated region
    $region38: #{difnet_forward.1} parent=1 // pred_check
      _
    $region39: #{difnet_forward.1} parent=1 // pred_check_branch
      %123 = sbr.rel (0) target = $region41
    $region40: #{difnet_forward.1} parent=1 // pred_region
      %s125 = ssub.s32 48, 48
      %126 = vsyncadd [#allocation18], %s125
      %s127 = sshll.u32 [#allocation17], 4
      %s128 = int_to_ptr.vmem [resolvable:$true] %s127
      %133 = dma.hbm_to_vmem [thread:$0]  %s9, 48, %s128, [#allocation18], 16, 16, 1
    $region41: #{difnet_forward.1} parent=1 // pred_fallthru
      _
    // Predicated region
    $region42: #{difnet_forward.1} parent=1 // pred_check
      _
    $region43: #{difnet_forward.1} parent=1 // pred_check_branch
      %135 = sbr.rel (0) target = $region45
    $region44: #{difnet_forward.1} parent=1 // pred_region
      %136 = dma.done [#allocation3], 128
    $region45: #{difnet_forward.1} parent=1 // pred_fallthru
      _
    // Predicated region
    $region46: #{difnet_forward.1} parent=1 // pred_check
      _
    $region47: #{difnet_forward.1} parent=1 // pred_check_branch
      %138 = sbr.rel (0) target = $region49
    $region48: #{difnet_forward.1} parent=1 // pred_region
      %139 = dma.done [#allocation6], 128
    $region49: #{difnet_forward.1} parent=1 // pred_fallthru
      _
    // Predicated region
    $region50: #{difnet_forward.1} parent=1 // pred_check
      _
    $region51: #{difnet_forward.1} parent=1 // pred_check_branch
      %141 = sbr.rel (0) target = $region53
    $region52: #{difnet_forward.1} parent=1 // pred_region
      %142 = dma.done [#allocation6], 2048
    $region53: #{difnet_forward.1} parent=1 // pred_fallthru
      _
    // Predicated region
    $region54: #{difnet_forward.1} parent=1 // pred_check
      _
    $region55: #{difnet_forward.1} parent=1 // pred_check_branch
      %144 = sbr.rel (0) target = $region57
    $region56: #{difnet_forward.1} parent=1 // pred_region
      %145 = dma.done [#allocation9], 16
    $region57: #{difnet_forward.1} parent=1 // pred_fallthru
      _
    // Predicated region
    $region58: #{difnet_forward.1} parent=1 // pred_check
      _
    $region59: #{difnet_forward.1} parent=1 // pred_check_branch
      %147 = sbr.rel (0) target = $region61
    $region60: #{difnet_forward.1} parent=1 // pred_region
      %148 = dma.done [#allocation9], 2048
    $region61: #{difnet_forward.1} parent=1 // pred_fallthru
      _
    // Predicated region
    $region62: #{difnet_forward.1} parent=1 // pred_check
      _
    $region63: #{difnet_forward.1} parent=1 // pred_check_branch
      %150 = sbr.rel (0) target = $region65
    $region64: #{difnet_forward.1} parent=1 // pred_region
      %151 = dma.done [#allocation12], 16
    $region65: #{difnet_forward.1} parent=1 // pred_fallthru
      _
    // Predicated region
    $region66: #{difnet_forward.1} parent=1 // pred_check
      _
    $region67: #{difnet_forward.1} parent=1 // pred_check_branch
      %153 = sbr.rel (0) target = $region69
    $region68: #{difnet_forward.1} parent=1 // pred_region
      %154 = dma.done [#allocation12], 92160
    $region69: #{difnet_forward.1} parent=1 // pred_fallthru
      _
    // Predicated region
    $region70: #{difnet_forward.1} parent=1 // pred_check
      _
    $region71: #{difnet_forward.1} parent=1 // pred_check_branch
      %156 = sbr.rel (0) target = $region73
    $region72: #{difnet_forward.1} parent=1 // pred_region
      %157 = dma.done [#allocation15], 240
    $region73: #{difnet_forward.1} parent=1 // pred_fallthru
      _
    // Predicated region
    $region74: #{difnet_forward.1} parent=1 // pred_check
      _
    $region75: #{difnet_forward.1} parent=1 // pred_check_branch
      %159 = sbr.rel (0) target = $region77
    $region76: #{difnet_forward.1} parent=1 // pred_region
      %160 = dma.done [#allocation15], 18432
    $region77: #{difnet_forward.1} parent=1 // pred_fallthru
      _
    // Predicated region
    $region78: #{difnet_forward.1} parent=1 // pred_check
      _
    $region79: #{difnet_forward.1} parent=1 // pred_check_branch
      %162 = sbr.rel (0) target = $region81
    $region80: #{difnet_forward.1} parent=1 // pred_region
      %163 = dma.done [#allocation18], 48
    $region81: #{difnet_forward.1} parent=1 // pred_fallthru
      _
    %v164 = vld [vmem:[#allocation2] sm:$0xff]
    %v165 = vld [vmem:[#allocation5] sm:$0xff]
    %v166 = vld [vmem:[#allocation7] sm:$0xff]
    %v167 = vld [vmem:[#allocation7 + $0x8] sm:$0xff]
    %v168 = vld [vmem:[#allocation7 + $0x10] sm:$0xff]
    %v169 = vld [vmem:[#allocation7 + $0x18] sm:$0xff]
    %v170 = vld [vmem:[#allocation7 + $0x20] sm:$0xff]
    %v171 = vld [vmem:[#allocation7 + $0x28] sm:$0xff]
    %v172 = vld [vmem:[#allocation7 + $0x30] sm:$0xff]
    %v173 = vld [vmem:[#allocation7 + $0x38] sm:$0xff]
    %v174 = vld [vmem:[#allocation7 + $0x40] sm:$0xff]
    %v175 = vld [vmem:[#allocation7 + $0x48] sm:$0xff]
    %v176 = vld [vmem:[#allocation7 + $0x50] sm:$0xff]
    %v177 = vld [vmem:[#allocation7 + $0x58] sm:$0xff]
    %v178 = vld [vmem:[#allocation7 + $0x60] sm:$0xff]
    %v179 = vld [vmem:[#allocation7 + $0x68] sm:$0xff]
    %v180 = vld [vmem:[#allocation7 + $0x70] sm:$0xff]
    %v181 = vld [vmem:[#allocation7 + $0x78] sm:$0xff]
    %v182 = vld [vmem:[#allocation8] sm:$0x1]
    %v184 = vlaneseq
    %v185 = vshrl.u32 %v184, 7
    %v186 = vsub.s32 0, %v185
    %v187 = vrot.slane %v182, %v186
    %189 = vmatprep.subr.mxu0 0.0
    %190 = vmatpush1.msra.mxu0 %v166
    %191 = vmatprep.subr.mxu0 0.0
    %192 = vmatpush1.msra.mxu0 %v167
    %193 = vmatprep.subr.mxu0 0.0
    %194 = vmatpush1.msra.mxu0 %v168
    %195 = vmatprep.subr.mxu0 0.0
    %196 = vmatpush1.msra.mxu0 %v169
    %197 = vmatprep.subr.mxu0 0.0
    %198 = vmatpush1.msra.mxu0 %v170
    %199 = vmatprep.subr.mxu0 0.0
    %200 = vmatpush1.msra.mxu0 %v171
    %201 = vmatprep.subr.mxu0 0.0
    %202 = vmatpush1.msra.mxu0 %v172
    %203 = vmatprep.subr.mxu0 0.0
    %204 = vmatpush1.msra.mxu0 %v173
    %205 = vmatprep.subr.mxu0 0.0
    %206 = vmatpush1.msra.mxu0 %v174
    %207 = vmatprep.subr.mxu0 0.0
    %208 = vmatpush1.msra.mxu0 %v175
    %209 = vmatprep.subr.mxu0 0.0
    %210 = vmatpush1.msra.mxu0 %v176
    %211 = vmatprep.subr.mxu0 0.0
    %212 = vmatpush1.msra.mxu0 %v177
    %213 = vmatprep.subr.mxu0 0.0
    %214 = vmatpush1.msra.mxu0 %v178
    %215 = vmatprep.subr.mxu0 0.0
    %216 = vmatpush1.msra.mxu0 %v179
    %217 = vmatprep.subr.mxu0 0.0
    %218 = vmatpush1.msra.mxu0 %v180
    %219 = vmatprep.subr.mxu0 0.0
    %220 = vmatpush1.msra.mxu0 %v181
    %221 = vmatprep.subr.mxu0 0.0
    %222 = vmatpush1.msra.mxu0 0.0
    %223 = vmatprep.subr.mxu0 0.0
    %224 = vmatpush1.msra.mxu0 0.0
    %225 = vmatprep.subr.mxu0 0.0
    %226 = vmatpush1.msra.mxu0 0.0
    %227 = vmatprep.subr.mxu0 0.0
    %228 = vmatpush1.msra.mxu0 0.0
    %229 = vmatprep.subr.mxu0 0.0
    %230 = vmatpush1.msra.mxu0 0.0
    %231 = vmatprep.subr.mxu0 0.0
    %232 = vmatpush1.msra.mxu0 0.0
    %233 = vmatprep.subr.mxu0 0.0
    %234 = vmatpush1.msra.mxu0 0.0
    %235 = vmatprep.subr.mxu0 0.0
    %236 = vmatpush1.msra.mxu0 0.0
    %237 = vmatprep.subr.mxu0 0.0
    %238 = vmatpush1.msra.mxu0 0.0
    %239 = vmatprep.subr.mxu0 0.0
    %240 = vmatpush1.msra.mxu0 0.0
    %241 = vmatprep.subr.mxu0 0.0
    %242 = vmatpush1.msra.mxu0 0.0
    %243 = vmatprep.subr.mxu0 0.0
    %244 = vmatpush1.msra.mxu0 0.0
    %245 = vmatprep.subr.mxu0 0.0
    %246 = vmatpush1.msra.mxu0 0.0
    %247 = vmatprep.subr.mxu0 0.0
    %248 = vmatpush1.msra.mxu0 0.0
    %249 = vmatprep.subr.mxu0 0.0
    %250 = vmatpush1.msra.mxu0 0.0
    %251 = vmatprep.subr.mxu0 0.0
    %252 = vmatpush1.msra.mxu0 0.0
    %253 = vmatprep.mubr.f32.mxu0 0.0
    %254 = vmatmul.mubr.f32.gmra.mrb[0].mxu0 %v165
    %v255 = vpop.f32.mrb[0].mxu0
    %v256 = vadd.f32 %v187, %v255
    %v257 = vpop.f32.mrb[0].mxu0
    %258 = vdwg.mxu0
    %v259 = vxor.u32 %v256, 2147483648
    %v260 = vmul.f32 %v259, 1.442695
    %v261 = vpow.pop %v260
    %v262 = vadd.f32 %v261, 1.0
    %v263 = vrcp.pop %v262
    %v264 = vmul.f32 1.0, %v263
    %v265 = vld [vmem:[#allocation10] sm:$0xff]
    %v266 = vld [vmem:[#allocation10 + $0x8] sm:$0xff]
    %v267 = vld [vmem:[#allocation10 + $0x10] sm:$0xff]
    %v268 = vld [vmem:[#allocation10 + $0x18] sm:$0xff]
    %v269 = vld [vmem:[#allocation10 + $0x20] sm:$0xff]
    %v270 = vld [vmem:[#allocation10 + $0x28] sm:$0xff]
    %v271 = vld [vmem:[#allocation10 + $0x30] sm:$0xff]
    %v272 = vld [vmem:[#allocation10 + $0x38] sm:$0xff]
    %v273 = vld [vmem:[#allocation10 + $0x40] sm:$0xff]
    %v274 = vld [vmem:[#allocation10 + $0x48] sm:$0xff]
    %v275 = vld [vmem:[#allocation10 + $0x50] sm:$0xff]
    %v276 = vld [vmem:[#allocation10 + $0x58] sm:$0xff]
    %v277 = vld [vmem:[#allocation10 + $0x60] sm:$0xff]
    %v278 = vld [vmem:[#allocation10 + $0x68] sm:$0xff]
    %v279 = vld [vmem:[#allocation10 + $0x70] sm:$0xff]
    %v280 = vld [vmem:[#allocation10 + $0x78] sm:$0xff]
    %v281 = vld [vmem:[#allocation11] sm:$0x1]
    %v283 = vlaneseq
    %v284 = vshrl.u32 %v283, 7
    %v285 = vsub.s32 0, %v284
    %v286 = vrot.slane %v281, %v285
    %288 = vmatprep.subr.mxu0 0.0
    %289 = vmatpush1.msra.mxu0 %v265
    %290 = vmatprep.subr.mxu0 0.0
    %291 = vmatpush1.msra.mxu0 %v266
    %292 = vmatprep.subr.mxu0 0.0
    %293 = vmatpush1.msra.mxu0 %v267
    %294 = vmatprep.subr.mxu0 0.0
    %295 = vmatpush1.msra.mxu0 %v268
    %296 = vmatprep.subr.mxu0 0.0
    %297 = vmatpush1.msra.mxu0 %v269
    %298 = vmatprep.subr.mxu0 0.0
    %299 = vmatpush1.msra.mxu0 %v270
    %300 = vmatprep.subr.mxu0 0.0
    %301 = vmatpush1.msra.mxu0 %v271
    %302 = vmatprep.subr.mxu0 0.0
    %303 = vmatpush1.msra.mxu0 %v272
    %304 = vmatprep.subr.mxu0 0.0
    %305 = vmatpush1.msra.mxu0 %v273
    %306 = vmatprep.subr.mxu0 0.0
    %307 = vmatpush1.msra.mxu0 %v274
    %308 = vmatprep.subr.mxu0 0.0
    %309 = vmatpush1.msra.mxu0 %v275
    %310 = vmatprep.subr.mxu0 0.0
    %311 = vmatpush1.msra.mxu0 %v276
    %312 = vmatprep.subr.mxu0 0.0
    %313 = vmatpush1.msra.mxu0 %v277
    %314 = vmatprep.subr.mxu0 0.0
    %315 = vmatpush1.msra.mxu0 %v278
    %316 = vmatprep.subr.mxu0 0.0
    %317 = vmatpush1.msra.mxu0 %v279
    %318 = vmatprep.subr.mxu0 0.0
    %319 = vmatpush1.msra.mxu0 %v280
    %320 = vmatprep.subr.mxu0 0.0
    %321 = vmatpush1.msra.mxu0 0.0
    %322 = vmatprep.subr.mxu0 0.0
    %323 = vmatpush1.msra.mxu0 0.0
    %324 = vmatprep.subr.mxu0 0.0
    %325 = vmatpush1.msra.mxu0 0.0
    %326 = vmatprep.subr.mxu0 0.0
    %327 = vmatpush1.msra.mxu0 0.0
    %328 = vmatprep.subr.mxu0 0.0
    %329 = vmatpush1.msra.mxu0 0.0
    %330 = vmatprep.subr.mxu0 0.0
    %331 = vmatpush1.msra.mxu0 0.0
    %332 = vmatprep.subr.mxu0 0.0
    %333 = vmatpush1.msra.mxu0 0.0
    %334 = vmatprep.subr.mxu0 0.0
    %335 = vmatpush1.msra.mxu0 0.0
    %336 = vmatprep.subr.mxu0 0.0
    %337 = vmatpush1.msra.mxu0 0.0
    %338 = vmatprep.subr.mxu0 0.0
    %339 = vmatpush1.msra.mxu0 0.0
    %340 = vmatprep.subr.mxu0 0.0
    %341 = vmatpush1.msra.mxu0 0.0
    %342 = vmatprep.subr.mxu0 0.0
    %343 = vmatpush1.msra.mxu0 0.0
    %344 = vmatprep.subr.mxu0 0.0
    %345 = vmatpush1.msra.mxu0 0.0
    %346 = vmatprep.subr.mxu0 0.0
    %347 = vmatpush1.msra.mxu0 0.0
    %348 = vmatprep.subr.mxu0 0.0
    %349 = vmatpush1.msra.mxu0 0.0
    %350 = vmatprep.subr.mxu0 0.0
    %351 = vmatpush1.msra.mxu0 0.0
    %352 = vmatprep.mubr.f32.mxu0 0.0
    %353 = vmatmul.mubr.f32.gmra.mrb[0].mxu0 %v264
    %v354 = vpop.f32.mrb[0].mxu0
    %v355 = vadd.f32 %v286, %v354
    %v356 = vpop.f32.mrb[0].mxu0
    %357 = vdwg.mxu0
    %vm358 = vcmask 64512
    %v360 = vsel %vm358, %v164, 0
    %362 = vmatprep.subr.mxu0 0.0
    %363 = vmatpush1.msra.mxu0 %v355
    %364 = vmatprep.subr.mxu0 0.0
    %365 = vmatpush1.msra.mxu0 0.0
    %366 = vmatprep.subr.mxu0 0.0
    %367 = vmatpush1.msra.mxu0 0.0
    %368 = vmatprep.subr.mxu0 0.0
    %369 = vmatpush1.msra.mxu0 0.0
    %370 = vmatprep.subr.mxu0 0.0
    %371 = vmatpush1.msra.mxu0 0.0
    %372 = vmatprep.subr.mxu0 0.0
    %373 = vmatpush1.msra.mxu0 0.0
    %374 = vmatprep.subr.mxu0 0.0
    %375 = vmatpush1.msra.mxu0 0.0
    %376 = vmatprep.subr.mxu0 0.0
    %377 = vmatpush1.msra.mxu0 0.0
    %378 = vmatprep.subr.mxu0 0.0
    %379 = vmatpush1.msra.mxu0 0.0
    %380 = vmatprep.subr.mxu0 0.0
    %381 = vmatpush1.msra.mxu0 0.0
    %382 = vmatprep.subr.mxu0 0.0
    %383 = vmatpush1.msra.mxu0 0.0
    %384 = vmatprep.subr.mxu0 0.0
    %385 = vmatpush1.msra.mxu0 0.0
    %386 = vmatprep.subr.mxu0 0.0
    %387 = vmatpush1.msra.mxu0 0.0
    %388 = vmatprep.subr.mxu0 0.0
    %389 = vmatpush1.msra.mxu0 0.0
    %390 = vmatprep.subr.mxu0 0.0
    %391 = vmatpush1.msra.mxu0 0.0
    %392 = vmatprep.subr.mxu0 0.0
    %393 = vmatpush1.msra.mxu0 0.0
    %394 = vmatprep.subr.mxu0 0.0
    %395 = vmatpush1.msra.mxu0 0.0
    %396 = vmatprep.subr.mxu0 0.0
    %397 = vmatpush1.msra.mxu0 0.0
    %398 = vmatprep.subr.mxu0 0.0
    %399 = vmatpush1.msra.mxu0 0.0
    %400 = vmatprep.subr.mxu0 0.0
    %401 = vmatpush1.msra.mxu0 0.0
    %402 = vmatprep.subr.mxu0 0.0
    %403 = vmatpush1.msra.mxu0 0.0
    %404 = vmatprep.subr.mxu0 0.0
    %405 = vmatpush1.msra.mxu0 0.0
    %406 = vmatprep.subr.mxu0 0.0
    %407 = vmatpush1.msra.mxu0 0.0
    %408 = vmatprep.subr.mxu0 0.0
    %409 = vmatpush1.msra.mxu0 0.0
    %410 = vmatprep.subr.mxu0 0.0
    %411 = vmatpush1.msra.mxu0 0.0
    %412 = vmatprep.subr.mxu0 0.0
    %413 = vmatpush1.msra.mxu0 0.0
    %414 = vmatprep.subr.mxu0 0.0
    %415 = vmatpush1.msra.mxu0 0.0
    %416 = vmatprep.subr.mxu0 0.0
    %417 = vmatpush1.msra.mxu0 0.0
    %418 = vmatprep.subr.mxu0 0.0
    %419 = vmatpush1.msra.mxu0 0.0
    %420 = vmatprep.subr.mxu0 0.0
    %421 = vmatpush1.msra.mxu0 0.0
    %422 = vmatprep.subr.mxu0 0.0
    %423 = vmatpush1.msra.mxu0 0.0
    %424 = vmatprep.subr.mxu0 0.0
    %425 = vmatpush1.msra.mxu0 0.0
    %426 = vmatprep.mubr.f32.mxu0 0.0
    %427 = vmatmul.mubr.f32.gmra.mrb[0].mxu0 %v360
    %v428 = vpop.f32.mrb[0].mxu0
    %v429 = vadd.f32 0.0, %v428
    %v430 = vpop.f32.mrb[0].mxu0
    %431 = vdwg.mxu0
    %v432 = vld [vmem:[#allocation13] sm:$0xff]
    %v433 = vld [vmem:[#allocation13 + $0x8] sm:$0xff]
    %v434 = vld [vmem:[#allocation13 + $0x10] sm:$0xff]
    %v435 = vld [vmem:[#allocation13 + $0x18] sm:$0xff]
    %v436 = vld [vmem:[#allocation13 + $0x20] sm:$0xff]
    %v437 = vld [vmem:[#allocation13 + $0x28] sm:$0xff]
    %v438 = vld [vmem:[#allocation13 + $0x30] sm:$0xff]
    %v439 = vld [vmem:[#allocation13 + $0x38] sm:$0xff]
    %v440 = vld [vmem:[#allocation13 + $0x40] sm:$0xff]
    %v441 = vld [vmem:[#allocation13 + $0x48] sm:$0xff]
    %v442 = vld [vmem:[#allocation13 + $0x50] sm:$0xff]
    %v443 = vld [vmem:[#allocation13 + $0x58] sm:$0xff]
    %v444 = vld [vmem:[#allocation13 + $0x60] sm:$0xff]
    %v445 = vld [vmem:[#allocation13 + $0x68] sm:$0xff]
    %v446 = vld [vmem:[#allocation13 + $0x70] sm:$0xff]
    %v447 = vld [vmem:[#allocation13 + $0x78] sm:$0xff]
    %v448 = vld [vmem:[#allocation13 + $0x80] sm:$0xff]
    %v449 = vld [vmem:[#allocation13 + $0x88] sm:$0xff]
    %v450 = vld [vmem:[#allocation13 + $0x90] sm:$0xff]
    %v451 = vld [vmem:[#allocation13 + $0x98] sm:$0xff]
    %v452 = vld [vmem:[#allocation13 + $0xa0] sm:$0xff]
    %v453 = vld [vmem:[#allocation13 + $0xa8] sm:$0xff]
    %v454 = vld [vmem:[#allocation13 + $0xb0] sm:$0xff]
    %v455 = vld [vmem:[#allocation13 + $0xb8] sm:$0xff]
    %v456 = vld [vmem:[#allocation13 + $0xc0] sm:$0xff]
    %v457 = vld [vmem:[#allocation13 + $0xc8] sm:$0xff]
    %v458 = vld [vmem:[#allocation13 + $0xd0] sm:$0xff]
    %v459 = vld [vmem:[#allocation13 + $0xd8] sm:$0xff]
    %v460 = vld [vmem:[#allocation13 + $0xe0] sm:$0xff]
    %v461 = vld [vmem:[#allocation13 + $0xe8] sm:$0xff]
    %v462 = vld [vmem:[#allocation13 + $0xf0] sm:$0xff]
    %v463 = vld [vmem:[#allocation13 + $0xf8] sm:$0xff]
    %v464 = vld [vmem:[#allocation13 + $0x100] sm:$0xff]
    %v465 = vld [vmem:[#allocation13 + $0x108] sm:$0xff]
    %v466 = vld [vmem:[#allocation13 + $0x110] sm:$0xff]
    %v467 = vld [vmem:[#allocation13 + $0x118] sm:$0xff]
    %v468 = vld [vmem:[#allocation13 + $0x120] sm:$0xff]
    %v469 = vld [vmem:[#allocation13 + $0x128] sm:$0xff]
    %v470 = vld [vmem:[#allocation13 + $0x130] sm:$0xff]
    %v471 = vld [vmem:[#allocation13 + $0x138] sm:$0xff]
    %v472 = vld [vmem:[#allocation13 + $0x140] sm:$0xff]
    %v473 = vld [vmem:[#allocation13 + $0x148] sm:$0xff]
    %v474 = vld [vmem:[#allocation13 + $0x150] sm:$0xff]
    %v475 = vld [vmem:[#allocation13 + $0x158] sm:$0xff]
    %v476 = vld [vmem:[#allocation13 + $0x160] sm:$0xff]
    %v477 = vld [vmem:[#allocation13 + $0x168] sm:$0xff]
    %v478 = vld [vmem:[#allocation13 + $0x170] sm:$0xff]
    %v479 = vld [vmem:[#allocation13 + $0x178] sm:$0xff]
    %v480 = vld [vmem:[#allocation13 + $0x180] sm:$0xff]
    %v481 = vld [vmem:[#allocation13 + $0x188] sm:$0xff]
    %v482 = vld [vmem:[#allocation13 + $0x190] sm:$0xff]
    %v483 = vld [vmem:[#allocation13 + $0x198] sm:$0xff]
    %v484 = vld [vmem:[#allocation13 + $0x1a0] sm:$0xff]
    %v485 = vld [vmem:[#allocation13 + $0x1a8] sm:$0xff]
    %v486 = vld [vmem:[#allocation13 + $0x1b0] sm:$0xff]
    %v487 = vld [vmem:[#allocation13 + $0x1b8] sm:$0xff]
    %v488 = vld [vmem:[#allocation13 + $0x1c0] sm:$0xff]
    %v489 = vld [vmem:[#allocation13 + $0x1c8] sm:$0xff]
    %v490 = vld [vmem:[#allocation13 + $0x1d0] sm:$0xff]
    %v491 = vld [vmem:[#allocation13 + $0x1d8] sm:$0xff]
    %v492 = vld [vmem:[#allocation13 + $0x1e0] sm:$0xff]
    %v493 = vld [vmem:[#allocation13 + $0x1e8] sm:$0xff]
    %v494 = vld [vmem:[#allocation13 + $0x1f0] sm:$0xff]
    %v495 = vld [vmem:[#allocation13 + $0x1f8] sm:$0xff]
    %v496 = vld [vmem:[#allocation13 + $0x200] sm:$0xff]
    %v497 = vld [vmem:[#allocation13 + $0x208] sm:$0xff]
    %v498 = vld [vmem:[#allocation13 + $0x210] sm:$0xff]
    %v499 = vld [vmem:[#allocation13 + $0x218] sm:$0xff]
    %v500 = vld [vmem:[#allocation13 + $0x220] sm:$0xff]
    %v501 = vld [vmem:[#allocation13 + $0x228] sm:$0xff]
    %v502 = vld [vmem:[#allocation13 + $0x230] sm:$0xff]
    %v503 = vld [vmem:[#allocation13 + $0x238] sm:$0xff]
    %v504 = vld [vmem:[#allocation13 + $0x240] sm:$0xff]
    %v505 = vld [vmem:[#allocation13 + $0x248] sm:$0xff]
    %v506 = vld [vmem:[#allocation13 + $0x250] sm:$0xff]
    %v507 = vld [vmem:[#allocation13 + $0x258] sm:$0xff]
    %v508 = vld [vmem:[#allocation13 + $0x260] sm:$0xff]
    %v509 = vld [vmem:[#allocation13 + $0x268] sm:$0xff]
    %v510 = vld [vmem:[#allocation13 + $0x270] sm:$0xff]
    %v511 = vld [vmem:[#allocation13 + $0x278] sm:$0xff]
    %s512 = scalar_lea.vmem [#allocation13], 640
    %v513 = vld [vmem:[%s512] sm:$0xff]
    %v514 = vld [vmem:[%s512 + $0x8] sm:$0xff]
    %v515 = vld [vmem:[%s512 + $0x10] sm:$0xff]
    %v516 = vld [vmem:[%s512 + $0x18] sm:$0xff]
    %v517 = vld [vmem:[%s512 + $0x20] sm:$0xff]
    %v518 = vld [vmem:[%s512 + $0x28] sm:$0xff]
    %v519 = vld [vmem:[%s512 + $0x30] sm:$0xff]
    %v520 = vld [vmem:[%s512 + $0x38] sm:$0xff]
    %v521 = vld [vmem:[%s512 + $0x40] sm:$0xff]
    %v522 = vld [vmem:[%s512 + $0x48] sm:$0xff]
    %v523 = vld [vmem:[%s512 + $0x50] sm:$0xff]
    %v524 = vld [vmem:[%s512 + $0x58] sm:$0xff]
    %v525 = vld [vmem:[%s512 + $0x60] sm:$0xff]
    %v526 = vld [vmem:[%s512 + $0x68] sm:$0xff]
    %v527 = vld [vmem:[%s512 + $0x70] sm:$0xff]
    %v528 = vld [vmem:[%s512 + $0x78] sm:$0xff]
    %v529 = vld [vmem:[%s512 + $0x80] sm:$0xff]
    %v530 = vld [vmem:[%s512 + $0x88] sm:$0xff]
    %v531 = vld [vmem:[%s512 + $0x90] sm:$0xff]
    %v532 = vld [vmem:[%s512 + $0x98] sm:$0xff]
    %v533 = vld [vmem:[%s512 + $0xa0] sm:$0xff]
    %v534 = vld [vmem:[%s512 + $0xa8] sm:$0xff]
    %v535 = vld [vmem:[%s512 + $0xb0] sm:$0xff]
    %v536 = vld [vmem:[%s512 + $0xb8] sm:$0xff]
    %v537 = vld [vmem:[%s512 + $0xc0] sm:$0xff]
    %v538 = vld [vmem:[%s512 + $0xc8] sm:$0xff]
    %v539 = vld [vmem:[%s512 + $0xd0] sm:$0xff]
    %v540 = vld [vmem:[%s512 + $0xd8] sm:$0xff]
    %v541 = vld [vmem:[%s512 + $0xe0] sm:$0xff]
    %v542 = vld [vmem:[%s512 + $0xe8] sm:$0xff]
    %v543 = vld [vmem:[%s512 + $0xf0] sm:$0xff]
    %v544 = vld [vmem:[%s512 + $0xf8] sm:$0xff]
    %v545 = vld [vmem:[%s512 + $0x100] sm:$0xff]
    %v546 = vld [vmem:[%s512 + $0x108] sm:$0xff]
    %v547 = vld [vmem:[%s512 + $0x110] sm:$0xff]
    %v548 = vld [vmem:[%s512 + $0x118] sm:$0xff]
    %v549 = vld [vmem:[%s512 + $0x120] sm:$0xff]
    %v550 = vld [vmem:[%s512 + $0x128] sm:$0xff]
    %v551 = vld [vmem:[%s512 + $0x130] sm:$0xff]
    %v552 = vld [vmem:[%s512 + $0x138] sm:$0xff]
    %v553 = vld [vmem:[%s512 + $0x140] sm:$0xff]
    %v554 = vld [vmem:[%s512 + $0x148] sm:$0xff]
    %v555 = vld [vmem:[%s512 + $0x150] sm:$0xff]
    %v556 = vld [vmem:[%s512 + $0x158] sm:$0xff]
    %v557 = vld [vmem:[%s512 + $0x160] sm:$0xff]
    %v558 = vld [vmem:[%s512 + $0x168] sm:$0xff]
    %v559 = vld [vmem:[%s512 + $0x170] sm:$0xff]
    %v560 = vld [vmem:[%s512 + $0x178] sm:$0xff]
    %v561 = vld [vmem:[%s512 + $0x180] sm:$0xff]
    %v562 = vld [vmem:[%s512 + $0x188] sm:$0xff]
    %v563 = vld [vmem:[%s512 + $0x190] sm:$0xff]
    %v564 = vld [vmem:[%s512 + $0x198] sm:$0xff]
    %v565 = vld [vmem:[%s512 + $0x1a0] sm:$0xff]
    %v566 = vld [vmem:[%s512 + $0x1a8] sm:$0xff]
    %v567 = vld [vmem:[%s512 + $0x1b0] sm:$0xff]
    %v568 = vld [vmem:[%s512 + $0x1b8] sm:$0xff]
    %v569 = vld [vmem:[%s512 + $0x1c0] sm:$0xff]
    %v570 = vld [vmem:[%s512 + $0x1c8] sm:$0xff]
    %v571 = vld [vmem:[%s512 + $0x1d0] sm:$0xff]
    %v572 = vld [vmem:[%s512 + $0x1d8] sm:$0xff]
    %v573 = vld [vmem:[%s512 + $0x1e0] sm:$0xff]
    %v574 = vld [vmem:[%s512 + $0x1e8] sm:$0xff]
    %v575 = vld [vmem:[%s512 + $0x1f0] sm:$0xff]
    %v576 = vld [vmem:[%s512 + $0x1f8] sm:$0xff]
    %v577 = vld [vmem:[%s512 + $0x200] sm:$0xff]
    %v578 = vld [vmem:[%s512 + $0x208] sm:$0xff]
    %v579 = vld [vmem:[%s512 + $0x210] sm:$0xff]
    %v580 = vld [vmem:[%s512 + $0x218] sm:$0xff]
    %v581 = vld [vmem:[%s512 + $0x220] sm:$0xff]
    %v582 = vld [vmem:[%s512 + $0x228] sm:$0xff]
    %v583 = vld [vmem:[%s512 + $0x230] sm:$0xff]
    %v584 = vld [vmem:[%s512 + $0x238] sm:$0xff]
    %v585 = vld [vmem:[%s512 + $0x240] sm:$0xff]
    %v586 = vld [vmem:[%s512 + $0x248] sm:$0xff]
    %v587 = vld [vmem:[%s512 + $0x250] sm:$0xff]
    %v588 = vld [vmem:[%s512 + $0x258] sm:$0xff]
    %v589 = vld [vmem:[%s512 + $0x260] sm:$0xff]
    %v590 = vld [vmem:[%s512 + $0x268] sm:$0xff]
    %v591 = vld [vmem:[%s512 + $0x270] sm:$0xff]
    %v592 = vld [vmem:[%s512 + $0x278] sm:$0xff]
    %593 = vmatprep.subr.mxu0 %v514
    %594 = vmatpush1.msra.mxu0 %v513
    %595 = vmatprep.subr.mxu0 %v519
    %596 = vmatpush1.msra.mxu0 %v518
    %597 = vmatprep.subr.mxu0 %v524
    %598 = vmatpush1.msra.mxu0 %v523
    %599 = vmatprep.subr.mxu0 %v529
    %600 = vmatpush1.msra.mxu0 %v528
    %601 = vmatprep.subr.mxu0 %v534
    %602 = vmatpush1.msra.mxu0 %v533
    %603 = vmatprep.subr.mxu0 %v539
    %604 = vmatpush1.msra.mxu0 %v538
    %605 = vmatprep.subr.mxu0 %v544
    %606 = vmatpush1.msra.mxu0 %v543
    %607 = vmatprep.subr.mxu0 %v549
    %608 = vmatpush1.msra.mxu0 %v548
    %609 = vmatprep.subr.mxu0 %v554
    %610 = vmatpush1.msra.mxu0 %v553
    %611 = vmatprep.subr.mxu0 %v559
    %612 = vmatpush1.msra.mxu0 %v558
    %613 = vmatprep.subr.mxu0 %v564
    %614 = vmatpush1.msra.mxu0 %v563
    %615 = vmatprep.subr.mxu0 %v569
    %616 = vmatpush1.msra.mxu0 %v568
    %617 = vmatprep.subr.mxu0 %v574
    %618 = vmatpush1.msra.mxu0 %v573
    %619 = vmatprep.subr.mxu0 %v579
    %620 = vmatpush1.msra.mxu0 %v578
    %621 = vmatprep.subr.mxu0 %v584
    %622 = vmatpush1.msra.mxu0 %v583
    %623 = vmatprep.subr.mxu0 %v589
    %624 = vmatpush1.msra.mxu0 %v588
    %625 = vmatprep.subr.mxu0 0.0
    %626 = vmatpush1.msra.mxu0 0.0
    %627 = vmatprep.subr.mxu0 0.0
    %628 = vmatpush1.msra.mxu0 0.0
    %629 = vmatprep.subr.mxu0 0.0
    %630 = vmatpush1.msra.mxu0 0.0
    %631 = vmatprep.subr.mxu0 0.0
    %632 = vmatpush1.msra.mxu0 0.0
    %633 = vmatprep.subr.mxu0 0.0
    %634 = vmatpush1.msra.mxu0 0.0
    %635 = vmatprep.subr.mxu0 0.0
    %636 = vmatpush1.msra.mxu0 0.0
    %637 = vmatprep.subr.mxu0 0.0
    %638 = vmatpush1.msra.mxu0 0.0
    %639 = vmatprep.subr.mxu0 0.0
    %640 = vmatpush1.msra.mxu0 0.0
    %641 = vmatprep.subr.mxu0 0.0
    %642 = vmatpush1.msra.mxu0 0.0
    %643 = vmatprep.subr.mxu0 0.0
    %644 = vmatpush1.msra.mxu0 0.0
    %645 = vmatprep.subr.mxu0 0.0
    %646 = vmatpush1.msra.mxu0 0.0
    %647 = vmatprep.subr.mxu0 0.0
    %648 = vmatpush1.msra.mxu0 0.0
    %649 = vmatprep.subr.mxu0 0.0
    %650 = vmatpush1.msra.mxu0 0.0
    %651 = vmatprep.subr.mxu0 0.0
    %652 = vmatpush1.msra.mxu0 0.0
    %653 = vmatprep.subr.mxu0 0.0
    %654 = vmatpush1.msra.mxu0 0.0
    %655 = vmatprep.subr.mxu0 0.0
    %656 = vmatpush1.msra.mxu0 0.0
    %657 = vmatprep.mubr.f32.mxu0 0.0
    %658 = vmatmul.mubr.f32.gmra.mrb[0].mxu0 %v429
    %v659 = vpop.f32.mrb[0].mxu0
    %v660 = vadd.f32 0.0, %v659
    %v661 = vpop.f32.mrb[0].mxu0
    %v662 = vadd.f32 0.0, %v661
    %663 = vdwg.mxu0
    %664 = vmatprep.subr.mxu0 %v516
    %665 = vmatpush1.msra.mxu0 %v515
    %666 = vmatprep.subr.mxu0 %v521
    %667 = vmatpush1.msra.mxu0 %v520
    %668 = vmatprep.subr.mxu0 %v526
    %669 = vmatpush1.msra.mxu0 %v525
    %670 = vmatprep.subr.mxu0 %v531
    %671 = vmatpush1.msra.mxu0 %v530
    %672 = vmatprep.subr.mxu0 %v536
    %673 = vmatpush1.msra.mxu0 %v535
    %674 = vmatprep.subr.mxu0 %v541
    %675 = vmatpush1.msra.mxu0 %v540
    %676 = vmatprep.subr.mxu0 %v546
    %677 = vmatpush1.msra.mxu0 %v545
    %678 = vmatprep.subr.mxu0 %v551
    %679 = vmatpush1.msra.mxu0 %v550
    %680 = vmatprep.subr.mxu0 %v556
    %681 = vmatpush1.msra.mxu0 %v555
    %682 = vmatprep.subr.mxu0 %v561
    %683 = vmatpush1.msra.mxu0 %v560
    %684 = vmatprep.subr.mxu0 %v566
    %685 = vmatpush1.msra.mxu0 %v565
    %686 = vmatprep.subr.mxu0 %v571
    %687 = vmatpush1.msra.mxu0 %v570
    %688 = vmatprep.subr.mxu0 %v576
    %689 = vmatpush1.msra.mxu0 %v575
    %690 = vmatprep.subr.mxu0 %v581
    %691 = vmatpush1.msra.mxu0 %v580
    %692 = vmatprep.subr.mxu0 %v586
    %693 = vmatpush1.msra.mxu0 %v585
    %694 = vmatprep.subr.mxu0 %v591
    %695 = vmatpush1.msra.mxu0 %v590
    %696 = vmatprep.subr.mxu0 0.0
    %697 = vmatpush1.msra.mxu0 0.0
    %698 = vmatprep.subr.mxu0 0.0
    %699 = vmatpush1.msra.mxu0 0.0
    %700 = vmatprep.subr.mxu0 0.0
    %701 = vmatpush1.msra.mxu0 0.0
    %702 = vmatprep.subr.mxu0 0.0
    %703 = vmatpush1.msra.mxu0 0.0
    %704 = vmatprep.subr.mxu0 0.0
    %705 = vmatpush1.msra.mxu0 0.0
    %706 = vmatprep.subr.mxu0 0.0
    %707 = vmatpush1.msra.mxu0 0.0
    %708 = vmatprep.subr.mxu0 0.0
    %709 = vmatpush1.msra.mxu0 0.0
    %710 = vmatprep.subr.mxu0 0.0
    %711 = vmatpush1.msra.mxu0 0.0
    %712 = vmatprep.subr.mxu0 0.0
    %713 = vmatpush1.msra.mxu0 0.0
    %714 = vmatprep.subr.mxu0 0.0
    %715 = vmatpush1.msra.mxu0 0.0
    %716 = vmatprep.subr.mxu0 0.0
    %717 = vmatpush1.msra.mxu0 0.0
    %718 = vmatprep.subr.mxu0 0.0
    %719 = vmatpush1.msra.mxu0 0.0
    %720 = vmatprep.subr.mxu0 0.0
    %721 = vmatpush1.msra.mxu0 0.0
    %722 = vmatprep.subr.mxu0 0.0
    %723 = vmatpush1.msra.mxu0 0.0
    %724 = vmatprep.subr.mxu0 0.0
    %725 = vmatpush1.msra.mxu0 0.0
    %726 = vmatprep.subr.mxu0 0.0
    %727 = vmatpush1.msra.mxu0 0.0
    %728 = vmatprep.mubr.f32.mxu0 0.0
    %729 = vmatmul.mubr.f32.gmra.mrb[0].mxu0 %v429
    %v730 = vpop.f32.mrb[0].mxu0
    %v731 = vadd.f32 0.0, %v730
    %v732 = vpop.f32.mrb[0].mxu0
    %v733 = vadd.f32 0.0, %v732
    %734 = vdwg.mxu0
    %735 = vmatprep.subr.mxu0 0.0
    %736 = vmatpush1.msra.mxu0 %v517
    %737 = vmatprep.subr.mxu0 0.0
    %738 = vmatpush1.msra.mxu0 %v522
    %739 = vmatprep.subr.mxu0 0.0
    %740 = vmatpush1.msra.mxu0 %v527
    %741 = vmatprep.subr.mxu0 0.0
    %742 = vmatpush1.msra.mxu0 %v532
    %743 = vmatprep.subr.mxu0 0.0
    %744 = vmatpush1.msra.mxu0 %v537
    %745 = vmatprep.subr.mxu0 0.0
    %746 = vmatpush1.msra.mxu0 %v542
    %747 = vmatprep.subr.mxu0 0.0
    %748 = vmatpush1.msra.mxu0 %v547
    %749 = vmatprep.subr.mxu0 0.0
    %750 = vmatpush1.msra.mxu0 %v552
    %751 = vmatprep.subr.mxu0 0.0
    %752 = vmatpush1.msra.mxu0 %v557
    %753 = vmatprep.subr.mxu0 0.0
    %754 = vmatpush1.msra.mxu0 %v562
    %755 = vmatprep.subr.mxu0 0.0
    %756 = vmatpush1.msra.mxu0 %v567
    %757 = vmatprep.subr.mxu0 0.0
    %758 = vmatpush1.msra.mxu0 %v572
    %759 = vmatprep.subr.mxu0 0.0
    %760 = vmatpush1.msra.mxu0 %v577
    %761 = vmatprep.subr.mxu0 0.0
    %762 = vmatpush1.msra.mxu0 %v582
    %763 = vmatprep.subr.mxu0 0.0
    %764 = vmatpush1.msra.mxu0 %v587
    %765 = vmatprep.subr.mxu0 0.0
    %766 = vmatpush1.msra.mxu0 %v592
    %767 = vmatprep.subr.mxu0 0.0
    %768 = vmatpush1.msra.mxu0 0.0
    %769 = vmatprep.subr.mxu0 0.0
    %770 = vmatpush1.msra.mxu0 0.0
    %771 = vmatprep.subr.mxu0 0.0
    %772 = vmatpush1.msra.mxu0 0.0
    %773 = vmatprep.subr.mxu0 0.0
    %774 = vmatpush1.msra.mxu0 0.0
    %775 = vmatprep.subr.mxu0 0.0
    %776 = vmatpush1.msra.mxu0 0.0
    %777 = vmatprep.subr.mxu0 0.0
    %778 = vmatpush1.msra.mxu0 0.0
    %779 = vmatprep.subr.mxu0 0.0
    %780 = vmatpush1.msra.mxu0 0.0
    %781 = vmatprep.subr.mxu0 0.0
    %782 = vmatpush1.msra.mxu0 0.0
    %783 = vmatprep.subr.mxu0 0.0
    %784 = vmatpush1.msra.mxu0 0.0
    %785 = vmatprep.subr.mxu0 0.0
    %786 = vmatpush1.msra.mxu0 0.0
    %787 = vmatprep.subr.mxu0 0.0
    %788 = vmatpush1.msra.mxu0 0.0
    %789 = vmatprep.subr.mxu0 0.0
    %790 = vmatpush1.msra.mxu0 0.0
    %791 = vmatprep.subr.mxu0 0.0
    %792 = vmatpush1.msra.mxu0 0.0
    %793 = vmatprep.subr.mxu0 0.0
    %794 = vmatpush1.msra.mxu0 0.0
    %795 = vmatprep.subr.mxu0 0.0
    %796 = vmatpush1.msra.mxu0 0.0
    %797 = vmatprep.subr.mxu0 0.0
    %798 = vmatpush1.msra.mxu0 0.0
    %799 = vmatprep.mubr.f32.mxu0 0.0
    %800 = vmatmul.mubr.f32.gmra.mrb[0].mxu0 %v429
    %v801 = vpop.f32.mrb[0].mxu0
    %v802 = vadd.f32 0.0, %v801
    %v803 = vpop.f32.mrb[0].mxu0
    %804 = vdwg.mxu0
    %805 = vmatprep.subr.mxu0 %v433
    %806 = vmatpush1.msra.mxu0 %v432
    %807 = vmatprep.subr.mxu0 %v438
    %808 = vmatpush1.msra.mxu0 %v437
    %809 = vmatprep.subr.mxu0 %v443
    %810 = vmatpush1.msra.mxu0 %v442
    %811 = vmatprep.subr.mxu0 %v448
    %812 = vmatpush1.msra.mxu0 %v447
    %813 = vmatprep.subr.mxu0 %v453
    %814 = vmatpush1.msra.mxu0 %v452
    %815 = vmatprep.subr.mxu0 %v458
    %816 = vmatpush1.msra.mxu0 %v457
    %817 = vmatprep.subr.mxu0 %v463
    %818 = vmatpush1.msra.mxu0 %v462
    %819 = vmatprep.subr.mxu0 %v468
    %820 = vmatpush1.msra.mxu0 %v467
    %821 = vmatprep.subr.mxu0 %v473
    %822 = vmatpush1.msra.mxu0 %v472
    %823 = vmatprep.subr.mxu0 %v478
    %824 = vmatpush1.msra.mxu0 %v477
    %825 = vmatprep.subr.mxu0 %v483
    %826 = vmatpush1.msra.mxu0 %v482
    %827 = vmatprep.subr.mxu0 %v488
    %828 = vmatpush1.msra.mxu0 %v487
    %829 = vmatprep.subr.mxu0 %v493
    %830 = vmatpush1.msra.mxu0 %v492
    %831 = vmatprep.subr.mxu0 %v498
    %832 = vmatpush1.msra.mxu0 %v497
    %833 = vmatprep.subr.mxu0 %v503
    %834 = vmatpush1.msra.mxu0 %v502
    %835 = vmatprep.subr.mxu0 %v508
    %836 = vmatpush1.msra.mxu0 %v507
    %837 = vmatprep.subr.mxu0 0.0
    %838 = vmatpush1.msra.mxu0 0.0
    %839 = vmatprep.subr.mxu0 0.0
    %840 = vmatpush1.msra.mxu0 0.0
    %841 = vmatprep.subr.mxu0 0.0
    %842 = vmatpush1.msra.mxu0 0.0
    %843 = vmatprep.subr.mxu0 0.0
    %844 = vmatpush1.msra.mxu0 0.0
    %845 = vmatprep.subr.mxu0 0.0
    %846 = vmatpush1.msra.mxu0 0.0
    %847 = vmatprep.subr.mxu0 0.0
    %848 = vmatpush1.msra.mxu0 0.0
    %849 = vmatprep.subr.mxu0 0.0
    %850 = vmatpush1.msra.mxu0 0.0
    %851 = vmatprep.subr.mxu0 0.0
    %852 = vmatpush1.msra.mxu0 0.0
    %853 = vmatprep.subr.mxu0 0.0
    %854 = vmatpush1.msra.mxu0 0.0
    %855 = vmatprep.subr.mxu0 0.0
    %856 = vmatpush1.msra.mxu0 0.0
    %857 = vmatprep.subr.mxu0 0.0
    %858 = vmatpush1.msra.mxu0 0.0
    %859 = vmatprep.subr.mxu0 0.0
    %860 = vmatpush1.msra.mxu0 0.0
    %861 = vmatprep.subr.mxu0 0.0
    %862 = vmatpush1.msra.mxu0 0.0
    %863 = vmatprep.subr.mxu0 0.0
    %864 = vmatpush1.msra.mxu0 0.0
    %865 = vmatprep.subr.mxu0 0.0
    %866 = vmatpush1.msra.mxu0 0.0
    %867 = vmatprep.subr.mxu0 0.0
    %868 = vmatpush1.msra.mxu0 0.0
    %869 = vmatprep.mubr.f32.mxu0 0.0
    %870 = vmatmul.mubr.f32.gmra.mrb[0].mxu0 %v264
    %v871 = vpop.f32.mrb[0].mxu0
    %v872 = vadd.f32 %v660, %v871
    %v873 = vpop.f32.mrb[0].mxu0
    %v874 = vadd.f32 %v662, %v873
    %875 = vdwg.mxu0
    %876 = vmatprep.subr.mxu0 %v435
    %877 = vmatpush1.msra.mxu0 %v434
    %878 = vmatprep.subr.mxu0 %v440
    %879 = vmatpush1.msra.mxu0 %v439
    %880 = vmatprep.subr.mxu0 %v445
    %881 = vmatpush1.msra.mxu0 %v444
    %882 = vmatprep.subr.mxu0 %v450
    %883 = vmatpush1.msra.mxu0 %v449
    %884 = vmatprep.subr.mxu0 %v455
    %885 = vmatpush1.msra.mxu0 %v454
    %886 = vmatprep.subr.mxu0 %v460
    %887 = vmatpush1.msra.mxu0 %v459
    %888 = vmatprep.subr.mxu0 %v465
    %889 = vmatpush1.msra.mxu0 %v464
    %890 = vmatprep.subr.mxu0 %v470
    %891 = vmatpush1.msra.mxu0 %v469
    %892 = vmatprep.subr.mxu0 %v475
    %893 = vmatpush1.msra.mxu0 %v474
    %894 = vmatprep.subr.mxu0 %v480
    %895 = vmatpush1.msra.mxu0 %v479
    %896 = vmatprep.subr.mxu0 %v485
    %897 = vmatpush1.msra.mxu0 %v484
    %898 = vmatprep.subr.mxu0 %v490
    %899 = vmatpush1.msra.mxu0 %v489
    %900 = vmatprep.subr.mxu0 %v495
    %901 = vmatpush1.msra.mxu0 %v494
    %902 = vmatprep.subr.mxu0 %v500
    %903 = vmatpush1.msra.mxu0 %v499
    %904 = vmatprep.subr.mxu0 %v505
    %905 = vmatpush1.msra.mxu0 %v504
    %906 = vmatprep.subr.mxu0 %v510
    %907 = vmatpush1.msra.mxu0 %v509
    %908 = vmatprep.subr.mxu0 0.0
    %909 = vmatpush1.msra.mxu0 0.0
    %910 = vmatprep.subr.mxu0 0.0
    %911 = vmatpush1.msra.mxu0 0.0
    %912 = vmatprep.subr.mxu0 0.0
    %913 = vmatpush1.msra.mxu0 0.0
    %914 = vmatprep.subr.mxu0 0.0
    %915 = vmatpush1.msra.mxu0 0.0
    %916 = vmatprep.subr.mxu0 0.0
    %917 = vmatpush1.msra.mxu0 0.0
    %918 = vmatprep.subr.mxu0 0.0
    %919 = vmatpush1.msra.mxu0 0.0
    %920 = vmatprep.subr.mxu0 0.0
    %921 = vmatpush1.msra.mxu0 0.0
    %922 = vmatprep.subr.mxu0 0.0
    %923 = vmatpush1.msra.mxu0 0.0
    %924 = vmatprep.subr.mxu0 0.0
    %925 = vmatpush1.msra.mxu0 0.0
    %926 = vmatprep.subr.mxu0 0.0
    %927 = vmatpush1.msra.mxu0 0.0
    %928 = vmatprep.subr.mxu0 0.0
    %929 = vmatpush1.msra.mxu0 0.0
    %930 = vmatprep.subr.mxu0 0.0
    %931 = vmatpush1.msra.mxu0 0.0
    %932 = vmatprep.subr.mxu0 0.0
    %933 = vmatpush1.msra.mxu0 0.0
    %934 = vmatprep.subr.mxu0 0.0
    %935 = vmatpush1.msra.mxu0 0.0
    %936 = vmatprep.subr.mxu0 0.0
    %937 = vmatpush1.msra.mxu0 0.0
    %938 = vmatprep.subr.mxu0 0.0
    %939 = vmatpush1.msra.mxu0 0.0
    %940 = vmatprep.mubr.f32.mxu0 0.0
    %941 = vmatmul.mubr.f32.gmra.mrb[0].mxu0 %v264
    %v942 = vpop.f32.mrb[0].mxu0
    %v943 = vadd.f32 %v731, %v942
    %v944 = vpop.f32.mrb[0].mxu0
    %v945 = vadd.f32 %v733, %v944
    %946 = vdwg.mxu0
    %947 = vmatprep.subr.mxu0 0.0
    %948 = vmatpush1.msra.mxu0 %v436
    %949 = vmatprep.subr.mxu0 0.0
    %950 = vmatpush1.msra.mxu0 %v441
    %951 = vmatprep.subr.mxu0 0.0
    %952 = vmatpush1.msra.mxu0 %v446
    %953 = vmatprep.subr.mxu0 0.0
    %954 = vmatpush1.msra.mxu0 %v451
    %955 = vmatprep.subr.mxu0 0.0
    %956 = vmatpush1.msra.mxu0 %v456
    %957 = vmatprep.subr.mxu0 0.0
    %958 = vmatpush1.msra.mxu0 %v461
    %959 = vmatprep.subr.mxu0 0.0
    %960 = vmatpush1.msra.mxu0 %v466
    %961 = vmatprep.subr.mxu0 0.0
    %962 = vmatpush1.msra.mxu0 %v471
    %963 = vmatprep.subr.mxu0 0.0
    %964 = vmatpush1.msra.mxu0 %v476
    %965 = vmatprep.subr.mxu0 0.0
    %966 = vmatpush1.msra.mxu0 %v481
    %967 = vmatprep.subr.mxu0 0.0
    %968 = vmatpush1.msra.mxu0 %v486
    %969 = vmatprep.subr.mxu0 0.0
    %970 = vmatpush1.msra.mxu0 %v491
    %971 = vmatprep.subr.mxu0 0.0
    %972 = vmatpush1.msra.mxu0 %v496
    %973 = vmatprep.subr.mxu0 0.0
    %974 = vmatpush1.msra.mxu0 %v501
    %975 = vmatprep.subr.mxu0 0.0
    %976 = vmatpush1.msra.mxu0 %v506
    %977 = vmatprep.subr.mxu0 0.0
    %978 = vmatpush1.msra.mxu0 %v511
    %979 = vmatprep.subr.mxu0 0.0
    %980 = vmatpush1.msra.mxu0 0.0
    %981 = vmatprep.subr.mxu0 0.0
    %982 = vmatpush1.msra.mxu0 0.0
    %983 = vmatprep.subr.mxu0 0.0
    %984 = vmatpush1.msra.mxu0 0.0
    %985 = vmatprep.subr.mxu0 0.0
    %986 = vmatpush1.msra.mxu0 0.0
    %987 = vmatprep.subr.mxu0 0.0
    %988 = vmatpush1.msra.mxu0 0.0
    %989 = vmatprep.subr.mxu0 0.0
    %990 = vmatpush1.msra.mxu0 0.0
    %991 = vmatprep.subr.mxu0 0.0
    %992 = vmatpush1.msra.mxu0 0.0
    %993 = vmatprep.subr.mxu0 0.0
    %994 = vmatpush1.msra.mxu0 0.0
    %995 = vmatprep.subr.mxu0 0.0
    %996 = vmatpush1.msra.mxu0 0.0
    %997 = vmatprep.subr.mxu0 0.0
    %998 = vmatpush1.msra.mxu0 0.0
    %999 = vmatprep.subr.mxu0 0.0
    %1000 = vmatpush1.msra.mxu0 0.0
    %1001 = vmatprep.subr.mxu0 0.0
    %1002 = vmatpush1.msra.mxu0 0.0
    %1003 = vmatprep.subr.mxu0 0.0
    %1004 = vmatpush1.msra.mxu0 0.0
    %1005 = vmatprep.subr.mxu0 0.0
    %1006 = vmatpush1.msra.mxu0 0.0
    %1007 = vmatprep.subr.mxu0 0.0
    %1008 = vmatpush1.msra.mxu0 0.0
    %1009 = vmatprep.subr.mxu0 0.0
    %1010 = vmatpush1.msra.mxu0 0.0
    %1011 = vmatprep.mubr.f32.mxu0 0.0
    %1012 = vmatmul.mubr.f32.gmra.mrb[0].mxu0 %v264
    %v1013 = vpop.f32.mrb[0].mxu0
    %v1014 = vadd.f32 %v802, %v1013
    %v1015 = vpop.f32.mrb[0].mxu0
    %1016 = vdwg.mxu0
    %s1017 = scalar_lea.vmem [#allocation13], 1280
    %v1018 = vld [vmem:[%s1017] sm:$0xff]
    %v1019 = vld [vmem:[%s1017 + $0x8] sm:$0xff]
    %v1020 = vld [vmem:[%s1017 + $0x10] sm:$0xff]
    %v1021 = vld [vmem:[%s1017 + $0x18] sm:$0xff]
    %v1022 = vld [vmem:[%s1017 + $0x20] sm:$0xff]
    %v1023 = vld [vmem:[%s1017 + $0x28] sm:$0xff]
    %v1024 = vld [vmem:[%s1017 + $0x30] sm:$0xff]
    %v1025 = vld [vmem:[%s1017 + $0x38] sm:$0xff]
    %v1026 = vld [vmem:[%s1017 + $0x40] sm:$0xff]
    %v1027 = vld [vmem:[%s1017 + $0x48] sm:$0xff]
    %v1028 = vld [vmem:[%s1017 + $0x50] sm:$0xff]
    %v1029 = vld [vmem:[%s1017 + $0x58] sm:$0xff]
    %v1030 = vld [vmem:[%s1017 + $0x60] sm:$0xff]
    %v1031 = vld [vmem:[%s1017 + $0x68] sm:$0xff]
    %v1032 = vld [vmem:[%s1017 + $0x70] sm:$0xff]
    %v1033 = vld [vmem:[%s1017 + $0x78] sm:$0xff]
    %v1034 = vld [vmem:[%s1017 + $0x80] sm:$0xff]
    %v1035 = vld [vmem:[%s1017 + $0x88] sm:$0xff]
    %v1036 = vld [vmem:[%s1017 + $0x90] sm:$0xff]
    %v1037 = vld [vmem:[%s1017 + $0x98] sm:$0xff]
    %v1038 = vld [vmem:[%s1017 + $0xa0] sm:$0xff]
    %v1039 = vld [vmem:[%s1017 + $0xa8] sm:$0xff]
    %v1040 = vld [vmem:[%s1017 + $0xb0] sm:$0xff]
    %v1041 = vld [vmem:[%s1017 + $0xb8] sm:$0xff]
    %v1042 = vld [vmem:[%s1017 + $0xc0] sm:$0xff]
    %v1043 = vld [vmem:[%s1017 + $0xc8] sm:$0xff]
    %v1044 = vld [vmem:[%s1017 + $0xd0] sm:$0xff]
    %v1045 = vld [vmem:[%s1017 + $0xd8] sm:$0xff]
    %v1046 = vld [vmem:[%s1017 + $0xe0] sm:$0xff]
    %v1047 = vld [vmem:[%s1017 + $0xe8] sm:$0xff]
    %v1048 = vld [vmem:[%s1017 + $0xf0] sm:$0xff]
    %v1049 = vld [vmem:[%s1017 + $0xf8] sm:$0xff]
    %v1050 = vld [vmem:[%s1017 + $0x100] sm:$0xff]
    %v1051 = vld [vmem:[%s1017 + $0x108] sm:$0xff]
    %v1052 = vld [vmem:[%s1017 + $0x110] sm:$0xff]
    %v1053 = vld [vmem:[%s1017 + $0x118] sm:$0xff]
    %v1054 = vld [vmem:[%s1017 + $0x120] sm:$0xff]
    %v1055 = vld [vmem:[%s1017 + $0x128] sm:$0xff]
    %v1056 = vld [vmem:[%s1017 + $0x130] sm:$0xff]
    %v1057 = vld [vmem:[%s1017 + $0x138] sm:$0xff]
    %v1058 = vld [vmem:[%s1017 + $0x140] sm:$0xff]
    %v1059 = vld [vmem:[%s1017 + $0x148] sm:$0xff]
    %v1060 = vld [vmem:[%s1017 + $0x150] sm:$0xff]
    %v1061 = vld [vmem:[%s1017 + $0x158] sm:$0xff]
    %v1062 = vld [vmem:[%s1017 + $0x160] sm:$0xff]
    %v1063 = vld [vmem:[%s1017 + $0x168] sm:$0xff]
    %v1064 = vld [vmem:[%s1017 + $0x170] sm:$0xff]
    %v1065 = vld [vmem:[%s1017 + $0x178] sm:$0xff]
    %v1066 = vld [vmem:[%s1017 + $0x180] sm:$0xff]
    %v1067 = vld [vmem:[%s1017 + $0x188] sm:$0xff]
    %v1068 = vld [vmem:[%s1017 + $0x190] sm:$0xff]
    %v1069 = vld [vmem:[%s1017 + $0x198] sm:$0xff]
    %v1070 = vld [vmem:[%s1017 + $0x1a0] sm:$0xff]
    %v1071 = vld [vmem:[%s1017 + $0x1a8] sm:$0xff]
    %v1072 = vld [vmem:[%s1017 + $0x1b0] sm:$0xff]
    %v1073 = vld [vmem:[%s1017 + $0x1b8] sm:$0xff]
    %v1074 = vld [vmem:[%s1017 + $0x1c0] sm:$0xff]
    %v1075 = vld [vmem:[%s1017 + $0x1c8] sm:$0xff]
    %v1076 = vld [vmem:[%s1017 + $0x1d0] sm:$0xff]
    %v1077 = vld [vmem:[%s1017 + $0x1d8] sm:$0xff]
    %v1078 = vld [vmem:[%s1017 + $0x1e0] sm:$0xff]
    %v1079 = vld [vmem:[%s1017 + $0x1e8] sm:$0xff]
    %v1080 = vld [vmem:[%s1017 + $0x1f0] sm:$0xff]
    %v1081 = vld [vmem:[%s1017 + $0x1f8] sm:$0xff]
    %v1082 = vld [vmem:[%s1017 + $0x200] sm:$0xff]
    %v1083 = vld [vmem:[%s1017 + $0x208] sm:$0xff]
    %v1084 = vld [vmem:[%s1017 + $0x210] sm:$0xff]
    %v1085 = vld [vmem:[%s1017 + $0x218] sm:$0xff]
    %v1086 = vld [vmem:[%s1017 + $0x220] sm:$0xff]
    %v1087 = vld [vmem:[%s1017 + $0x228] sm:$0xff]
    %v1088 = vld [vmem:[%s1017 + $0x230] sm:$0xff]
    %v1089 = vld [vmem:[%s1017 + $0x238] sm:$0xff]
    %v1090 = vld [vmem:[%s1017 + $0x240] sm:$0xff]
    %v1091 = vld [vmem:[%s1017 + $0x248] sm:$0xff]
    %v1092 = vld [vmem:[%s1017 + $0x250] sm:$0xff]
    %v1093 = vld [vmem:[%s1017 + $0x258] sm:$0xff]
    %v1094 = vld [vmem:[%s1017 + $0x260] sm:$0xff]
    %v1095 = vld [vmem:[%s1017 + $0x268] sm:$0xff]
    %v1096 = vld [vmem:[%s1017 + $0x270] sm:$0xff]
    %v1097 = vld [vmem:[%s1017 + $0x278] sm:$0xff]
    %1098 = vmatprep.subr.mxu0 %v1019
    %1099 = vmatpush1.msra.mxu0 %v1018
    %1100 = vmatprep.subr.mxu0 %v1024
    %1101 = vmatpush1.msra.mxu0 %v1023
    %1102 = vmatprep.subr.mxu0 %v1029
    %1103 = vmatpush1.msra.mxu0 %v1028
    %1104 = vmatprep.subr.mxu0 %v1034
    %1105 = vmatpush1.msra.mxu0 %v1033
    %1106 = vmatprep.subr.mxu0 %v1039
    %1107 = vmatpush1.msra.mxu0 %v1038
    %1108 = vmatprep.subr.mxu0 %v1044
    %1109 = vmatpush1.msra.mxu0 %v1043
    %1110 = vmatprep.subr.mxu0 %v1049
    %1111 = vmatpush1.msra.mxu0 %v1048
    %1112 = vmatprep.subr.mxu0 %v1054
    %1113 = vmatpush1.msra.mxu0 %v1053
    %1114 = vmatprep.subr.mxu0 %v1059
    %1115 = vmatpush1.msra.mxu0 %v1058
    %1116 = vmatprep.subr.mxu0 %v1064
    %1117 = vmatpush1.msra.mxu0 %v1063
    %1118 = vmatprep.subr.mxu0 %v1069
    %1119 = vmatpush1.msra.mxu0 %v1068
    %1120 = vmatprep.subr.mxu0 %v1074
    %1121 = vmatpush1.msra.mxu0 %v1073
    %1122 = vmatprep.subr.mxu0 %v1079
    %1123 = vmatpush1.msra.mxu0 %v1078
    %1124 = vmatprep.subr.mxu0 %v1084
    %1125 = vmatpush1.msra.mxu0 %v1083
    %1126 = vmatprep.subr.mxu0 %v1089
    %1127 = vmatpush1.msra.mxu0 %v1088
    %1128 = vmatprep.subr.mxu0 %v1094
    %1129 = vmatpush1.msra.mxu0 %v1093
    %1130 = vmatprep.subr.mxu0 0.0
    %1131 = vmatpush1.msra.mxu0 0.0
    %1132 = vmatprep.subr.mxu0 0.0
    %1133 = vmatpush1.msra.mxu0 0.0
    %1134 = vmatprep.subr.mxu0 0.0
    %1135 = vmatpush1.msra.mxu0 0.0
    %1136 = vmatprep.subr.mxu0 0.0
    %1137 = vmatpush1.msra.mxu0 0.0
    %1138 = vmatprep.subr.mxu0 0.0
    %1139 = vmatpush1.msra.mxu0 0.0
    %1140 = vmatprep.subr.mxu0 0.0
    %1141 = vmatpush1.msra.mxu0 0.0
    %1142 = vmatprep.subr.mxu0 0.0
    %1143 = vmatpush1.msra.mxu0 0.0
    %1144 = vmatprep.subr.mxu0 0.0
    %1145 = vmatpush1.msra.mxu0 0.0
    %1146 = vmatprep.subr.mxu0 0.0
    %1147 = vmatpush1.msra.mxu0 0.0
    %1148 = vmatprep.subr.mxu0 0.0
    %1149 = vmatpush1.msra.mxu0 0.0
    %1150 = vmatprep.subr.mxu0 0.0
    %1151 = vmatpush1.msra.mxu0 0.0
    %1152 = vmatprep.subr.mxu0 0.0
    %1153 = vmatpush1.msra.mxu0 0.0
    %1154 = vmatprep.subr.mxu0 0.0
    %1155 = vmatpush1.msra.mxu0 0.0
    %1156 = vmatprep.subr.mxu0 0.0
    %1157 = vmatpush1.msra.mxu0 0.0
    %1158 = vmatprep.subr.mxu0 0.0
    %1159 = vmatpush1.msra.mxu0 0.0
    %1160 = vmatprep.subr.mxu0 0.0
    %1161 = vmatpush1.msra.mxu0 0.0
    %1162 = vmatprep.mubr.f32.mxu0 0.0
    %1163 = vmatmul.mubr.f32.gmra.mrb[0].mxu0 %v355
    %v1164 = vpop.f32.mrb[0].mxu0
    %v1165 = vadd.f32 0.0, %v1164
    %v1166 = vpop.f32.mrb[0].mxu0
    %v1167 = vadd.f32 0.0, %v1166
    %1168 = vdwg.mxu0
    %1169 = vmatprep.subr.mxu0 %v1021
    %1170 = vmatpush1.msra.mxu0 %v1020
    %1171 = vmatprep.subr.mxu0 %v1026
    %1172 = vmatpush1.msra.mxu0 %v1025
    %1173 = vmatprep.subr.mxu0 %v1031
    %1174 = vmatpush1.msra.mxu0 %v1030
    %1175 = vmatprep.subr.mxu0 %v1036
    %1176 = vmatpush1.msra.mxu0 %v1035
    %1177 = vmatprep.subr.mxu0 %v1041
    %1178 = vmatpush1.msra.mxu0 %v1040
    %1179 = vmatprep.subr.mxu0 %v1046
    %1180 = vmatpush1.msra.mxu0 %v1045
    %1181 = vmatprep.subr.mxu0 %v1051
    %1182 = vmatpush1.msra.mxu0 %v1050
    %1183 = vmatprep.subr.mxu0 %v1056
    %1184 = vmatpush1.msra.mxu0 %v1055
    %1185 = vmatprep.subr.mxu0 %v1061
    %1186 = vmatpush1.msra.mxu0 %v1060
    %1187 = vmatprep.subr.mxu0 %v1066
    %1188 = vmatpush1.msra.mxu0 %v1065
    %1189 = vmatprep.subr.mxu0 %v1071
    %1190 = vmatpush1.msra.mxu0 %v1070
    %1191 = vmatprep.subr.mxu0 %v1076
    %1192 = vmatpush1.msra.mxu0 %v1075
    %1193 = vmatprep.subr.mxu0 %v1081
    %1194 = vmatpush1.msra.mxu0 %v1080
    %1195 = vmatprep.subr.mxu0 %v1086
    %1196 = vmatpush1.msra.mxu0 %v1085
    %1197 = vmatprep.subr.mxu0 %v1091
    %1198 = vmatpush1.msra.mxu0 %v1090
    %1199 = vmatprep.subr.mxu0 %v1096
    %1200 = vmatpush1.msra.mxu0 %v1095
    %1201 = vmatprep.subr.mxu0 0.0
    %1202 = vmatpush1.msra.mxu0 0.0
    %1203 = vmatprep.subr.mxu0 0.0
    %1204 = vmatpush1.msra.mxu0 0.0
    %1205 = vmatprep.subr.mxu0 0.0
    %1206 = vmatpush1.msra.mxu0 0.0
    %1207 = vmatprep.subr.mxu0 0.0
    %1208 = vmatpush1.msra.mxu0 0.0
    %1209 = vmatprep.subr.mxu0 0.0
    %1210 = vmatpush1.msra.mxu0 0.0
    %1211 = vmatprep.subr.mxu0 0.0
    %1212 = vmatpush1.msra.mxu0 0.0
    %1213 = vmatprep.subr.mxu0 0.0
    %1214 = vmatpush1.msra.mxu0 0.0
    %1215 = vmatprep.subr.mxu0 0.0
    %1216 = vmatpush1.msra.mxu0 0.0
    %1217 = vmatprep.subr.mxu0 0.0
    %1218 = vmatpush1.msra.mxu0 0.0
    %1219 = vmatprep.subr.mxu0 0.0
    %1220 = vmatpush1.msra.mxu0 0.0
    %1221 = vmatprep.subr.mxu0 0.0
    %1222 = vmatpush1.msra.mxu0 0.0
    %1223 = vmatprep.subr.mxu0 0.0
    %1224 = vmatpush1.msra.mxu0 0.0
    %1225 = vmatprep.subr.mxu0 0.0
    %1226 = vmatpush1.msra.mxu0 0.0
    %1227 = vmatprep.subr.mxu0 0.0
    %1228 = vmatpush1.msra.mxu0 0.0
    %1229 = vmatprep.subr.mxu0 0.0
    %1230 = vmatpush1.msra.mxu0 0.0
    %1231 = vmatprep.subr.mxu0 0.0
    %1232 = vmatpush1.msra.mxu0 0.0
    %1233 = vmatprep.mubr.f32.mxu0 0.0
    %1234 = vmatmul.mubr.f32.gmra.mrb[0].mxu0 %v355
    %v1235 = vpop.f32.mrb[0].mxu0
    %v1236 = vadd.f32 0.0, %v1235
    %v1237 = vpop.f32.mrb[0].mxu0
    %v1238 = vadd.f32 0.0, %v1237
    %1239 = vdwg.mxu0
    %1240 = vmatprep.subr.mxu0 0.0
    %1241 = vmatpush1.msra.mxu0 %v1022
    %1242 = vmatprep.subr.mxu0 0.0
    %1243 = vmatpush1.msra.mxu0 %v1027
    %1244 = vmatprep.subr.mxu0 0.0
    %1245 = vmatpush1.msra.mxu0 %v1032
    %1246 = vmatprep.subr.mxu0 0.0
    %1247 = vmatpush1.msra.mxu0 %v1037
    %1248 = vmatprep.subr.mxu0 0.0
    %1249 = vmatpush1.msra.mxu0 %v1042
    %1250 = vmatprep.subr.mxu0 0.0
    %1251 = vmatpush1.msra.mxu0 %v1047
    %1252 = vmatprep.subr.mxu0 0.0
    %1253 = vmatpush1.msra.mxu0 %v1052
    %1254 = vmatprep.subr.mxu0 0.0
    %1255 = vmatpush1.msra.mxu0 %v1057
    %1256 = vmatprep.subr.mxu0 0.0
    %1257 = vmatpush1.msra.mxu0 %v1062
    %1258 = vmatprep.subr.mxu0 0.0
    %1259 = vmatpush1.msra.mxu0 %v1067
    %1260 = vmatprep.subr.mxu0 0.0
    %1261 = vmatpush1.msra.mxu0 %v1072
    %1262 = vmatprep.subr.mxu0 0.0
    %1263 = vmatpush1.msra.mxu0 %v1077
    %1264 = vmatprep.subr.mxu0 0.0
    %1265 = vmatpush1.msra.mxu0 %v1082
    %1266 = vmatprep.subr.mxu0 0.0
    %1267 = vmatpush1.msra.mxu0 %v1087
    %1268 = vmatprep.subr.mxu0 0.0
    %1269 = vmatpush1.msra.mxu0 %v1092
    %1270 = vmatprep.subr.mxu0 0.0
    %1271 = vmatpush1.msra.mxu0 %v1097
    %1272 = vmatprep.subr.mxu0 0.0
    %1273 = vmatpush1.msra.mxu0 0.0
    %1274 = vmatprep.subr.mxu0 0.0
    %1275 = vmatpush1.msra.mxu0 0.0
    %1276 = vmatprep.subr.mxu0 0.0
    %1277 = vmatpush1.msra.mxu0 0.0
    %1278 = vmatprep.subr.mxu0 0.0
    %1279 = vmatpush1.msra.mxu0 0.0
    %1280 = vmatprep.subr.mxu0 0.0
    %1281 = vmatpush1.msra.mxu0 0.0
    %1282 = vmatprep.subr.mxu0 0.0
    %1283 = vmatpush1.msra.mxu0 0.0
    %1284 = vmatprep.subr.mxu0 0.0
    %1285 = vmatpush1.msra.mxu0 0.0
    %1286 = vmatprep.subr.mxu0 0.0
    %1287 = vmatpush1.msra.mxu0 0.0
    %1288 = vmatprep.subr.mxu0 0.0
    %1289 = vmatpush1.msra.mxu0 0.0
    %1290 = vmatprep.subr.mxu0 0.0
    %1291 = vmatpush1.msra.mxu0 0.0
    %1292 = vmatprep.subr.mxu0 0.0
    %1293 = vmatpush1.msra.mxu0 0.0
    %1294 = vmatprep.subr.mxu0 0.0
    %1295 = vmatpush1.msra.mxu0 0.0
    %1296 = vmatprep.subr.mxu0 0.0
    %1297 = vmatpush1.msra.mxu0 0.0
    %1298 = vmatprep.subr.mxu0 0.0
    %1299 = vmatpush1.msra.mxu0 0.0
    %1300 = vmatprep.subr.mxu0 0.0
    %1301 = vmatpush1.msra.mxu0 0.0
    %1302 = vmatprep.subr.mxu0 0.0
    %1303 = vmatpush1.msra.mxu0 0.0
    %1304 = vmatprep.mubr.f32.mxu0 0.0
    %1305 = vmatmul.mubr.f32.gmra.mrb[0].mxu0 %v355
    %v1306 = vpop.f32.mrb[0].mxu0
    %v1307 = vadd.f32 0.0, %v1306
    %v1308 = vpop.f32.mrb[0].mxu0
    %1309 = vdwg.mxu0
    %v1310 = vadd.f32 %v872, %v1165
    %v1311 = vadd.f32 %v874, %v1167
    %v1312 = vadd.f32 %v943, %v1236
    %v1313 = vadd.f32 %v945, %v1238
    %v1314 = vadd.f32 %v1014, %v1307
    %v1315 = vld [vmem:[#allocation14] sm:$0x1f]
    %v1317 = vlaneseq
    %v1318 = vshrl.u32 %v1317, 7
    %v1319 = vsub.s32 0, %v1318
    %v1320 = vrot.slane %v1315, %v1319
    %v1321 = vlaneseq
    %v1322 = vshrl.u32 %v1321, 7
    %v1323 = vsub.s32 1, %v1322
    %v1324 = vrot.slane %v1315, %v1323
    %v1325 = vlaneseq
    %v1326 = vshrl.u32 %v1325, 7
    %v1327 = vsub.s32 2, %v1326
    %v1328 = vrot.slane %v1315, %v1327
    %v1329 = vlaneseq
    %v1330 = vshrl.u32 %v1329, 7
    %v1331 = vsub.s32 3, %v1330
    %v1332 = vrot.slane %v1315, %v1331
    %v1333 = vlaneseq
    %v1334 = vshrl.u32 %v1333, 7
    %v1335 = vsub.s32 4, %v1334
    %v1336 = vrot.slane %v1315, %v1335
    %v1342 = vadd.f32 %v1310, %v1320
    %v1343 = vadd.f32 %v1311, %v1324
    %v1344 = vadd.f32 %v1312, %v1328
    %v1345 = vadd.f32 %v1313, %v1332
    %v1346 = vadd.f32 %v1314, %v1336
    %v1347 = vxor.u32 %v1342, 2147483648
    %v1348 = vmul.f32 %v1347, 1.442695
    %v1349 = vpow.pop %v1348
    %v1350 = vadd.f32 %v1349, 1.0
    %v1351 = vrcp.pop %v1350
    %v1352 = vmul.f32 1.0, %v1351
    %v1353 = vxor.u32 %v1343, 2147483648
    %v1354 = vmul.f32 %v1353, 1.442695
    %v1355 = vpow.pop %v1354
    %v1356 = vadd.f32 %v1355, 1.0
    %v1357 = vrcp.pop %v1356
    %v1358 = vmul.f32 1.0, %v1357
    %v1359 = vxor.u32 %v1344, 2147483648
    %v1360 = vmul.f32 %v1359, 1.442695
    %v1361 = vpow.pop %v1360
    %v1362 = vadd.f32 %v1361, 1.0
    %v1363 = vrcp.pop %v1362
    %v1364 = vmul.f32 1.0, %v1363
    %v1365 = vxor.u32 %v1345, 2147483648
    %v1366 = vmul.f32 %v1365, 1.442695
    %v1367 = vpow.pop %v1366
    %v1368 = vadd.f32 %v1367, 1.0
    %v1369 = vrcp.pop %v1368
    %v1370 = vmul.f32 1.0, %v1369
    %v1371 = vmul.f32 %v1358, %v264
    %v1372 = vld [vmem:[#allocation16] sm:$0xff]
    %v1373 = vld [vmem:[#allocation16 + $0x8] sm:$0xff]
    %v1374 = vld [vmem:[#allocation16 + $0x10] sm:$0xff]
    %v1375 = vld [vmem:[#allocation16 + $0x18] sm:$0xff]
    %v1376 = vld [vmem:[#allocation16 + $0x20] sm:$0xff]
    %v1377 = vld [vmem:[#allocation16 + $0x28] sm:$0xff]
    %v1378 = vld [vmem:[#allocation16 + $0x30] sm:$0xff]
    %v1379 = vld [vmem:[#allocation16 + $0x38] sm:$0xff]
    %v1380 = vld [vmem:[#allocation16 + $0x40] sm:$0xff]
    %v1381 = vld [vmem:[#allocation16 + $0x48] sm:$0xff]
    %v1382 = vld [vmem:[#allocation16 + $0x50] sm:$0xff]
    %v1383 = vld [vmem:[#allocation16 + $0x58] sm:$0xff]
    %v1384 = vld [vmem:[#allocation16 + $0x60] sm:$0xff]
    %v1385 = vld [vmem:[#allocation16 + $0x68] sm:$0xff]
    %v1386 = vld [vmem:[#allocation16 + $0x70] sm:$0xff]
    %v1387 = vld [vmem:[#allocation16 + $0x78] sm:$0xff]
    %v1388 = vmul.f32 %v1352, %v429
    %s1389 = scalar_lea.vmem [#allocation16], 128
    %v1390 = vld [vmem:[%s1389] sm:$0xff]
    %v1391 = vld [vmem:[%s1389 + $0x8] sm:$0xff]
    %v1392 = vld [vmem:[%s1389 + $0x10] sm:$0xff]
    %v1393 = vld [vmem:[%s1389 + $0x18] sm:$0xff]
    %v1394 = vld [vmem:[%s1389 + $0x20] sm:$0xff]
    %v1395 = vld [vmem:[%s1389 + $0x28] sm:$0xff]
    %v1396 = vld [vmem:[%s1389 + $0x30] sm:$0xff]
    %v1397 = vld [vmem:[%s1389 + $0x38] sm:$0xff]
    %v1398 = vld [vmem:[%s1389 + $0x40] sm:$0xff]
    %v1399 = vld [vmem:[%s1389 + $0x48] sm:$0xff]
    %v1400 = vld [vmem:[%s1389 + $0x50] sm:$0xff]
    %v1401 = vld [vmem:[%s1389 + $0x58] sm:$0xff]
    %v1402 = vld [vmem:[%s1389 + $0x60] sm:$0xff]
    %v1403 = vld [vmem:[%s1389 + $0x68] sm:$0xff]
    %v1404 = vld [vmem:[%s1389 + $0x70] sm:$0xff]
    %v1405 = vld [vmem:[%s1389 + $0x78] sm:$0xff]
    %1406 = vmatprep.subr.mxu0 0.0
    %1407 = vmatpush1.msra.mxu0 %v1390
    %1408 = vmatprep.subr.mxu0 0.0
    %1409 = vmatpush1.msra.mxu0 %v1391
    %1410 = vmatprep.subr.mxu0 0.0
    %1411 = vmatpush1.msra.mxu0 %v1392
    %1412 = vmatprep.subr.mxu0 0.0
    %1413 = vmatpush1.msra.mxu0 %v1393
    %1414 = vmatprep.subr.mxu0 0.0
    %1415 = vmatpush1.msra.mxu0 %v1394
    %1416 = vmatprep.subr.mxu0 0.0
    %1417 = vmatpush1.msra.mxu0 %v1395
    %1418 = vmatprep.subr.mxu0 0.0
    %1419 = vmatpush1.msra.mxu0 %v1396
    %1420 = vmatprep.subr.mxu0 0.0
    %1421 = vmatpush1.msra.mxu0 %v1397
    %1422 = vmatprep.subr.mxu0 0.0
    %1423 = vmatpush1.msra.mxu0 %v1398
    %1424 = vmatprep.subr.mxu0 0.0
    %1425 = vmatpush1.msra.mxu0 %v1399
    %1426 = vmatprep.subr.mxu0 0.0
    %1427 = vmatpush1.msra.mxu0 %v1400
    %1428 = vmatprep.subr.mxu0 0.0
    %1429 = vmatpush1.msra.mxu0 %v1401
    %1430 = vmatprep.subr.mxu0 0.0
    %1431 = vmatpush1.msra.mxu0 %v1402
    %1432 = vmatprep.subr.mxu0 0.0
    %1433 = vmatpush1.msra.mxu0 %v1403
    %1434 = vmatprep.subr.mxu0 0.0
    %1435 = vmatpush1.msra.mxu0 %v1404
    %1436 = vmatprep.subr.mxu0 0.0
    %1437 = vmatpush1.msra.mxu0 %v1405
    %1438 = vmatprep.subr.mxu0 0.0
    %1439 = vmatpush1.msra.mxu0 0.0
    %1440 = vmatprep.subr.mxu0 0.0
    %1441 = vmatpush1.msra.mxu0 0.0
    %1442 = vmatprep.subr.mxu0 0.0
    %1443 = vmatpush1.msra.mxu0 0.0
    %1444 = vmatprep.subr.mxu0 0.0
    %1445 = vmatpush1.msra.mxu0 0.0
    %1446 = vmatprep.subr.mxu0 0.0
    %1447 = vmatpush1.msra.mxu0 0.0
    %1448 = vmatprep.subr.mxu0 0.0
    %1449 = vmatpush1.msra.mxu0 0.0
    %1450 = vmatprep.subr.mxu0 0.0
    %1451 = vmatpush1.msra.mxu0 0.0
    %1452 = vmatprep.subr.mxu0 0.0
    %1453 = vmatpush1.msra.mxu0 0.0
    %1454 = vmatprep.subr.mxu0 0.0
    %1455 = vmatpush1.msra.mxu0 0.0
    %1456 = vmatprep.subr.mxu0 0.0
    %1457 = vmatpush1.msra.mxu0 0.0
    %1458 = vmatprep.subr.mxu0 0.0
    %1459 = vmatpush1.msra.mxu0 0.0
    %1460 = vmatprep.subr.mxu0 0.0
    %1461 = vmatpush1.msra.mxu0 0.0
    %1462 = vmatprep.subr.mxu0 0.0
    %1463 = vmatpush1.msra.mxu0 0.0
    %1464 = vmatprep.subr.mxu0 0.0
    %1465 = vmatpush1.msra.mxu0 0.0
    %1466 = vmatprep.subr.mxu0 0.0
    %1467 = vmatpush1.msra.mxu0 0.0
    %1468 = vmatprep.subr.mxu0 0.0
    %1469 = vmatpush1.msra.mxu0 0.0
    %1470 = vmatprep.mubr.f32.mxu0 0.0
    %1471 = vmatmul.mubr.f32.gmra.mrb[0].mxu0 %v1388
    %v1472 = vpop.f32.mrb[0].mxu0
    %v1473 = vadd.f32 0.0, %v1472
    %v1474 = vpop.f32.mrb[0].mxu0
    %1475 = vdwg.mxu0
    %1476 = vmatprep.subr.mxu0 0.0
    %1477 = vmatpush1.msra.mxu0 %v1372
    %1478 = vmatprep.subr.mxu0 0.0
    %1479 = vmatpush1.msra.mxu0 %v1373
    %1480 = vmatprep.subr.mxu0 0.0
    %1481 = vmatpush1.msra.mxu0 %v1374
    %1482 = vmatprep.subr.mxu0 0.0
    %1483 = vmatpush1.msra.mxu0 %v1375
    %1484 = vmatprep.subr.mxu0 0.0
    %1485 = vmatpush1.msra.mxu0 %v1376
    %1486 = vmatprep.subr.mxu0 0.0
    %1487 = vmatpush1.msra.mxu0 %v1377
    %1488 = vmatprep.subr.mxu0 0.0
    %1489 = vmatpush1.msra.mxu0 %v1378
    %1490 = vmatprep.subr.mxu0 0.0
    %1491 = vmatpush1.msra.mxu0 %v1379
    %1492 = vmatprep.subr.mxu0 0.0
    %1493 = vmatpush1.msra.mxu0 %v1380
    %1494 = vmatprep.subr.mxu0 0.0
    %1495 = vmatpush1.msra.mxu0 %v1381
    %1496 = vmatprep.subr.mxu0 0.0
    %1497 = vmatpush1.msra.mxu0 %v1382
    %1498 = vmatprep.subr.mxu0 0.0
    %1499 = vmatpush1.msra.mxu0 %v1383
    %1500 = vmatprep.subr.mxu0 0.0
    %1501 = vmatpush1.msra.mxu0 %v1384
    %1502 = vmatprep.subr.mxu0 0.0
    %1503 = vmatpush1.msra.mxu0 %v1385
    %1504 = vmatprep.subr.mxu0 0.0
    %1505 = vmatpush1.msra.mxu0 %v1386
    %1506 = vmatprep.subr.mxu0 0.0
    %1507 = vmatpush1.msra.mxu0 %v1387
    %1508 = vmatprep.subr.mxu0 0.0
    %1509 = vmatpush1.msra.mxu0 0.0
    %1510 = vmatprep.subr.mxu0 0.0
    %1511 = vmatpush1.msra.mxu0 0.0
    %1512 = vmatprep.subr.mxu0 0.0
    %1513 = vmatpush1.msra.mxu0 0.0
    %1514 = vmatprep.subr.mxu0 0.0
    %1515 = vmatpush1.msra.mxu0 0.0
    %1516 = vmatprep.subr.mxu0 0.0
    %1517 = vmatpush1.msra.mxu0 0.0
    %1518 = vmatprep.subr.mxu0 0.0
    %1519 = vmatpush1.msra.mxu0 0.0
    %1520 = vmatprep.subr.mxu0 0.0
    %1521 = vmatpush1.msra.mxu0 0.0
    %1522 = vmatprep.subr.mxu0 0.0
    %1523 = vmatpush1.msra.mxu0 0.0
    %1524 = vmatprep.subr.mxu0 0.0
    %1525 = vmatpush1.msra.mxu0 0.0
    %1526 = vmatprep.subr.mxu0 0.0
    %1527 = vmatpush1.msra.mxu0 0.0
    %1528 = vmatprep.subr.mxu0 0.0
    %1529 = vmatpush1.msra.mxu0 0.0
    %1530 = vmatprep.subr.mxu0 0.0
    %1531 = vmatpush1.msra.mxu0 0.0
    %1532 = vmatprep.subr.mxu0 0.0
    %1533 = vmatpush1.msra.mxu0 0.0
    %1534 = vmatprep.subr.mxu0 0.0
    %1535 = vmatpush1.msra.mxu0 0.0
    %1536 = vmatprep.subr.mxu0 0.0
    %1537 = vmatpush1.msra.mxu0 0.0
    %1538 = vmatprep.subr.mxu0 0.0
    %1539 = vmatpush1.msra.mxu0 0.0
    %1540 = vmatprep.mubr.f32.mxu0 0.0
    %1541 = vmatmul.mubr.f32.gmra.mrb[0].mxu0 %v1371
    %v1542 = vpop.f32.mrb[0].mxu0
    %v1543 = vadd.f32 %v1473, %v1542
    %v1544 = vpop.f32.mrb[0].mxu0
    %1545 = vdwg.mxu0
    %s1546 = scalar_lea.vmem [#allocation16], 256
    %v1547 = vld [vmem:[%s1546] sm:$0xff]
    %v1548 = vld [vmem:[%s1546 + $0x8] sm:$0xff]
    %v1549 = vld [vmem:[%s1546 + $0x10] sm:$0xff]
    %v1550 = vld [vmem:[%s1546 + $0x18] sm:$0xff]
    %v1551 = vld [vmem:[%s1546 + $0x20] sm:$0xff]
    %v1552 = vld [vmem:[%s1546 + $0x28] sm:$0xff]
    %v1553 = vld [vmem:[%s1546 + $0x30] sm:$0xff]
    %v1554 = vld [vmem:[%s1546 + $0x38] sm:$0xff]
    %v1555 = vld [vmem:[%s1546 + $0x40] sm:$0xff]
    %v1556 = vld [vmem:[%s1546 + $0x48] sm:$0xff]
    %v1557 = vld [vmem:[%s1546 + $0x50] sm:$0xff]
    %v1558 = vld [vmem:[%s1546 + $0x58] sm:$0xff]
    %v1559 = vld [vmem:[%s1546 + $0x60] sm:$0xff]
    %v1560 = vld [vmem:[%s1546 + $0x68] sm:$0xff]
    %v1561 = vld [vmem:[%s1546 + $0x70] sm:$0xff]
    %v1562 = vld [vmem:[%s1546 + $0x78] sm:$0xff]
    %1563 = vmatprep.subr.mxu0 0.0
    %1564 = vmatpush1.msra.mxu0 %v1547
    %1565 = vmatprep.subr.mxu0 0.0
    %1566 = vmatpush1.msra.mxu0 %v1548
    %1567 = vmatprep.subr.mxu0 0.0
    %1568 = vmatpush1.msra.mxu0 %v1549
    %1569 = vmatprep.subr.mxu0 0.0
    %1570 = vmatpush1.msra.mxu0 %v1550
    %1571 = vmatprep.subr.mxu0 0.0
    %1572 = vmatpush1.msra.mxu0 %v1551
    %1573 = vmatprep.subr.mxu0 0.0
    %1574 = vmatpush1.msra.mxu0 %v1552
    %1575 = vmatprep.subr.mxu0 0.0
    %1576 = vmatpush1.msra.mxu0 %v1553
    %1577 = vmatprep.subr.mxu0 0.0
    %1578 = vmatpush1.msra.mxu0 %v1554
    %1579 = vmatprep.subr.mxu0 0.0
    %1580 = vmatpush1.msra.mxu0 %v1555
    %1581 = vmatprep.subr.mxu0 0.0
    %1582 = vmatpush1.msra.mxu0 %v1556
    %1583 = vmatprep.subr.mxu0 0.0
    %1584 = vmatpush1.msra.mxu0 %v1557
    %1585 = vmatprep.subr.mxu0 0.0
    %1586 = vmatpush1.msra.mxu0 %v1558
    %1587 = vmatprep.subr.mxu0 0.0
    %1588 = vmatpush1.msra.mxu0 %v1559
    %1589 = vmatprep.subr.mxu0 0.0
    %1590 = vmatpush1.msra.mxu0 %v1560
    %1591 = vmatprep.subr.mxu0 0.0
    %1592 = vmatpush1.msra.mxu0 %v1561
    %1593 = vmatprep.subr.mxu0 0.0
    %1594 = vmatpush1.msra.mxu0 %v1562
    %1595 = vmatprep.subr.mxu0 0.0
    %1596 = vmatpush1.msra.mxu0 0.0
    %1597 = vmatprep.subr.mxu0 0.0
    %1598 = vmatpush1.msra.mxu0 0.0
    %1599 = vmatprep.subr.mxu0 0.0
    %1600 = vmatpush1.msra.mxu0 0.0
    %1601 = vmatprep.subr.mxu0 0.0
    %1602 = vmatpush1.msra.mxu0 0.0
    %1603 = vmatprep.subr.mxu0 0.0
    %1604 = vmatpush1.msra.mxu0 0.0
    %1605 = vmatprep.subr.mxu0 0.0
    %1606 = vmatpush1.msra.mxu0 0.0
    %1607 = vmatprep.subr.mxu0 0.0
    %1608 = vmatpush1.msra.mxu0 0.0
    %1609 = vmatprep.subr.mxu0 0.0
    %1610 = vmatpush1.msra.mxu0 0.0
    %1611 = vmatprep.subr.mxu0 0.0
    %1612 = vmatpush1.msra.mxu0 0.0
    %1613 = vmatprep.subr.mxu0 0.0
    %1614 = vmatpush1.msra.mxu0 0.0
    %1615 = vmatprep.subr.mxu0 0.0
    %1616 = vmatpush1.msra.mxu0 0.0
    %1617 = vmatprep.subr.mxu0 0.0
    %1618 = vmatpush1.msra.mxu0 0.0
    %1619 = vmatprep.subr.mxu0 0.0
    %1620 = vmatpush1.msra.mxu0 0.0
    %1621 = vmatprep.subr.mxu0 0.0
    %1622 = vmatpush1.msra.mxu0 0.0
    %1623 = vmatprep.subr.mxu0 0.0
    %1624 = vmatpush1.msra.mxu0 0.0
    %1625 = vmatprep.subr.mxu0 0.0
    %1626 = vmatpush1.msra.mxu0 0.0
    %1627 = vmatprep.mubr.f32.mxu0 0.0
    %1628 = vmatmul.mubr.f32.gmra.mrb[0].mxu0 %v355
    %v1629 = vpop.f32.mrb[0].mxu0
    %v1630 = vadd.f32 0.0, %v1629
    %v1631 = vpop.f32.mrb[0].mxu0
    %1632 = vdwg.mxu0
    %v1633 = vadd.f32 %v1543, %v1630
    %v1634 = vld [vmem:[#allocation17] sm:$0x1]
    %v1636 = vlaneseq
    %v1637 = vshrl.u32 %v1636, 7
    %v1638 = vsub.s32 0, %v1637
    %v1639 = vrot.slane %v1634, %v1638
    %v1641 = vadd.f32 %v1633, %v1639
    %v1642 = vtanh.pop %v1641
    %v1643 = vmul.f32 %v1364, %v1642
    %v1644 = vmul.f32 %v1370, %v1346
    %v1645 = vadd.f32 %v1643, %v1644
    %1646 = vmatprep.subr.mxu0 0.0
    %1647 = vmatpush1.msra.mxu0 %v1645
    %1648 = vmatprep.subr.mxu0 0.0
    %1649 = vmatpush1.msra.mxu0 0.0
    %1650 = vmatprep.subr.mxu0 0.0
    %1651 = vmatpush1.msra.mxu0 0.0
    %1652 = vmatprep.subr.mxu0 0.0
    %1653 = vmatpush1.msra.mxu0 0.0
    %1654 = vmatprep.subr.mxu0 0.0
    %1655 = vmatpush1.msra.mxu0 0.0
    %1656 = vmatprep.subr.mxu0 0.0
    %1657 = vmatpush1.msra.mxu0 0.0
    %1658 = vmatprep.subr.mxu0 0.0
    %1659 = vmatpush1.msra.mxu0 0.0
    %1660 = vmatprep.subr.mxu0 0.0
    %1661 = vmatpush1.msra.mxu0 0.0
    %1662 = vmatprep.subr.mxu0 0.0
    %1663 = vmatpush1.msra.mxu0 0.0
    %1664 = vmatprep.subr.mxu0 0.0
    %1665 = vmatpush1.msra.mxu0 0.0
    %1666 = vmatprep.subr.mxu0 0.0
    %1667 = vmatpush1.msra.mxu0 0.0
    %1668 = vmatprep.subr.mxu0 0.0
    %1669 = vmatpush1.msra.mxu0 0.0
    %1670 = vmatprep.subr.mxu0 0.0
    %1671 = vmatpush1.msra.mxu0 0.0
    %1672 = vmatprep.subr.mxu0 0.0
    %1673 = vmatpush1.msra.mxu0 0.0
    %1674 = vmatprep.subr.mxu0 0.0
    %1675 = vmatpush1.msra.mxu0 0.0
    %1676 = vmatprep.subr.mxu0 0.0
    %1677 = vmatpush1.msra.mxu0 0.0
    %1678 = vmatprep.subr.mxu0 0.0
    %1679 = vmatpush1.msra.mxu0 0.0
    %1680 = vmatprep.subr.mxu0 0.0
    %1681 = vmatpush1.msra.mxu0 0.0
    %1682 = vmatprep.subr.mxu0 0.0
    %1683 = vmatpush1.msra.mxu0 0.0
    %1684 = vmatprep.subr.mxu0 0.0
    %1685 = vmatpush1.msra.mxu0 0.0
    %1686 = vmatprep.subr.mxu0 0.0
    %1687 = vmatpush1.msra.mxu0 0.0
    %1688 = vmatprep.subr.mxu0 0.0
    %1689 = vmatpush1.msra.mxu0 0.0
    %1690 = vmatprep.subr.mxu0 0.0
    %1691 = vmatpush1.msra.mxu0 0.0
    %1692 = vmatprep.subr.mxu0 0.0
    %1693 = vmatpush1.msra.mxu0 0.0
    %1694 = vmatprep.subr.mxu0 0.0
    %1695 = vmatpush1.msra.mxu0 0.0
    %1696 = vmatprep.subr.mxu0 0.0
    %1697 = vmatpush1.msra.mxu0 0.0
    %1698 = vmatprep.subr.mxu0 0.0
    %1699 = vmatpush1.msra.mxu0 0.0
    %1700 = vmatprep.subr.mxu0 0.0
    %1701 = vmatpush1.msra.mxu0 0.0
    %1702 = vmatprep.subr.mxu0 0.0
    %1703 = vmatpush1.msra.mxu0 0.0
    %1704 = vmatprep.subr.mxu0 0.0
    %1705 = vmatpush1.msra.mxu0 0.0
    %1706 = vmatprep.subr.mxu0 0.0
    %1707 = vmatpush1.msra.mxu0 0.0
    %1708 = vmatprep.subr.mxu0 0.0
    %1709 = vmatpush1.msra.mxu0 0.0
    %1710 = vmatprep.mubr.f32.mxu0 0.0
    %1711 = vmatmul.mubr.f32.gmra.mrb[0].mxu0 %v360
    %v1712 = vpop.f32.mrb[0].mxu0
    %v1713 = vadd.f32 0.0, %v1712
    %v1714 = vpop.f32.mrb[0].mxu0
    %1715 = vdwg.mxu0
    %v1716 = vmax.f32 %v1713, 0.0
    %s1717 = scalar_lea.vmem [#allocation13], 1920
    %v1718 = vld [vmem:[%s1717] sm:$0xff]
    %v1719 = vld [vmem:[%s1717 + $0x8] sm:$0xff]
    %v1720 = vld [vmem:[%s1717 + $0x10] sm:$0xff]
    %v1721 = vld [vmem:[%s1717 + $0x18] sm:$0xff]
    %v1722 = vld [vmem:[%s1717 + $0x20] sm:$0xff]
    %v1723 = vld [vmem:[%s1717 + $0x28] sm:$0xff]
    %v1724 = vld [vmem:[%s1717 + $0x30] sm:$0xff]
    %v1725 = vld [vmem:[%s1717 + $0x38] sm:$0xff]
    %v1726 = vld [vmem:[%s1717 + $0x40] sm:$0xff]
    %v1727 = vld [vmem:[%s1717 + $0x48] sm:$0xff]
    %v1728 = vld [vmem:[%s1717 + $0x50] sm:$0xff]
    %v1729 = vld [vmem:[%s1717 + $0x58] sm:$0xff]
    %v1730 = vld [vmem:[%s1717 + $0x60] sm:$0xff]
    %v1731 = vld [vmem:[%s1717 + $0x68] sm:$0xff]
    %v1732 = vld [vmem:[%s1717 + $0x70] sm:$0xff]
    %v1733 = vld [vmem:[%s1717 + $0x78] sm:$0xff]
    %v1734 = vld [vmem:[%s1717 + $0x80] sm:$0xff]
    %v1735 = vld [vmem:[%s1717 + $0x88] sm:$0xff]
    %v1736 = vld [vmem:[%s1717 + $0x90] sm:$0xff]
    %v1737 = vld [vmem:[%s1717 + $0x98] sm:$0xff]
    %v1738 = vld [vmem:[%s1717 + $0xa0] sm:$0xff]
    %v1739 = vld [vmem:[%s1717 + $0xa8] sm:$0xff]
    %v1740 = vld [vmem:[%s1717 + $0xb0] sm:$0xff]
    %v1741 = vld [vmem:[%s1717 + $0xb8] sm:$0xff]
    %v1742 = vld [vmem:[%s1717 + $0xc0] sm:$0xff]
    %v1743 = vld [vmem:[%s1717 + $0xc8] sm:$0xff]
    %v1744 = vld [vmem:[%s1717 + $0xd0] sm:$0xff]
    %v1745 = vld [vmem:[%s1717 + $0xd8] sm:$0xff]
    %v1746 = vld [vmem:[%s1717 + $0xe0] sm:$0xff]
    %v1747 = vld [vmem:[%s1717 + $0xe8] sm:$0xff]
    %v1748 = vld [vmem:[%s1717 + $0xf0] sm:$0xff]
    %v1749 = vld [vmem:[%s1717 + $0xf8] sm:$0xff]
    %v1750 = vld [vmem:[%s1717 + $0x100] sm:$0xff]
    %v1751 = vld [vmem:[%s1717 + $0x108] sm:$0xff]
    %v1752 = vld [vmem:[%s1717 + $0x110] sm:$0xff]
    %v1753 = vld [vmem:[%s1717 + $0x118] sm:$0xff]
    %v1754 = vld [vmem:[%s1717 + $0x120] sm:$0xff]
    %v1755 = vld [vmem:[%s1717 + $0x128] sm:$0xff]
    %v1756 = vld [vmem:[%s1717 + $0x130] sm:$0xff]
    %v1757 = vld [vmem:[%s1717 + $0x138] sm:$0xff]
    %v1758 = vld [vmem:[%s1717 + $0x140] sm:$0xff]
    %v1759 = vld [vmem:[%s1717 + $0x148] sm:$0xff]
    %v1760 = vld [vmem:[%s1717 + $0x150] sm:$0xff]
    %v1761 = vld [vmem:[%s1717 + $0x158] sm:$0xff]
    %v1762 = vld [vmem:[%s1717 + $0x160] sm:$0xff]
    %v1763 = vld [vmem:[%s1717 + $0x168] sm:$0xff]
    %v1764 = vld [vmem:[%s1717 + $0x170] sm:$0xff]
    %v1765 = vld [vmem:[%s1717 + $0x178] sm:$0xff]
    %v1766 = vld [vmem:[%s1717 + $0x180] sm:$0xff]
    %v1767 = vld [vmem:[%s1717 + $0x188] sm:$0xff]
    %v1768 = vld [vmem:[%s1717 + $0x190] sm:$0xff]
    %v1769 = vld [vmem:[%s1717 + $0x198] sm:$0xff]
    %v1770 = vld [vmem:[%s1717 + $0x1a0] sm:$0xff]
    %v1771 = vld [vmem:[%s1717 + $0x1a8] sm:$0xff]
    %v1772 = vld [vmem:[%s1717 + $0x1b0] sm:$0xff]
    %v1773 = vld [vmem:[%s1717 + $0x1b8] sm:$0xff]
    %v1774 = vld [vmem:[%s1717 + $0x1c0] sm:$0xff]
    %v1775 = vld [vmem:[%s1717 + $0x1c8] sm:$0xff]
    %v1776 = vld [vmem:[%s1717 + $0x1d0] sm:$0xff]
    %v1777 = vld [vmem:[%s1717 + $0x1d8] sm:$0xff]
    %v1778 = vld [vmem:[%s1717 + $0x1e0] sm:$0xff]
    %v1779 = vld [vmem:[%s1717 + $0x1e8] sm:$0xff]
    %v1780 = vld [vmem:[%s1717 + $0x1f0] sm:$0xff]
    %v1781 = vld [vmem:[%s1717 + $0x1f8] sm:$0xff]
    %v1782 = vld [vmem:[%s1717 + $0x200] sm:$0xff]
    %v1783 = vld [vmem:[%s1717 + $0x208] sm:$0xff]
    %v1784 = vld [vmem:[%s1717 + $0x210] sm:$0xff]
    %v1785 = vld [vmem:[%s1717 + $0x218] sm:$0xff]
    %v1786 = vld [vmem:[%s1717 + $0x220] sm:$0xff]
    %v1787 = vld [vmem:[%s1717 + $0x228] sm:$0xff]
    %v1788 = vld [vmem:[%s1717 + $0x230] sm:$0xff]
    %v1789 = vld [vmem:[%s1717 + $0x238] sm:$0xff]
    %v1790 = vld [vmem:[%s1717 + $0x240] sm:$0xff]
    %v1791 = vld [vmem:[%s1717 + $0x248] sm:$0xff]
    %v1792 = vld [vmem:[%s1717 + $0x250] sm:$0xff]
    %v1793 = vld [vmem:[%s1717 + $0x258] sm:$0xff]
    %v1794 = vld [vmem:[%s1717 + $0x260] sm:$0xff]
    %v1795 = vld [vmem:[%s1717 + $0x268] sm:$0xff]
    %v1796 = vld [vmem:[%s1717 + $0x270] sm:$0xff]
    %v1797 = vld [vmem:[%s1717 + $0x278] sm:$0xff]
    %s1798 = scalar_lea.vmem [#allocation13], 2560
    %v1799 = vld [vmem:[%s1798] sm:$0xff]
    %v1800 = vld [vmem:[%s1798 + $0x8] sm:$0xff]
    %v1801 = vld [vmem:[%s1798 + $0x10] sm:$0xff]
    %v1802 = vld [vmem:[%s1798 + $0x18] sm:$0xff]
    %v1803 = vld [vmem:[%s1798 + $0x20] sm:$0xff]
    %v1804 = vld [vmem:[%s1798 + $0x28] sm:$0xff]
    %v1805 = vld [vmem:[%s1798 + $0x30] sm:$0xff]
    %v1806 = vld [vmem:[%s1798 + $0x38] sm:$0xff]
    %v1807 = vld [vmem:[%s1798 + $0x40] sm:$0xff]
    %v1808 = vld [vmem:[%s1798 + $0x48] sm:$0xff]
    %v1809 = vld [vmem:[%s1798 + $0x50] sm:$0xff]
    %v1810 = vld [vmem:[%s1798 + $0x58] sm:$0xff]
    %v1811 = vld [vmem:[%s1798 + $0x60] sm:$0xff]
    %v1812 = vld [vmem:[%s1798 + $0x68] sm:$0xff]
    %v1813 = vld [vmem:[%s1798 + $0x70] sm:$0xff]
    %v1814 = vld [vmem:[%s1798 + $0x78] sm:$0xff]
    %v1815 = vld [vmem:[%s1798 + $0x80] sm:$0xff]
    %v1816 = vld [vmem:[%s1798 + $0x88] sm:$0xff]
    %v1817 = vld [vmem:[%s1798 + $0x90] sm:$0xff]
    %v1818 = vld [vmem:[%s1798 + $0x98] sm:$0xff]
    %v1819 = vld [vmem:[%s1798 + $0xa0] sm:$0xff]
    %v1820 = vld [vmem:[%s1798 + $0xa8] sm:$0xff]
    %v1821 = vld [vmem:[%s1798 + $0xb0] sm:$0xff]
    %v1822 = vld [vmem:[%s1798 + $0xb8] sm:$0xff]
    %v1823 = vld [vmem:[%s1798 + $0xc0] sm:$0xff]
    %v1824 = vld [vmem:[%s1798 + $0xc8] sm:$0xff]
    %v1825 = vld [vmem:[%s1798 + $0xd0] sm:$0xff]
    %v1826 = vld [vmem:[%s1798 + $0xd8] sm:$0xff]
    %v1827 = vld [vmem:[%s1798 + $0xe0] sm:$0xff]
    %v1828 = vld [vmem:[%s1798 + $0xe8] sm:$0xff]
    %v1829 = vld [vmem:[%s1798 + $0xf0] sm:$0xff]
    %v1830 = vld [vmem:[%s1798 + $0xf8] sm:$0xff]
    %v1831 = vld [vmem:[%s1798 + $0x100] sm:$0xff]
    %v1832 = vld [vmem:[%s1798 + $0x108] sm:$0xff]
    %v1833 = vld [vmem:[%s1798 + $0x110] sm:$0xff]
    %v1834 = vld [vmem:[%s1798 + $0x118] sm:$0xff]
    %v1835 = vld [vmem:[%s1798 + $0x120] sm:$0xff]
    %v1836 = vld [vmem:[%s1798 + $0x128] sm:$0xff]
    %v1837 = vld [vmem:[%s1798 + $0x130] sm:$0xff]
    %v1838 = vld [vmem:[%s1798 + $0x138] sm:$0xff]
    %v1839 = vld [vmem:[%s1798 + $0x140] sm:$0xff]
    %v1840 = vld [vmem:[%s1798 + $0x148] sm:$0xff]
    %v1841 = vld [vmem:[%s1798 + $0x150] sm:$0xff]
    %v1842 = vld [vmem:[%s1798 + $0x158] sm:$0xff]
    %v1843 = vld [vmem:[%s1798 + $0x160] sm:$0xff]
    %v1844 = vld [vmem:[%s1798 + $0x168] sm:$0xff]
    %v1845 = vld [vmem:[%s1798 + $0x170] sm:$0xff]
    %v1846 = vld [vmem:[%s1798 + $0x178] sm:$0xff]
    %v1847 = vld [vmem:[%s1798 + $0x180] sm:$0xff]
    %v1848 = vld [vmem:[%s1798 + $0x188] sm:$0xff]
    %v1849 = vld [vmem:[%s1798 + $0x190] sm:$0xff]
    %v1850 = vld [vmem:[%s1798 + $0x198] sm:$0xff]
    %v1851 = vld [vmem:[%s1798 + $0x1a0] sm:$0xff]
    %v1852 = vld [vmem:[%s1798 + $0x1a8] sm:$0xff]
    %v1853 = vld [vmem:[%s1798 + $0x1b0] sm:$0xff]
    %v1854 = vld [vmem:[%s1798 + $0x1b8] sm:$0xff]
    %v1855 = vld [vmem:[%s1798 + $0x1c0] sm:$0xff]
    %v1856 = vld [vmem:[%s1798 + $0x1c8] sm:$0xff]
    %v1857 = vld [vmem:[%s1798 + $0x1d0] sm:$0xff]
    %v1858 = vld [vmem:[%s1798 + $0x1d8] sm:$0xff]
    %v1859 = vld [vmem:[%s1798 + $0x1e0] sm:$0xff]
    %v1860 = vld [vmem:[%s1798 + $0x1e8] sm:$0xff]
    %v1861 = vld [vmem:[%s1798 + $0x1f0] sm:$0xff]
    %v1862 = vld [vmem:[%s1798 + $0x1f8] sm:$0xff]
    %v1863 = vld [vmem:[%s1798 + $0x200] sm:$0xff]
    %v1864 = vld [vmem:[%s1798 + $0x208] sm:$0xff]
    %v1865 = vld [vmem:[%s1798 + $0x210] sm:$0xff]
    %v1866 = vld [vmem:[%s1798 + $0x218] sm:$0xff]
    %v1867 = vld [vmem:[%s1798 + $0x220] sm:$0xff]
    %v1868 = vld [vmem:[%s1798 + $0x228] sm:$0xff]
    %v1869 = vld [vmem:[%s1798 + $0x230] sm:$0xff]
    %v1870 = vld [vmem:[%s1798 + $0x238] sm:$0xff]
    %v1871 = vld [vmem:[%s1798 + $0x240] sm:$0xff]
    %v1872 = vld [vmem:[%s1798 + $0x248] sm:$0xff]
    %v1873 = vld [vmem:[%s1798 + $0x250] sm:$0xff]
    %v1874 = vld [vmem:[%s1798 + $0x258] sm:$0xff]
    %v1875 = vld [vmem:[%s1798 + $0x260] sm:$0xff]
    %v1876 = vld [vmem:[%s1798 + $0x268] sm:$0xff]
    %v1877 = vld [vmem:[%s1798 + $0x270] sm:$0xff]
    %v1878 = vld [vmem:[%s1798 + $0x278] sm:$0xff]
    %1879 = vmatprep.subr.mxu0 %v1800
    %1880 = vmatpush1.msra.mxu0 %v1799
    %1881 = vmatprep.subr.mxu0 %v1805
    %1882 = vmatpush1.msra.mxu0 %v1804
    %1883 = vmatprep.subr.mxu0 %v1810
    %1884 = vmatpush1.msra.mxu0 %v1809
    %1885 = vmatprep.subr.mxu0 %v1815
    %1886 = vmatpush1.msra.mxu0 %v1814
    %1887 = vmatprep.subr.mxu0 %v1820
    %1888 = vmatpush1.msra.mxu0 %v1819
    %1889 = vmatprep.subr.mxu0 %v1825
    %1890 = vmatpush1.msra.mxu0 %v1824
    %1891 = vmatprep.subr.mxu0 %v1830
    %1892 = vmatpush1.msra.mxu0 %v1829
    %1893 = vmatprep.subr.mxu0 %v1835
    %1894 = vmatpush1.msra.mxu0 %v1834
    %1895 = vmatprep.subr.mxu0 %v1840
    %1896 = vmatpush1.msra.mxu0 %v1839
    %1897 = vmatprep.subr.mxu0 %v1845
    %1898 = vmatpush1.msra.mxu0 %v1844
    %1899 = vmatprep.subr.mxu0 %v1850
    %1900 = vmatpush1.msra.mxu0 %v1849
    %1901 = vmatprep.subr.mxu0 %v1855
    %1902 = vmatpush1.msra.mxu0 %v1854
    %1903 = vmatprep.subr.mxu0 %v1860
    %1904 = vmatpush1.msra.mxu0 %v1859
    %1905 = vmatprep.subr.mxu0 %v1865
    %1906 = vmatpush1.msra.mxu0 %v1864
    %1907 = vmatprep.subr.mxu0 %v1870
    %1908 = vmatpush1.msra.mxu0 %v1869
    %1909 = vmatprep.subr.mxu0 %v1875
    %1910 = vmatpush1.msra.mxu0 %v1874
    %1911 = vmatprep.subr.mxu0 0.0
    %1912 = vmatpush1.msra.mxu0 0.0
    %1913 = vmatprep.subr.mxu0 0.0
    %1914 = vmatpush1.msra.mxu0 0.0
    %1915 = vmatprep.subr.mxu0 0.0
    %1916 = vmatpush1.msra.mxu0 0.0
    %1917 = vmatprep.subr.mxu0 0.0
    %1918 = vmatpush1.msra.mxu0 0.0
    %1919 = vmatprep.subr.mxu0 0.0
    %1920 = vmatpush1.msra.mxu0 0.0
    %1921 = vmatprep.subr.mxu0 0.0
    %1922 = vmatpush1.msra.mxu0 0.0
    %1923 = vmatprep.subr.mxu0 0.0
    %1924 = vmatpush1.msra.mxu0 0.0
    %1925 = vmatprep.subr.mxu0 0.0
    %1926 = vmatpush1.msra.mxu0 0.0
    %1927 = vmatprep.subr.mxu0 0.0
    %1928 = vmatpush1.msra.mxu0 0.0
    %1929 = vmatprep.subr.mxu0 0.0
    %1930 = vmatpush1.msra.mxu0 0.0
    %1931 = vmatprep.subr.mxu0 0.0
    %1932 = vmatpush1.msra.mxu0 0.0
    %1933 = vmatprep.subr.mxu0 0.0
    %1934 = vmatpush1.msra.mxu0 0.0
    %1935 = vmatprep.subr.mxu0 0.0
    %1936 = vmatpush1.msra.mxu0 0.0
    %1937 = vmatprep.subr.mxu0 0.0
    %1938 = vmatpush1.msra.mxu0 0.0
    %1939 = vmatprep.subr.mxu0 0.0
    %1940 = vmatpush1.msra.mxu0 0.0
    %1941 = vmatprep.subr.mxu0 0.0
    %1942 = vmatpush1.msra.mxu0 0.0
    %1943 = vmatprep.mubr.f32.mxu0 0.0
    %1944 = vmatmul.mubr.f32.gmra.mrb[0].mxu0 %v1716
    %v1945 = vpop.f32.mrb[0].mxu0
    %v1946 = vadd.f32 0.0, %v1945
    %v1947 = vpop.f32.mrb[0].mxu0
    %v1948 = vadd.f32 0.0, %v1947
    %1949 = vdwg.mxu0
    %1950 = vmatprep.subr.mxu0 %v1802
    %1951 = vmatpush1.msra.mxu0 %v1801
    %1952 = vmatprep.subr.mxu0 %v1807
    %1953 = vmatpush1.msra.mxu0 %v1806
    %1954 = vmatprep.subr.mxu0 %v1812
    %1955 = vmatpush1.msra.mxu0 %v1811
    %1956 = vmatprep.subr.mxu0 %v1817
    %1957 = vmatpush1.msra.mxu0 %v1816
    %1958 = vmatprep.subr.mxu0 %v1822
    %1959 = vmatpush1.msra.mxu0 %v1821
    %1960 = vmatprep.subr.mxu0 %v1827
    %1961 = vmatpush1.msra.mxu0 %v1826
    %1962 = vmatprep.subr.mxu0 %v1832
    %1963 = vmatpush1.msra.mxu0 %v1831
    %1964 = vmatprep.subr.mxu0 %v1837
    %1965 = vmatpush1.msra.mxu0 %v1836
    %1966 = vmatprep.subr.mxu0 %v1842
    %1967 = vmatpush1.msra.mxu0 %v1841
    %1968 = vmatprep.subr.mxu0 %v1847
    %1969 = vmatpush1.msra.mxu0 %v1846
    %1970 = vmatprep.subr.mxu0 %v1852
    %1971 = vmatpush1.msra.mxu0 %v1851
    %1972 = vmatprep.subr.mxu0 %v1857
    %1973 = vmatpush1.msra.mxu0 %v1856
    %1974 = vmatprep.subr.mxu0 %v1862
    %1975 = vmatpush1.msra.mxu0 %v1861
    %1976 = vmatprep.subr.mxu0 %v1867
    %1977 = vmatpush1.msra.mxu0 %v1866
    %1978 = vmatprep.subr.mxu0 %v1872
    %1979 = vmatpush1.msra.mxu0 %v1871
    %1980 = vmatprep.subr.mxu0 %v1877
    %1981 = vmatpush1.msra.mxu0 %v1876
    %1982 = vmatprep.subr.mxu0 0.0
    %1983 = vmatpush1.msra.mxu0 0.0
    %1984 = vmatprep.subr.mxu0 0.0
    %1985 = vmatpush1.msra.mxu0 0.0
    %1986 = vmatprep.subr.mxu0 0.0
    %1987 = vmatpush1.msra.mxu0 0.0
    %1988 = vmatprep.subr.mxu0 0.0
    %1989 = vmatpush1.msra.mxu0 0.0
    %1990 = vmatprep.subr.mxu0 0.0
    %1991 = vmatpush1.msra.mxu0 0.0
    %1992 = vmatprep.subr.mxu0 0.0
    %1993 = vmatpush1.msra.mxu0 0.0
    %1994 = vmatprep.subr.mxu0 0.0
    %1995 = vmatpush1.msra.mxu0 0.0
    %1996 = vmatprep.subr.mxu0 0.0
    %1997 = vmatpush1.msra.mxu0 0.0
    %1998 = vmatprep.subr.mxu0 0.0
    %1999 = vmatpush1.msra.mxu0 0.0
    %2000 = vmatprep.subr.mxu0 0.0
    %2001 = vmatpush1.msra.mxu0 0.0
    %2002 = vmatprep.subr.mxu0 0.0
    %2003 = vmatpush1.msra.mxu0 0.0
    %2004 = vmatprep.subr.mxu0 0.0
    %2005 = vmatpush1.msra.mxu0 0.0
    %2006 = vmatprep.subr.mxu0 0.0
    %2007 = vmatpush1.msra.mxu0 0.0
    %2008 = vmatprep.subr.mxu0 0.0
    %2009 = vmatpush1.msra.mxu0 0.0
    %2010 = vmatprep.subr.mxu0 0.0
    %2011 = vmatpush1.msra.mxu0 0.0
    %2012 = vmatprep.subr.mxu0 0.0
    %2013 = vmatpush1.msra.mxu0 0.0
    %2014 = vmatprep.mubr.f32.mxu0 0.0
    %2015 = vmatmul.mubr.f32.gmra.mrb[0].mxu0 %v1716
    %v2016 = vpop.f32.mrb[0].mxu0
    %v2017 = vadd.f32 0.0, %v2016
    %v2018 = vpop.f32.mrb[0].mxu0
    %v2019 = vadd.f32 0.0, %v2018
    %2020 = vdwg.mxu0
    %2021 = vmatprep.subr.mxu0 0.0
    %2022 = vmatpush1.msra.mxu0 %v1803
    %2023 = vmatprep.subr.mxu0 0.0
    %2024 = vmatpush1.msra.mxu0 %v1808
    %2025 = vmatprep.subr.mxu0 0.0
    %2026 = vmatpush1.msra.mxu0 %v1813
    %2027 = vmatprep.subr.mxu0 0.0
    %2028 = vmatpush1.msra.mxu0 %v1818
    %2029 = vmatprep.subr.mxu0 0.0
    %2030 = vmatpush1.msra.mxu0 %v1823
    %2031 = vmatprep.subr.mxu0 0.0
    %2032 = vmatpush1.msra.mxu0 %v1828
    %2033 = vmatprep.subr.mxu0 0.0
    %2034 = vmatpush1.msra.mxu0 %v1833
    %2035 = vmatprep.subr.mxu0 0.0
    %2036 = vmatpush1.msra.mxu0 %v1838
    %2037 = vmatprep.subr.mxu0 0.0
    %2038 = vmatpush1.msra.mxu0 %v1843
    %2039 = vmatprep.subr.mxu0 0.0
    %2040 = vmatpush1.msra.mxu0 %v1848
    %2041 = vmatprep.subr.mxu0 0.0
    %2042 = vmatpush1.msra.mxu0 %v1853
    %2043 = vmatprep.subr.mxu0 0.0
    %2044 = vmatpush1.msra.mxu0 %v1858
    %2045 = vmatprep.subr.mxu0 0.0
    %2046 = vmatpush1.msra.mxu0 %v1863
    %2047 = vmatprep.subr.mxu0 0.0
    %2048 = vmatpush1.msra.mxu0 %v1868
    %2049 = vmatprep.subr.mxu0 0.0
    %2050 = vmatpush1.msra.mxu0 %v1873
    %2051 = vmatprep.subr.mxu0 0.0
    %2052 = vmatpush1.msra.mxu0 %v1878
    %2053 = vmatprep.subr.mxu0 0.0
    %2054 = vmatpush1.msra.mxu0 0.0
    %2055 = vmatprep.subr.mxu0 0.0
    %2056 = vmatpush1.msra.mxu0 0.0
    %2057 = vmatprep.subr.mxu0 0.0
    %2058 = vmatpush1.msra.mxu0 0.0
    %2059 = vmatprep.subr.mxu0 0.0
    %2060 = vmatpush1.msra.mxu0 0.0
    %2061 = vmatprep.subr.mxu0 0.0
    %2062 = vmatpush1.msra.mxu0 0.0
    %2063 = vmatprep.subr.mxu0 0.0
    %2064 = vmatpush1.msra.mxu0 0.0
    %2065 = vmatprep.subr.mxu0 0.0
    %2066 = vmatpush1.msra.mxu0 0.0
    %2067 = vmatprep.subr.mxu0 0.0
    %2068 = vmatpush1.msra.mxu0 0.0
    %2069 = vmatprep.subr.mxu0 0.0
    %2070 = vmatpush1.msra.mxu0 0.0
    %2071 = vmatprep.subr.mxu0 0.0
    %2072 = vmatpush1.msra.mxu0 0.0
    %2073 = vmatprep.subr.mxu0 0.0
    %2074 = vmatpush1.msra.mxu0 0.0
    %2075 = vmatprep.subr.mxu0 0.0
    %2076 = vmatpush1.msra.mxu0 0.0
    %2077 = vmatprep.subr.mxu0 0.0
    %2078 = vmatpush1.msra.mxu0 0.0
    %2079 = vmatprep.subr.mxu0 0.0
    %2080 = vmatpush1.msra.mxu0 0.0
    %2081 = vmatprep.subr.mxu0 0.0
    %2082 = vmatpush1.msra.mxu0 0.0
    %2083 = vmatprep.subr.mxu0 0.0
    %2084 = vmatpush1.msra.mxu0 0.0
    %2085 = vmatprep.mubr.f32.mxu0 0.0
    %2086 = vmatmul.mubr.f32.gmra.mrb[0].mxu0 %v1716
    %v2087 = vpop.f32.mrb[0].mxu0
    %v2088 = vadd.f32 0.0, %v2087
    %v2089 = vpop.f32.mrb[0].mxu0
    %2090 = vdwg.mxu0
    %2091 = vmatprep.subr.mxu0 %v1719
    %2092 = vmatpush1.msra.mxu0 %v1718
    %2093 = vmatprep.subr.mxu0 %v1724
    %2094 = vmatpush1.msra.mxu0 %v1723
    %2095 = vmatprep.subr.mxu0 %v1729
    %2096 = vmatpush1.msra.mxu0 %v1728
    %2097 = vmatprep.subr.mxu0 %v1734
    %2098 = vmatpush1.msra.mxu0 %v1733
    %2099 = vmatprep.subr.mxu0 %v1739
    %2100 = vmatpush1.msra.mxu0 %v1738
    %2101 = vmatprep.subr.mxu0 %v1744
    %2102 = vmatpush1.msra.mxu0 %v1743
    %2103 = vmatprep.subr.mxu0 %v1749
    %2104 = vmatpush1.msra.mxu0 %v1748
    %2105 = vmatprep.subr.mxu0 %v1754
    %2106 = vmatpush1.msra.mxu0 %v1753
    %2107 = vmatprep.subr.mxu0 %v1759
    %2108 = vmatpush1.msra.mxu0 %v1758
    %2109 = vmatprep.subr.mxu0 %v1764
    %2110 = vmatpush1.msra.mxu0 %v1763
    %2111 = vmatprep.subr.mxu0 %v1769
    %2112 = vmatpush1.msra.mxu0 %v1768
    %2113 = vmatprep.subr.mxu0 %v1774
    %2114 = vmatpush1.msra.mxu0 %v1773
    %2115 = vmatprep.subr.mxu0 %v1779
    %2116 = vmatpush1.msra.mxu0 %v1778
    %2117 = vmatprep.subr.mxu0 %v1784
    %2118 = vmatpush1.msra.mxu0 %v1783
    %2119 = vmatprep.subr.mxu0 %v1789
    %2120 = vmatpush1.msra.mxu0 %v1788
    %2121 = vmatprep.subr.mxu0 %v1794
    %2122 = vmatpush1.msra.mxu0 %v1793
    %2123 = vmatprep.subr.mxu0 0.0
    %2124 = vmatpush1.msra.mxu0 0.0
    %2125 = vmatprep.subr.mxu0 0.0
    %2126 = vmatpush1.msra.mxu0 0.0
    %2127 = vmatprep.subr.mxu0 0.0
    %2128 = vmatpush1.msra.mxu0 0.0
    %2129 = vmatprep.subr.mxu0 0.0
    %2130 = vmatpush1.msra.mxu0 0.0
    %2131 = vmatprep.subr.mxu0 0.0
    %2132 = vmatpush1.msra.mxu0 0.0
    %2133 = vmatprep.subr.mxu0 0.0
    %2134 = vmatpush1.msra.mxu0 0.0
    %2135 = vmatprep.subr.mxu0 0.0
    %2136 = vmatpush1.msra.mxu0 0.0
    %2137 = vmatprep.subr.mxu0 0.0
    %2138 = vmatpush1.msra.mxu0 0.0
    %2139 = vmatprep.subr.mxu0 0.0
    %2140 = vmatpush1.msra.mxu0 0.0
    %2141 = vmatprep.subr.mxu0 0.0
    %2142 = vmatpush1.msra.mxu0 0.0
    %2143 = vmatprep.subr.mxu0 0.0
    %2144 = vmatpush1.msra.mxu0 0.0
    %2145 = vmatprep.subr.mxu0 0.0
    %2146 = vmatpush1.msra.mxu0 0.0
    %2147 = vmatprep.subr.mxu0 0.0
    %2148 = vmatpush1.msra.mxu0 0.0
    %2149 = vmatprep.subr.mxu0 0.0
    %2150 = vmatpush1.msra.mxu0 0.0
    %2151 = vmatprep.subr.mxu0 0.0
    %2152 = vmatpush1.msra.mxu0 0.0
    %2153 = vmatprep.subr.mxu0 0.0
    %2154 = vmatpush1.msra.mxu0 0.0
    %2155 = vmatprep.mubr.f32.mxu0 0.0
    %2156 = vmatmul.mubr.f32.gmra.mrb[0].mxu0 %v264
    %v2157 = vpop.f32.mrb[0].mxu0
    %v2158 = vadd.f32 %v1946, %v2157
    %v2159 = vpop.f32.mrb[0].mxu0
    %v2160 = vadd.f32 %v1948, %v2159
    %2161 = vdwg.mxu0
    %2162 = vmatprep.subr.mxu0 %v1721
    %2163 = vmatpush1.msra.mxu0 %v1720
    %2164 = vmatprep.subr.mxu0 %v1726
    %2165 = vmatpush1.msra.mxu0 %v1725
    %2166 = vmatprep.subr.mxu0 %v1731
    %2167 = vmatpush1.msra.mxu0 %v1730
    %2168 = vmatprep.subr.mxu0 %v1736
    %2169 = vmatpush1.msra.mxu0 %v1735
    %2170 = vmatprep.subr.mxu0 %v1741
    %2171 = vmatpush1.msra.mxu0 %v1740
    %2172 = vmatprep.subr.mxu0 %v1746
    %2173 = vmatpush1.msra.mxu0 %v1745
    %2174 = vmatprep.subr.mxu0 %v1751
    %2175 = vmatpush1.msra.mxu0 %v1750
    %2176 = vmatprep.subr.mxu0 %v1756
    %2177 = vmatpush1.msra.mxu0 %v1755
    %2178 = vmatprep.subr.mxu0 %v1761
    %2179 = vmatpush1.msra.mxu0 %v1760
    %2180 = vmatprep.subr.mxu0 %v1766
    %2181 = vmatpush1.msra.mxu0 %v1765
    %2182 = vmatprep.subr.mxu0 %v1771
    %2183 = vmatpush1.msra.mxu0 %v1770
    %2184 = vmatprep.subr.mxu0 %v1776
    %2185 = vmatpush1.msra.mxu0 %v1775
    %2186 = vmatprep.subr.mxu0 %v1781
    %2187 = vmatpush1.msra.mxu0 %v1780
    %2188 = vmatprep.subr.mxu0 %v1786
    %2189 = vmatpush1.msra.mxu0 %v1785
    %2190 = vmatprep.subr.mxu0 %v1791
    %2191 = vmatpush1.msra.mxu0 %v1790
    %2192 = vmatprep.subr.mxu0 %v1796
    %2193 = vmatpush1.msra.mxu0 %v1795
    %2194 = vmatprep.subr.mxu0 0.0
    %2195 = vmatpush1.msra.mxu0 0.0
    %2196 = vmatprep.subr.mxu0 0.0
    %2197 = vmatpush1.msra.mxu0 0.0
    %2198 = vmatprep.subr.mxu0 0.0
    %2199 = vmatpush1.msra.mxu0 0.0
    %2200 = vmatprep.subr.mxu0 0.0
    %2201 = vmatpush1.msra.mxu0 0.0
    %2202 = vmatprep.subr.mxu0 0.0
    %2203 = vmatpush1.msra.mxu0 0.0
    %2204 = vmatprep.subr.mxu0 0.0
    %2205 = vmatpush1.msra.mxu0 0.0
    %2206 = vmatprep.subr.mxu0 0.0
    %2207 = vmatpush1.msra.mxu0 0.0
    %2208 = vmatprep.subr.mxu0 0.0
    %2209 = vmatpush1.msra.mxu0 0.0
    %2210 = vmatprep.subr.mxu0 0.0
    %2211 = vmatpush1.msra.mxu0 0.0
    %2212 = vmatprep.subr.mxu0 0.0
    %2213 = vmatpush1.msra.mxu0 0.0
    %2214 = vmatprep.subr.mxu0 0.0
    %2215 = vmatpush1.msra.mxu0 0.0
    %2216 = vmatprep.subr.mxu0 0.0
    %2217 = vmatpush1.msra.mxu0 0.0
    %2218 = vmatprep.subr.mxu0 0.0
    %2219 = vmatpush1.msra.mxu0 0.0
    %2220 = vmatprep.subr.mxu0 0.0
    %2221 = vmatpush1.msra.mxu0 0.0
    %2222 = vmatprep.subr.mxu0 0.0
    %2223 = vmatpush1.msra.mxu0 0.0
    %2224 = vmatprep.subr.mxu0 0.0
    %2225 = vmatpush1.msra.mxu0 0.0
    %2226 = vmatprep.mubr.f32.mxu0 0.0
    %2227 = vmatmul.mubr.f32.gmra.mrb[0].mxu0 %v264
    %v2228 = vpop.f32.mrb[0].mxu0
    %v2229 = vadd.f32 %v2017, %v2228
    %v2230 = vpop.f32.mrb[0].mxu0
    %v2231 = vadd.f32 %v2019, %v2230
    %2232 = vdwg.mxu0
    %2233 = vmatprep.subr.mxu0 0.0
    %2234 = vmatpush1.msra.mxu0 %v1722
    %2235 = vmatprep.subr.mxu0 0.0
    %2236 = vmatpush1.msra.mxu0 %v1727
    %2237 = vmatprep.subr.mxu0 0.0
    %2238 = vmatpush1.msra.mxu0 %v1732
    %2239 = vmatprep.subr.mxu0 0.0
    %2240 = vmatpush1.msra.mxu0 %v1737
    %2241 = vmatprep.subr.mxu0 0.0
    %2242 = vmatpush1.msra.mxu0 %v1742
    %2243 = vmatprep.subr.mxu0 0.0
    %2244 = vmatpush1.msra.mxu0 %v1747
    %2245 = vmatprep.subr.mxu0 0.0
    %2246 = vmatpush1.msra.mxu0 %v1752
    %2247 = vmatprep.subr.mxu0 0.0
    %2248 = vmatpush1.msra.mxu0 %v1757
    %2249 = vmatprep.subr.mxu0 0.0
    %2250 = vmatpush1.msra.mxu0 %v1762
    %2251 = vmatprep.subr.mxu0 0.0
    %2252 = vmatpush1.msra.mxu0 %v1767
    %2253 = vmatprep.subr.mxu0 0.0
    %2254 = vmatpush1.msra.mxu0 %v1772
    %2255 = vmatprep.subr.mxu0 0.0
    %2256 = vmatpush1.msra.mxu0 %v1777
    %2257 = vmatprep.subr.mxu0 0.0
    %2258 = vmatpush1.msra.mxu0 %v1782
    %2259 = vmatprep.subr.mxu0 0.0
    %2260 = vmatpush1.msra.mxu0 %v1787
    %2261 = vmatprep.subr.mxu0 0.0
    %2262 = vmatpush1.msra.mxu0 %v1792
    %2263 = vmatprep.subr.mxu0 0.0
    %2264 = vmatpush1.msra.mxu0 %v1797
    %2265 = vmatprep.subr.mxu0 0.0
    %2266 = vmatpush1.msra.mxu0 0.0
    %2267 = vmatprep.subr.mxu0 0.0
    %2268 = vmatpush1.msra.mxu0 0.0
    %2269 = vmatprep.subr.mxu0 0.0
    %2270 = vmatpush1.msra.mxu0 0.0
    %2271 = vmatprep.subr.mxu0 0.0
    %2272 = vmatpush1.msra.mxu0 0.0
    %2273 = vmatprep.subr.mxu0 0.0
    %2274 = vmatpush1.msra.mxu0 0.0
    %2275 = vmatprep.subr.mxu0 0.0
    %2276 = vmatpush1.msra.mxu0 0.0
    %2277 = vmatprep.subr.mxu0 0.0
    %2278 = vmatpush1.msra.mxu0 0.0
    %2279 = vmatprep.subr.mxu0 0.0
    %2280 = vmatpush1.msra.mxu0 0.0
    %2281 = vmatprep.subr.mxu0 0.0
    %2282 = vmatpush1.msra.mxu0 0.0
    %2283 = vmatprep.subr.mxu0 0.0
    %2284 = vmatpush1.msra.mxu0 0.0
    %2285 = vmatprep.subr.mxu0 0.0
    %2286 = vmatpush1.msra.mxu0 0.0
    %2287 = vmatprep.subr.mxu0 0.0
    %2288 = vmatpush1.msra.mxu0 0.0
    %2289 = vmatprep.subr.mxu0 0.0
    %2290 = vmatpush1.msra.mxu0 0.0
    %2291 = vmatprep.subr.mxu0 0.0
    %2292 = vmatpush1.msra.mxu0 0.0
    %2293 = vmatprep.subr.mxu0 0.0
    %2294 = vmatpush1.msra.mxu0 0.0
    %2295 = vmatprep.subr.mxu0 0.0
    %2296 = vmatpush1.msra.mxu0 0.0
    %2297 = vmatprep.mubr.f32.mxu0 0.0
    %2298 = vmatmul.mubr.f32.gmra.mrb[0].mxu0 %v264
    %v2299 = vpop.f32.mrb[0].mxu0
    %v2300 = vadd.f32 %v2088, %v2299
    %v2301 = vpop.f32.mrb[0].mxu0
    %2302 = vdwg.mxu0
    %s2303 = scalar_lea.vmem [#allocation13], 3200
    %v2304 = vld [vmem:[%s2303] sm:$0xff]
    %v2305 = vld [vmem:[%s2303 + $0x8] sm:$0xff]
    %v2306 = vld [vmem:[%s2303 + $0x10] sm:$0xff]
    %v2307 = vld [vmem:[%s2303 + $0x18] sm:$0xff]
    %v2308 = vld [vmem:[%s2303 + $0x20] sm:$0xff]
    %v2309 = vld [vmem:[%s2303 + $0x28] sm:$0xff]
    %v2310 = vld [vmem:[%s2303 + $0x30] sm:$0xff]
    %v2311 = vld [vmem:[%s2303 + $0x38] sm:$0xff]
    %v2312 = vld [vmem:[%s2303 + $0x40] sm:$0xff]
    %v2313 = vld [vmem:[%s2303 + $0x48] sm:$0xff]
    %v2314 = vld [vmem:[%s2303 + $0x50] sm:$0xff]
    %v2315 = vld [vmem:[%s2303 + $0x58] sm:$0xff]
    %v2316 = vld [vmem:[%s2303 + $0x60] sm:$0xff]
    %v2317 = vld [vmem:[%s2303 + $0x68] sm:$0xff]
    %v2318 = vld [vmem:[%s2303 + $0x70] sm:$0xff]
    %v2319 = vld [vmem:[%s2303 + $0x78] sm:$0xff]
    %v2320 = vld [vmem:[%s2303 + $0x80] sm:$0xff]
    %v2321 = vld [vmem:[%s2303 + $0x88] sm:$0xff]
    %v2322 = vld [vmem:[%s2303 + $0x90] sm:$0xff]
    %v2323 = vld [vmem:[%s2303 + $0x98] sm:$0xff]
    %v2324 = vld [vmem:[%s2303 + $0xa0] sm:$0xff]
    %v2325 = vld [vmem:[%s2303 + $0xa8] sm:$0xff]
    %v2326 = vld [vmem:[%s2303 + $0xb0] sm:$0xff]
    %v2327 = vld [vmem:[%s2303 + $0xb8] sm:$0xff]
    %v2328 = vld [vmem:[%s2303 + $0xc0] sm:$0xff]
    %v2329 = vld [vmem:[%s2303 + $0xc8] sm:$0xff]
    %v2330 = vld [vmem:[%s2303 + $0xd0] sm:$0xff]
    %v2331 = vld [vmem:[%s2303 + $0xd8] sm:$0xff]
    %v2332 = vld [vmem:[%s2303 + $0xe0] sm:$0xff]
    %v2333 = vld [vmem:[%s2303 + $0xe8] sm:$0xff]
    %v2334 = vld [vmem:[%s2303 + $0xf0] sm:$0xff]
    %v2335 = vld [vmem:[%s2303 + $0xf8] sm:$0xff]
    %v2336 = vld [vmem:[%s2303 + $0x100] sm:$0xff]
    %v2337 = vld [vmem:[%s2303 + $0x108] sm:$0xff]
    %v2338 = vld [vmem:[%s2303 + $0x110] sm:$0xff]
    %v2339 = vld [vmem:[%s2303 + $0x118] sm:$0xff]
    %v2340 = vld [vmem:[%s2303 + $0x120] sm:$0xff]
    %v2341 = vld [vmem:[%s2303 + $0x128] sm:$0xff]
    %v2342 = vld [vmem:[%s2303 + $0x130] sm:$0xff]
    %v2343 = vld [vmem:[%s2303 + $0x138] sm:$0xff]
    %v2344 = vld [vmem:[%s2303 + $0x140] sm:$0xff]
    %v2345 = vld [vmem:[%s2303 + $0x148] sm:$0xff]
    %v2346 = vld [vmem:[%s2303 + $0x150] sm:$0xff]
    %v2347 = vld [vmem:[%s2303 + $0x158] sm:$0xff]
    %v2348 = vld [vmem:[%s2303 + $0x160] sm:$0xff]
    %v2349 = vld [vmem:[%s2303 + $0x168] sm:$0xff]
    %v2350 = vld [vmem:[%s2303 + $0x170] sm:$0xff]
    %v2351 = vld [vmem:[%s2303 + $0x178] sm:$0xff]
    %v2352 = vld [vmem:[%s2303 + $0x180] sm:$0xff]
    %v2353 = vld [vmem:[%s2303 + $0x188] sm:$0xff]
    %v2354 = vld [vmem:[%s2303 + $0x190] sm:$0xff]
    %v2355 = vld [vmem:[%s2303 + $0x198] sm:$0xff]
    %v2356 = vld [vmem:[%s2303 + $0x1a0] sm:$0xff]
    %v2357 = vld [vmem:[%s2303 + $0x1a8] sm:$0xff]
    %v2358 = vld [vmem:[%s2303 + $0x1b0] sm:$0xff]
    %v2359 = vld [vmem:[%s2303 + $0x1b8] sm:$0xff]
    %v2360 = vld [vmem:[%s2303 + $0x1c0] sm:$0xff]
    %v2361 = vld [vmem:[%s2303 + $0x1c8] sm:$0xff]
    %v2362 = vld [vmem:[%s2303 + $0x1d0] sm:$0xff]
    %v2363 = vld [vmem:[%s2303 + $0x1d8] sm:$0xff]
    %v2364 = vld [vmem:[%s2303 + $0x1e0] sm:$0xff]
    %v2365 = vld [vmem:[%s2303 + $0x1e8] sm:$0xff]
    %v2366 = vld [vmem:[%s2303 + $0x1f0] sm:$0xff]
    %v2367 = vld [vmem:[%s2303 + $0x1f8] sm:$0xff]
    %v2368 = vld [vmem:[%s2303 + $0x200] sm:$0xff]
    %v2369 = vld [vmem:[%s2303 + $0x208] sm:$0xff]
    %v2370 = vld [vmem:[%s2303 + $0x210] sm:$0xff]
    %v2371 = vld [vmem:[%s2303 + $0x218] sm:$0xff]
    %v2372 = vld [vmem:[%s2303 + $0x220] sm:$0xff]
    %v2373 = vld [vmem:[%s2303 + $0x228] sm:$0xff]
    %v2374 = vld [vmem:[%s2303 + $0x230] sm:$0xff]
    %v2375 = vld [vmem:[%s2303 + $0x238] sm:$0xff]
    %v2376 = vld [vmem:[%s2303 + $0x240] sm:$0xff]
    %v2377 = vld [vmem:[%s2303 + $0x248] sm:$0xff]
    %v2378 = vld [vmem:[%s2303 + $0x250] sm:$0xff]
    %v2379 = vld [vmem:[%s2303 + $0x258] sm:$0xff]
    %v2380 = vld [vmem:[%s2303 + $0x260] sm:$0xff]
    %v2381 = vld [vmem:[%s2303 + $0x268] sm:$0xff]
    %v2382 = vld [vmem:[%s2303 + $0x270] sm:$0xff]
    %v2383 = vld [vmem:[%s2303 + $0x278] sm:$0xff]
    %2384 = vmatprep.subr.mxu0 %v2305
    %2385 = vmatpush1.msra.mxu0 %v2304
    %2386 = vmatprep.subr.mxu0 %v2310
    %2387 = vmatpush1.msra.mxu0 %v2309
    %2388 = vmatprep.subr.mxu0 %v2315
    %2389 = vmatpush1.msra.mxu0 %v2314
    %2390 = vmatprep.subr.mxu0 %v2320
    %2391 = vmatpush1.msra.mxu0 %v2319
    %2392 = vmatprep.subr.mxu0 %v2325
    %2393 = vmatpush1.msra.mxu0 %v2324
    %2394 = vmatprep.subr.mxu0 %v2330
    %2395 = vmatpush1.msra.mxu0 %v2329
    %2396 = vmatprep.subr.mxu0 %v2335
    %2397 = vmatpush1.msra.mxu0 %v2334
    %2398 = vmatprep.subr.mxu0 %v2340
    %2399 = vmatpush1.msra.mxu0 %v2339
    %2400 = vmatprep.subr.mxu0 %v2345
    %2401 = vmatpush1.msra.mxu0 %v2344
    %2402 = vmatprep.subr.mxu0 %v2350
    %2403 = vmatpush1.msra.mxu0 %v2349
    %2404 = vmatprep.subr.mxu0 %v2355
    %2405 = vmatpush1.msra.mxu0 %v2354
    %2406 = vmatprep.subr.mxu0 %v2360
    %2407 = vmatpush1.msra.mxu0 %v2359
    %2408 = vmatprep.subr.mxu0 %v2365
    %2409 = vmatpush1.msra.mxu0 %v2364
    %2410 = vmatprep.subr.mxu0 %v2370
    %2411 = vmatpush1.msra.mxu0 %v2369
    %2412 = vmatprep.subr.mxu0 %v2375
    %2413 = vmatpush1.msra.mxu0 %v2374
    %2414 = vmatprep.subr.mxu0 %v2380
    %2415 = vmatpush1.msra.mxu0 %v2379
    %2416 = vmatprep.subr.mxu0 0.0
    %2417 = vmatpush1.msra.mxu0 0.0
    %2418 = vmatprep.subr.mxu0 0.0
    %2419 = vmatpush1.msra.mxu0 0.0
    %2420 = vmatprep.subr.mxu0 0.0
    %2421 = vmatpush1.msra.mxu0 0.0
    %2422 = vmatprep.subr.mxu0 0.0
    %2423 = vmatpush1.msra.mxu0 0.0
    %2424 = vmatprep.subr.mxu0 0.0
    %2425 = vmatpush1.msra.mxu0 0.0
    %2426 = vmatprep.subr.mxu0 0.0
    %2427 = vmatpush1.msra.mxu0 0.0
    %2428 = vmatprep.subr.mxu0 0.0
    %2429 = vmatpush1.msra.mxu0 0.0
    %2430 = vmatprep.subr.mxu0 0.0
    %2431 = vmatpush1.msra.mxu0 0.0
    %2432 = vmatprep.subr.mxu0 0.0
    %2433 = vmatpush1.msra.mxu0 0.0
    %2434 = vmatprep.subr.mxu0 0.0
    %2435 = vmatpush1.msra.mxu0 0.0
    %2436 = vmatprep.subr.mxu0 0.0
    %2437 = vmatpush1.msra.mxu0 0.0
    %2438 = vmatprep.subr.mxu0 0.0
    %2439 = vmatpush1.msra.mxu0 0.0
    %2440 = vmatprep.subr.mxu0 0.0
    %2441 = vmatpush1.msra.mxu0 0.0
    %2442 = vmatprep.subr.mxu0 0.0
    %2443 = vmatpush1.msra.mxu0 0.0
    %2444 = vmatprep.subr.mxu0 0.0
    %2445 = vmatpush1.msra.mxu0 0.0
    %2446 = vmatprep.subr.mxu0 0.0
    %2447 = vmatpush1.msra.mxu0 0.0
    %2448 = vmatprep.mubr.f32.mxu0 0.0
    %2449 = vmatmul.mubr.f32.gmra.mrb[0].mxu0 %v1645
    %v2450 = vpop.f32.mrb[0].mxu0
    %v2451 = vadd.f32 0.0, %v2450
    %v2452 = vpop.f32.mrb[0].mxu0
    %v2453 = vadd.f32 0.0, %v2452
    %2454 = vdwg.mxu0
    %2455 = vmatprep.subr.mxu0 %v2307
    %2456 = vmatpush1.msra.mxu0 %v2306
    %2457 = vmatprep.subr.mxu0 %v2312
    %2458 = vmatpush1.msra.mxu0 %v2311
    %2459 = vmatprep.subr.mxu0 %v2317
    %2460 = vmatpush1.msra.mxu0 %v2316
    %2461 = vmatprep.subr.mxu0 %v2322
    %2462 = vmatpush1.msra.mxu0 %v2321
    %2463 = vmatprep.subr.mxu0 %v2327
    %2464 = vmatpush1.msra.mxu0 %v2326
    %2465 = vmatprep.subr.mxu0 %v2332
    %2466 = vmatpush1.msra.mxu0 %v2331
    %2467 = vmatprep.subr.mxu0 %v2337
    %2468 = vmatpush1.msra.mxu0 %v2336
    %2469 = vmatprep.subr.mxu0 %v2342
    %2470 = vmatpush1.msra.mxu0 %v2341
    %2471 = vmatprep.subr.mxu0 %v2347
    %2472 = vmatpush1.msra.mxu0 %v2346
    %2473 = vmatprep.subr.mxu0 %v2352
    %2474 = vmatpush1.msra.mxu0 %v2351
    %2475 = vmatprep.subr.mxu0 %v2357
    %2476 = vmatpush1.msra.mxu0 %v2356
    %2477 = vmatprep.subr.mxu0 %v2362
    %2478 = vmatpush1.msra.mxu0 %v2361
    %2479 = vmatprep.subr.mxu0 %v2367
    %2480 = vmatpush1.msra.mxu0 %v2366
    %2481 = vmatprep.subr.mxu0 %v2372
    %2482 = vmatpush1.msra.mxu0 %v2371
    %2483 = vmatprep.subr.mxu0 %v2377
    %2484 = vmatpush1.msra.mxu0 %v2376
    %2485 = vmatprep.subr.mxu0 %v2382
    %2486 = vmatpush1.msra.mxu0 %v2381
    %2487 = vmatprep.subr.mxu0 0.0
    %2488 = vmatpush1.msra.mxu0 0.0
    %2489 = vmatprep.subr.mxu0 0.0
    %2490 = vmatpush1.msra.mxu0 0.0
    %2491 = vmatprep.subr.mxu0 0.0
    %2492 = vmatpush1.msra.mxu0 0.0
    %2493 = vmatprep.subr.mxu0 0.0
    %2494 = vmatpush1.msra.mxu0 0.0
    %2495 = vmatprep.subr.mxu0 0.0
    %2496 = vmatpush1.msra.mxu0 0.0
    %2497 = vmatprep.subr.mxu0 0.0
    %2498 = vmatpush1.msra.mxu0 0.0
    %2499 = vmatprep.subr.mxu0 0.0
    %2500 = vmatpush1.msra.mxu0 0.0
    %2501 = vmatprep.subr.mxu0 0.0
    %2502 = vmatpush1.msra.mxu0 0.0
    %2503 = vmatprep.subr.mxu0 0.0
    %2504 = vmatpush1.msra.mxu0 0.0
    %2505 = vmatprep.subr.mxu0 0.0
    %2506 = vmatpush1.msra.mxu0 0.0
    %2507 = vmatprep.subr.mxu0 0.0
    %2508 = vmatpush1.msra.mxu0 0.0
    %2509 = vmatprep.subr.mxu0 0.0
    %2510 = vmatpush1.msra.mxu0 0.0
    %2511 = vmatprep.subr.mxu0 0.0
    %2512 = vmatpush1.msra.mxu0 0.0
    %2513 = vmatprep.subr.mxu0 0.0
    %2514 = vmatpush1.msra.mxu0 0.0
    %2515 = vmatprep.subr.mxu0 0.0
    %2516 = vmatpush1.msra.mxu0 0.0
    %2517 = vmatprep.subr.mxu0 0.0
    %2518 = vmatpush1.msra.mxu0 0.0
    %2519 = vmatprep.mubr.f32.mxu0 0.0
    %2520 = vmatmul.mubr.f32.gmra.mrb[0].mxu0 %v1645
    %v2521 = vpop.f32.mrb[0].mxu0
    %v2522 = vadd.f32 0.0, %v2521
    %v2523 = vpop.f32.mrb[0].mxu0
    %v2524 = vadd.f32 0.0, %v2523
    %2525 = vdwg.mxu0
    %2526 = vmatprep.subr.mxu0 0.0
    %2527 = vmatpush1.msra.mxu0 %v2308
    %2528 = vmatprep.subr.mxu0 0.0
    %2529 = vmatpush1.msra.mxu0 %v2313
    %2530 = vmatprep.subr.mxu0 0.0
    %2531 = vmatpush1.msra.mxu0 %v2318
    %2532 = vmatprep.subr.mxu0 0.0
    %2533 = vmatpush1.msra.mxu0 %v2323
    %2534 = vmatprep.subr.mxu0 0.0
    %2535 = vmatpush1.msra.mxu0 %v2328
    %2536 = vmatprep.subr.mxu0 0.0
    %2537 = vmatpush1.msra.mxu0 %v2333
    %2538 = vmatprep.subr.mxu0 0.0
    %2539 = vmatpush1.msra.mxu0 %v2338
    %2540 = vmatprep.subr.mxu0 0.0
    %2541 = vmatpush1.msra.mxu0 %v2343
    %2542 = vmatprep.subr.mxu0 0.0
    %2543 = vmatpush1.msra.mxu0 %v2348
    %2544 = vmatprep.subr.mxu0 0.0
    %2545 = vmatpush1.msra.mxu0 %v2353
    %2546 = vmatprep.subr.mxu0 0.0
    %2547 = vmatpush1.msra.mxu0 %v2358
    %2548 = vmatprep.subr.mxu0 0.0
    %2549 = vmatpush1.msra.mxu0 %v2363
    %2550 = vmatprep.subr.mxu0 0.0
    %2551 = vmatpush1.msra.mxu0 %v2368
    %2552 = vmatprep.subr.mxu0 0.0
    %2553 = vmatpush1.msra.mxu0 %v2373
    %2554 = vmatprep.subr.mxu0 0.0
    %2555 = vmatpush1.msra.mxu0 %v2378
    %2556 = vmatprep.subr.mxu0 0.0
    %2557 = vmatpush1.msra.mxu0 %v2383
    %2558 = vmatprep.subr.mxu0 0.0
    %2559 = vmatpush1.msra.mxu0 0.0
    %2560 = vmatprep.subr.mxu0 0.0
    %2561 = vmatpush1.msra.mxu0 0.0
    %2562 = vmatprep.subr.mxu0 0.0
    %2563 = vmatpush1.msra.mxu0 0.0
    %2564 = vmatprep.subr.mxu0 0.0
    %2565 = vmatpush1.msra.mxu0 0.0
    %2566 = vmatprep.subr.mxu0 0.0
    %2567 = vmatpush1.msra.mxu0 0.0
    %2568 = vmatprep.subr.mxu0 0.0
    %2569 = vmatpush1.msra.mxu0 0.0
    %2570 = vmatprep.subr.mxu0 0.0
    %2571 = vmatpush1.msra.mxu0 0.0
    %2572 = vmatprep.subr.mxu0 0.0
    %2573 = vmatpush1.msra.mxu0 0.0
    %2574 = vmatprep.subr.mxu0 0.0
    %2575 = vmatpush1.msra.mxu0 0.0
    %2576 = vmatprep.subr.mxu0 0.0
    %2577 = vmatpush1.msra.mxu0 0.0
    %2578 = vmatprep.subr.mxu0 0.0
    %2579 = vmatpush1.msra.mxu0 0.0
    %2580 = vmatprep.subr.mxu0 0.0
    %2581 = vmatpush1.msra.mxu0 0.0
    %2582 = vmatprep.subr.mxu0 0.0
    %2583 = vmatpush1.msra.mxu0 0.0
    %2584 = vmatprep.subr.mxu0 0.0
    %2585 = vmatpush1.msra.mxu0 0.0
    %2586 = vmatprep.subr.mxu0 0.0
    %2587 = vmatpush1.msra.mxu0 0.0
    %2588 = vmatprep.subr.mxu0 0.0
    %2589 = vmatpush1.msra.mxu0 0.0
    %2590 = vmatprep.mubr.f32.mxu0 0.0
    %2591 = vmatmul.mubr.f32.gmra.mrb[0].mxu0 %v1645
    %v2592 = vpop.f32.mrb[0].mxu0
    %v2593 = vadd.f32 0.0, %v2592
    %v2594 = vpop.f32.mrb[0].mxu0
    %2595 = vdwg.mxu0
    %v2596 = vadd.f32 %v2158, %v2451
    %v2597 = vadd.f32 %v2160, %v2453
    %v2598 = vadd.f32 %v2229, %v2522
    %v2599 = vadd.f32 %v2231, %v2524
    %v2600 = vadd.f32 %v2300, %v2593
    %s2601 = scalar_lea.vmem [#allocation14], 5
    %v2602 = vld [vmem:[%s2601] sm:$0x1f]
    %v2604 = vlaneseq
    %v2605 = vshrl.u32 %v2604, 7
    %v2606 = vsub.s32 0, %v2605
    %v2607 = vrot.slane %v2602, %v2606
    %v2608 = vlaneseq
    %v2609 = vshrl.u32 %v2608, 7
    %v2610 = vsub.s32 1, %v2609
    %v2611 = vrot.slane %v2602, %v2610
    %v2612 = vlaneseq
    %v2613 = vshrl.u32 %v2612, 7
    %v2614 = vsub.s32 2, %v2613
    %v2615 = vrot.slane %v2602, %v2614
    %v2616 = vlaneseq
    %v2617 = vshrl.u32 %v2616, 7
    %v2618 = vsub.s32 3, %v2617
    %v2619 = vrot.slane %v2602, %v2618
    %v2620 = vlaneseq
    %v2621 = vshrl.u32 %v2620, 7
    %v2622 = vsub.s32 4, %v2621
    %v2623 = vrot.slane %v2602, %v2622
    %v2629 = vadd.f32 %v2596, %v2607
    %v2630 = vadd.f32 %v2597, %v2611
    %v2631 = vadd.f32 %v2598, %v2615
    %v2632 = vadd.f32 %v2599, %v2619
    %v2633 = vadd.f32 %v2600, %v2623
    %v2634 = vxor.u32 %v2629, 2147483648
    %v2635 = vmul.f32 %v2634, 1.442695
    %v2636 = vpow.pop %v2635
    %v2637 = vadd.f32 %v2636, 1.0
    %v2638 = vrcp.pop %v2637
    %v2639 = vmul.f32 1.0, %v2638
    %v2640 = vxor.u32 %v2630, 2147483648
    %v2641 = vmul.f32 %v2640, 1.442695
    %v2642 = vpow.pop %v2641
    %v2643 = vadd.f32 %v2642, 1.0
    %v2644 = vrcp.pop %v2643
    %v2645 = vmul.f32 1.0, %v2644
    %v2646 = vxor.u32 %v2631, 2147483648
    %v2647 = vmul.f32 %v2646, 1.442695
    %v2648 = vpow.pop %v2647
    %v2649 = vadd.f32 %v2648, 1.0
    %v2650 = vrcp.pop %v2649
    %v2651 = vmul.f32 1.0, %v2650
    %v2652 = vxor.u32 %v2632, 2147483648
    %v2653 = vmul.f32 %v2652, 1.442695
    %v2654 = vpow.pop %v2653
    %v2655 = vadd.f32 %v2654, 1.0
    %v2656 = vrcp.pop %v2655
    %v2657 = vmul.f32 1.0, %v2656
    %v2658 = vmul.f32 %v2645, %v264
    %s2659 = scalar_lea.vmem [#allocation16], 384
    %v2660 = vld [vmem:[%s2659] sm:$0xff]
    %v2661 = vld [vmem:[%s2659 + $0x8] sm:$0xff]
    %v2662 = vld [vmem:[%s2659 + $0x10] sm:$0xff]
    %v2663 = vld [vmem:[%s2659 + $0x18] sm:$0xff]
    %v2664 = vld [vmem:[%s2659 + $0x20] sm:$0xff]
    %v2665 = vld [vmem:[%s2659 + $0x28] sm:$0xff]
    %v2666 = vld [vmem:[%s2659 + $0x30] sm:$0xff]
    %v2667 = vld [vmem:[%s2659 + $0x38] sm:$0xff]
    %v2668 = vld [vmem:[%s2659 + $0x40] sm:$0xff]
    %v2669 = vld [vmem:[%s2659 + $0x48] sm:$0xff]
    %v2670 = vld [vmem:[%s2659 + $0x50] sm:$0xff]
    %v2671 = vld [vmem:[%s2659 + $0x58] sm:$0xff]
    %v2672 = vld [vmem:[%s2659 + $0x60] sm:$0xff]
    %v2673 = vld [vmem:[%s2659 + $0x68] sm:$0xff]
    %v2674 = vld [vmem:[%s2659 + $0x70] sm:$0xff]
    %v2675 = vld [vmem:[%s2659 + $0x78] sm:$0xff]
    %v2676 = vmul.f32 %v2639, %v1716
    %s2677 = scalar_lea.vmem [#allocation16], 512
    %v2678 = vld [vmem:[%s2677] sm:$0xff]
    %v2679 = vld [vmem:[%s2677 + $0x8] sm:$0xff]
    %v2680 = vld [vmem:[%s2677 + $0x10] sm:$0xff]
    %v2681 = vld [vmem:[%s2677 + $0x18] sm:$0xff]
    %v2682 = vld [vmem:[%s2677 + $0x20] sm:$0xff]
    %v2683 = vld [vmem:[%s2677 + $0x28] sm:$0xff]
    %v2684 = vld [vmem:[%s2677 + $0x30] sm:$0xff]
    %v2685 = vld [vmem:[%s2677 + $0x38] sm:$0xff]
    %v2686 = vld [vmem:[%s2677 + $0x40] sm:$0xff]
    %v2687 = vld [vmem:[%s2677 + $0x48] sm:$0xff]
    %v2688 = vld [vmem:[%s2677 + $0x50] sm:$0xff]
    %v2689 = vld [vmem:[%s2677 + $0x58] sm:$0xff]
    %v2690 = vld [vmem:[%s2677 + $0x60] sm:$0xff]
    %v2691 = vld [vmem:[%s2677 + $0x68] sm:$0xff]
    %v2692 = vld [vmem:[%s2677 + $0x70] sm:$0xff]
    %v2693 = vld [vmem:[%s2677 + $0x78] sm:$0xff]
    %2694 = vmatprep.subr.mxu0 0.0
    %2695 = vmatpush1.msra.mxu0 %v2678
    %2696 = vmatprep.subr.mxu0 0.0
    %2697 = vmatpush1.msra.mxu0 %v2679
    %2698 = vmatprep.subr.mxu0 0.0
    %2699 = vmatpush1.msra.mxu0 %v2680
    %2700 = vmatprep.subr.mxu0 0.0
    %2701 = vmatpush1.msra.mxu0 %v2681
    %2702 = vmatprep.subr.mxu0 0.0
    %2703 = vmatpush1.msra.mxu0 %v2682
    %2704 = vmatprep.subr.mxu0 0.0
    %2705 = vmatpush1.msra.mxu0 %v2683
    %2706 = vmatprep.subr.mxu0 0.0
    %2707 = vmatpush1.msra.mxu0 %v2684
    %2708 = vmatprep.subr.mxu0 0.0
    %2709 = vmatpush1.msra.mxu0 %v2685
    %2710 = vmatprep.subr.mxu0 0.0
    %2711 = vmatpush1.msra.mxu0 %v2686
    %2712 = vmatprep.subr.mxu0 0.0
    %2713 = vmatpush1.msra.mxu0 %v2687
    %2714 = vmatprep.subr.mxu0 0.0
    %2715 = vmatpush1.msra.mxu0 %v2688
    %2716 = vmatprep.subr.mxu0 0.0
    %2717 = vmatpush1.msra.mxu0 %v2689
    %2718 = vmatprep.subr.mxu0 0.0
    %2719 = vmatpush1.msra.mxu0 %v2690
    %2720 = vmatprep.subr.mxu0 0.0
    %2721 = vmatpush1.msra.mxu0 %v2691
    %2722 = vmatprep.subr.mxu0 0.0
    %2723 = vmatpush1.msra.mxu0 %v2692
    %2724 = vmatprep.subr.mxu0 0.0
    %2725 = vmatpush1.msra.mxu0 %v2693
    %2726 = vmatprep.subr.mxu0 0.0
    %2727 = vmatpush1.msra.mxu0 0.0
    %2728 = vmatprep.subr.mxu0 0.0
    %2729 = vmatpush1.msra.mxu0 0.0
    %2730 = vmatprep.subr.mxu0 0.0
    %2731 = vmatpush1.msra.mxu0 0.0
    %2732 = vmatprep.subr.mxu0 0.0
    %2733 = vmatpush1.msra.mxu0 0.0
    %2734 = vmatprep.subr.mxu0 0.0
    %2735 = vmatpush1.msra.mxu0 0.0
    %2736 = vmatprep.subr.mxu0 0.0
    %2737 = vmatpush1.msra.mxu0 0.0
    %2738 = vmatprep.subr.mxu0 0.0
    %2739 = vmatpush1.msra.mxu0 0.0
    %2740 = vmatprep.subr.mxu0 0.0
    %2741 = vmatpush1.msra.mxu0 0.0
    %2742 = vmatprep.subr.mxu0 0.0
    %2743 = vmatpush1.msra.mxu0 0.0
    %2744 = vmatprep.subr.mxu0 0.0
    %2745 = vmatpush1.msra.mxu0 0.0
    %2746 = vmatprep.subr.mxu0 0.0
    %2747 = vmatpush1.msra.mxu0 0.0
    %2748 = vmatprep.subr.mxu0 0.0
    %2749 = vmatpush1.msra.mxu0 0.0
    %2750 = vmatprep.subr.mxu0 0.0
    %2751 = vmatpush1.msra.mxu0 0.0
    %2752 = vmatprep.subr.mxu0 0.0
    %2753 = vmatpush1.msra.mxu0 0.0
    %2754 = vmatprep.subr.mxu0 0.0
    %2755 = vmatpush1.msra.mxu0 0.0
    %2756 = vmatprep.subr.mxu0 0.0
    %2757 = vmatpush1.msra.mxu0 0.0
    %2758 = vmatprep.mubr.f32.mxu0 0.0
    %2759 = vmatmul.mubr.f32.gmra.mrb[0].mxu0 %v2676
    %v2760 = vpop.f32.mrb[0].mxu0
    %v2761 = vadd.f32 0.0, %v2760
    %v2762 = vpop.f32.mrb[0].mxu0
    %2763 = vdwg.mxu0
    %2764 = vmatprep.subr.mxu0 0.0
    %2765 = vmatpush1.msra.mxu0 %v2660
    %2766 = vmatprep.subr.mxu0 0.0
    %2767 = vmatpush1.msra.mxu0 %v2661
    %2768 = vmatprep.subr.mxu0 0.0
    %2769 = vmatpush1.msra.mxu0 %v2662
    %2770 = vmatprep.subr.mxu0 0.0
    %2771 = vmatpush1.msra.mxu0 %v2663
    %2772 = vmatprep.subr.mxu0 0.0
    %2773 = vmatpush1.msra.mxu0 %v2664
    %2774 = vmatprep.subr.mxu0 0.0
    %2775 = vmatpush1.msra.mxu0 %v2665
    %2776 = vmatprep.subr.mxu0 0.0
    %2777 = vmatpush1.msra.mxu0 %v2666
    %2778 = vmatprep.subr.mxu0 0.0
    %2779 = vmatpush1.msra.mxu0 %v2667
    %2780 = vmatprep.subr.mxu0 0.0
    %2781 = vmatpush1.msra.mxu0 %v2668
    %2782 = vmatprep.subr.mxu0 0.0
    %2783 = vmatpush1.msra.mxu0 %v2669
    %2784 = vmatprep.subr.mxu0 0.0
    %2785 = vmatpush1.msra.mxu0 %v2670
    %2786 = vmatprep.subr.mxu0 0.0
    %2787 = vmatpush1.msra.mxu0 %v2671
    %2788 = vmatprep.subr.mxu0 0.0
    %2789 = vmatpush1.msra.mxu0 %v2672
    %2790 = vmatprep.subr.mxu0 0.0
    %2791 = vmatpush1.msra.mxu0 %v2673
    %2792 = vmatprep.subr.mxu0 0.0
    %2793 = vmatpush1.msra.mxu0 %v2674
    %2794 = vmatprep.subr.mxu0 0.0
    %2795 = vmatpush1.msra.mxu0 %v2675
    %2796 = vmatprep.subr.mxu0 0.0
    %2797 = vmatpush1.msra.mxu0 0.0
    %2798 = vmatprep.subr.mxu0 0.0
    %2799 = vmatpush1.msra.mxu0 0.0
    %2800 = vmatprep.subr.mxu0 0.0
    %2801 = vmatpush1.msra.mxu0 0.0
    %2802 = vmatprep.subr.mxu0 0.0
    %2803 = vmatpush1.msra.mxu0 0.0
    %2804 = vmatprep.subr.mxu0 0.0
    %2805 = vmatpush1.msra.mxu0 0.0
    %2806 = vmatprep.subr.mxu0 0.0
    %2807 = vmatpush1.msra.mxu0 0.0
    %2808 = vmatprep.subr.mxu0 0.0
    %2809 = vmatpush1.msra.mxu0 0.0
    %2810 = vmatprep.subr.mxu0 0.0
    %2811 = vmatpush1.msra.mxu0 0.0
    %2812 = vmatprep.subr.mxu0 0.0
    %2813 = vmatpush1.msra.mxu0 0.0
    %2814 = vmatprep.subr.mxu0 0.0
    %2815 = vmatpush1.msra.mxu0 0.0
    %2816 = vmatprep.subr.mxu0 0.0
    %2817 = vmatpush1.msra.mxu0 0.0
    %2818 = vmatprep.subr.mxu0 0.0
    %2819 = vmatpush1.msra.mxu0 0.0
    %2820 = vmatprep.subr.mxu0 0.0
    %2821 = vmatpush1.msra.mxu0 0.0
    %2822 = vmatprep.subr.mxu0 0.0
    %2823 = vmatpush1.msra.mxu0 0.0
    %2824 = vmatprep.subr.mxu0 0.0
    %2825 = vmatpush1.msra.mxu0 0.0
    %2826 = vmatprep.subr.mxu0 0.0
    %2827 = vmatpush1.msra.mxu0 0.0
    %2828 = vmatprep.mubr.f32.mxu0 0.0
    %2829 = vmatmul.mubr.f32.gmra.mrb[0].mxu0 %v2658
    %v2830 = vpop.f32.mrb[0].mxu0
    %v2831 = vadd.f32 %v2761, %v2830
    %v2832 = vpop.f32.mrb[0].mxu0
    %2833 = vdwg.mxu0
    %s2834 = scalar_lea.vmem [#allocation16], 640
    %v2835 = vld [vmem:[%s2834] sm:$0xff]
    %v2836 = vld [vmem:[%s2834 + $0x8] sm:$0xff]
    %v2837 = vld [vmem:[%s2834 + $0x10] sm:$0xff]
    %v2838 = vld [vmem:[%s2834 + $0x18] sm:$0xff]
    %v2839 = vld [vmem:[%s2834 + $0x20] sm:$0xff]
    %v2840 = vld [vmem:[%s2834 + $0x28] sm:$0xff]
    %v2841 = vld [vmem:[%s2834 + $0x30] sm:$0xff]
    %v2842 = vld [vmem:[%s2834 + $0x38] sm:$0xff]
    %v2843 = vld [vmem:[%s2834 + $0x40] sm:$0xff]
    %v2844 = vld [vmem:[%s2834 + $0x48] sm:$0xff]
    %v2845 = vld [vmem:[%s2834 + $0x50] sm:$0xff]
    %v2846 = vld [vmem:[%s2834 + $0x58] sm:$0xff]
    %v2847 = vld [vmem:[%s2834 + $0x60] sm:$0xff]
    %v2848 = vld [vmem:[%s2834 + $0x68] sm:$0xff]
    %v2849 = vld [vmem:[%s2834 + $0x70] sm:$0xff]
    %v2850 = vld [vmem:[%s2834 + $0x78] sm:$0xff]
    %2851 = vmatprep.subr.mxu0 0.0
    %2852 = vmatpush1.msra.mxu0 %v2835
    %2853 = vmatprep.subr.mxu0 0.0
    %2854 = vmatpush1.msra.mxu0 %v2836
    %2855 = vmatprep.subr.mxu0 0.0
    %2856 = vmatpush1.msra.mxu0 %v2837
    %2857 = vmatprep.subr.mxu0 0.0
    %2858 = vmatpush1.msra.mxu0 %v2838
    %2859 = vmatprep.subr.mxu0 0.0
    %2860 = vmatpush1.msra.mxu0 %v2839
    %2861 = vmatprep.subr.mxu0 0.0
    %2862 = vmatpush1.msra.mxu0 %v2840
    %2863 = vmatprep.subr.mxu0 0.0
    %2864 = vmatpush1.msra.mxu0 %v2841
    %2865 = vmatprep.subr.mxu0 0.0
    %2866 = vmatpush1.msra.mxu0 %v2842
    %2867 = vmatprep.subr.mxu0 0.0
    %2868 = vmatpush1.msra.mxu0 %v2843
    %2869 = vmatprep.subr.mxu0 0.0
    %2870 = vmatpush1.msra.mxu0 %v2844
    %2871 = vmatprep.subr.mxu0 0.0
    %2872 = vmatpush1.msra.mxu0 %v2845
    %2873 = vmatprep.subr.mxu0 0.0
    %2874 = vmatpush1.msra.mxu0 %v2846
    %2875 = vmatprep.subr.mxu0 0.0
    %2876 = vmatpush1.msra.mxu0 %v2847
    %2877 = vmatprep.subr.mxu0 0.0
    %2878 = vmatpush1.msra.mxu0 %v2848
    %2879 = vmatprep.subr.mxu0 0.0
    %2880 = vmatpush1.msra.mxu0 %v2849
    %2881 = vmatprep.subr.mxu0 0.0
    %2882 = vmatpush1.msra.mxu0 %v2850
    %2883 = vmatprep.subr.mxu0 0.0
    %2884 = vmatpush1.msra.mxu0 0.0
    %2885 = vmatprep.subr.mxu0 0.0
    %2886 = vmatpush1.msra.mxu0 0.0
    %2887 = vmatprep.subr.mxu0 0.0
    %2888 = vmatpush1.msra.mxu0 0.0
    %2889 = vmatprep.subr.mxu0 0.0
    %2890 = vmatpush1.msra.mxu0 0.0
    %2891 = vmatprep.subr.mxu0 0.0
    %2892 = vmatpush1.msra.mxu0 0.0
    %2893 = vmatprep.subr.mxu0 0.0
    %2894 = vmatpush1.msra.mxu0 0.0
    %2895 = vmatprep.subr.mxu0 0.0
    %2896 = vmatpush1.msra.mxu0 0.0
    %2897 = vmatprep.subr.mxu0 0.0
    %2898 = vmatpush1.msra.mxu0 0.0
    %2899 = vmatprep.subr.mxu0 0.0
    %2900 = vmatpush1.msra.mxu0 0.0
    %2901 = vmatprep.subr.mxu0 0.0
    %2902 = vmatpush1.msra.mxu0 0.0
    %2903 = vmatprep.subr.mxu0 0.0
    %2904 = vmatpush1.msra.mxu0 0.0
    %2905 = vmatprep.subr.mxu0 0.0
    %2906 = vmatpush1.msra.mxu0 0.0
    %2907 = vmatprep.subr.mxu0 0.0
    %2908 = vmatpush1.msra.mxu0 0.0
    %2909 = vmatprep.subr.mxu0 0.0
    %2910 = vmatpush1.msra.mxu0 0.0
    %2911 = vmatprep.subr.mxu0 0.0
    %2912 = vmatpush1.msra.mxu0 0.0
    %2913 = vmatprep.subr.mxu0 0.0
    %2914 = vmatpush1.msra.mxu0 0.0
    %2915 = vmatprep.mubr.f32.mxu0 0.0
    %2916 = vmatmul.mubr.f32.gmra.mrb[0].mxu0 %v1645
    %v2917 = vpop.f32.mrb[0].mxu0
    %v2918 = vadd.f32 0.0, %v2917
    %v2919 = vpop.f32.mrb[0].mxu0
    %2920 = vdwg.mxu0
    %v2921 = vadd.f32 %v2831, %v2918
    %s2922 = scalar_lea.vmem [#allocation17], 1
    %v2923 = vld [vmem:[%s2922] sm:$0x1]
    %v2925 = vlaneseq
    %v2926 = vshrl.u32 %v2925, 7
    %v2927 = vsub.s32 0, %v2926
    %v2928 = vrot.slane %v2923, %v2927
    %v2930 = vadd.f32 %v2921, %v2928
    %v2931 = vtanh.pop %v2930
    %v2932 = vmul.f32 %v2651, %v2931
    %v2933 = vmul.f32 %v2657, %v2633
    %v2934 = vadd.f32 %v2932, %v2933
    %2935 = vmatprep.subr.mxu0 0.0
    %2936 = vmatpush1.msra.mxu0 %v2934
    %2937 = vmatprep.subr.mxu0 0.0
    %2938 = vmatpush1.msra.mxu0 0.0
    %2939 = vmatprep.subr.mxu0 0.0
    %2940 = vmatpush1.msra.mxu0 0.0
    %2941 = vmatprep.subr.mxu0 0.0
    %2942 = vmatpush1.msra.mxu0 0.0
    %2943 = vmatprep.subr.mxu0 0.0
    %2944 = vmatpush1.msra.mxu0 0.0
    %2945 = vmatprep.subr.mxu0 0.0
    %2946 = vmatpush1.msra.mxu0 0.0
    %2947 = vmatprep.subr.mxu0 0.0
    %2948 = vmatpush1.msra.mxu0 0.0
    %2949 = vmatprep.subr.mxu0 0.0
    %2950 = vmatpush1.msra.mxu0 0.0
    %2951 = vmatprep.subr.mxu0 0.0
    %2952 = vmatpush1.msra.mxu0 0.0
    %2953 = vmatprep.subr.mxu0 0.0
    %2954 = vmatpush1.msra.mxu0 0.0
    %2955 = vmatprep.subr.mxu0 0.0
    %2956 = vmatpush1.msra.mxu0 0.0
    %2957 = vmatprep.subr.mxu0 0.0
    %2958 = vmatpush1.msra.mxu0 0.0
    %2959 = vmatprep.subr.mxu0 0.0
    %2960 = vmatpush1.msra.mxu0 0.0
    %2961 = vmatprep.subr.mxu0 0.0
    %2962 = vmatpush1.msra.mxu0 0.0
    %2963 = vmatprep.subr.mxu0 0.0
    %2964 = vmatpush1.msra.mxu0 0.0
    %2965 = vmatprep.subr.mxu0 0.0
    %2966 = vmatpush1.msra.mxu0 0.0
    %2967 = vmatprep.subr.mxu0 0.0
    %2968 = vmatpush1.msra.mxu0 0.0
    %2969 = vmatprep.subr.mxu0 0.0
    %2970 = vmatpush1.msra.mxu0 0.0
    %2971 = vmatprep.subr.mxu0 0.0
    %2972 = vmatpush1.msra.mxu0 0.0
    %2973 = vmatprep.subr.mxu0 0.0
    %2974 = vmatpush1.msra.mxu0 0.0
    %2975 = vmatprep.subr.mxu0 0.0
    %2976 = vmatpush1.msra.mxu0 0.0
    %2977 = vmatprep.subr.mxu0 0.0
    %2978 = vmatpush1.msra.mxu0 0.0
    %2979 = vmatprep.subr.mxu0 0.0
    %2980 = vmatpush1.msra.mxu0 0.0
    %2981 = vmatprep.subr.mxu0 0.0
    %2982 = vmatpush1.msra.mxu0 0.0
    %2983 = vmatprep.subr.mxu0 0.0
    %2984 = vmatpush1.msra.mxu0 0.0
    %2985 = vmatprep.subr.mxu0 0.0
    %2986 = vmatpush1.msra.mxu0 0.0
    %2987 = vmatprep.subr.mxu0 0.0
    %2988 = vmatpush1.msra.mxu0 0.0
    %2989 = vmatprep.subr.mxu0 0.0
    %2990 = vmatpush1.msra.mxu0 0.0
    %2991 = vmatprep.subr.mxu0 0.0
    %2992 = vmatpush1.msra.mxu0 0.0
    %2993 = vmatprep.subr.mxu0 0.0
    %2994 = vmatpush1.msra.mxu0 0.0
    %2995 = vmatprep.subr.mxu0 0.0
    %2996 = vmatpush1.msra.mxu0 0.0
    %2997 = vmatprep.subr.mxu0 0.0
    %2998 = vmatpush1.msra.mxu0 0.0
    %2999 = vmatprep.mubr.f32.mxu0 0.0
    %3000 = vmatmul.mubr.f32.gmra.mrb[0].mxu0 %v360
    %v3001 = vpop.f32.mrb[0].mxu0
    %v3002 = vadd.f32 0.0, %v3001
    %v3003 = vpop.f32.mrb[0].mxu0
    %3004 = vdwg.mxu0
    %v3005 = vmax.f32 %v3002, 0.0
    %s3006 = scalar_lea.vmem [#allocation13], 3840
    %v3007 = vld [vmem:[%s3006] sm:$0xff]
    %v3008 = vld [vmem:[%s3006 + $0x8] sm:$0xff]
    %v3009 = vld [vmem:[%s3006 + $0x10] sm:$0xff]
    %v3010 = vld [vmem:[%s3006 + $0x18] sm:$0xff]
    %v3011 = vld [vmem:[%s3006 + $0x20] sm:$0xff]
    %v3012 = vld [vmem:[%s3006 + $0x28] sm:$0xff]
    %v3013 = vld [vmem:[%s3006 + $0x30] sm:$0xff]
    %v3014 = vld [vmem:[%s3006 + $0x38] sm:$0xff]
    %v3015 = vld [vmem:[%s3006 + $0x40] sm:$0xff]
    %v3016 = vld [vmem:[%s3006 + $0x48] sm:$0xff]
    %v3017 = vld [vmem:[%s3006 + $0x50] sm:$0xff]
    %v3018 = vld [vmem:[%s3006 + $0x58] sm:$0xff]
    %v3019 = vld [vmem:[%s3006 + $0x60] sm:$0xff]
    %v3020 = vld [vmem:[%s3006 + $0x68] sm:$0xff]
    %v3021 = vld [vmem:[%s3006 + $0x70] sm:$0xff]
    %v3022 = vld [vmem:[%s3006 + $0x78] sm:$0xff]
    %v3023 = vld [vmem:[%s3006 + $0x80] sm:$0xff]
    %v3024 = vld [vmem:[%s3006 + $0x88] sm:$0xff]
    %v3025 = vld [vmem:[%s3006 + $0x90] sm:$0xff]
    %v3026 = vld [vmem:[%s3006 + $0x98] sm:$0xff]
    %v3027 = vld [vmem:[%s3006 + $0xa0] sm:$0xff]
    %v3028 = vld [vmem:[%s3006 + $0xa8] sm:$0xff]
    %v3029 = vld [vmem:[%s3006 + $0xb0] sm:$0xff]
    %v3030 = vld [vmem:[%s3006 + $0xb8] sm:$0xff]
    %v3031 = vld [vmem:[%s3006 + $0xc0] sm:$0xff]
    %v3032 = vld [vmem:[%s3006 + $0xc8] sm:$0xff]
    %v3033 = vld [vmem:[%s3006 + $0xd0] sm:$0xff]
    %v3034 = vld [vmem:[%s3006 + $0xd8] sm:$0xff]
    %v3035 = vld [vmem:[%s3006 + $0xe0] sm:$0xff]
    %v3036 = vld [vmem:[%s3006 + $0xe8] sm:$0xff]
    %v3037 = vld [vmem:[%s3006 + $0xf0] sm:$0xff]
    %v3038 = vld [vmem:[%s3006 + $0xf8] sm:$0xff]
    %v3039 = vld [vmem:[%s3006 + $0x100] sm:$0xff]
    %v3040 = vld [vmem:[%s3006 + $0x108] sm:$0xff]
    %v3041 = vld [vmem:[%s3006 + $0x110] sm:$0xff]
    %v3042 = vld [vmem:[%s3006 + $0x118] sm:$0xff]
    %v3043 = vld [vmem:[%s3006 + $0x120] sm:$0xff]
    %v3044 = vld [vmem:[%s3006 + $0x128] sm:$0xff]
    %v3045 = vld [vmem:[%s3006 + $0x130] sm:$0xff]
    %v3046 = vld [vmem:[%s3006 + $0x138] sm:$0xff]
    %v3047 = vld [vmem:[%s3006 + $0x140] sm:$0xff]
    %v3048 = vld [vmem:[%s3006 + $0x148] sm:$0xff]
    %v3049 = vld [vmem:[%s3006 + $0x150] sm:$0xff]
    %v3050 = vld [vmem:[%s3006 + $0x158] sm:$0xff]
    %v3051 = vld [vmem:[%s3006 + $0x160] sm:$0xff]
    %v3052 = vld [vmem:[%s3006 + $0x168] sm:$0xff]
    %v3053 = vld [vmem:[%s3006 + $0x170] sm:$0xff]
    %v3054 = vld [vmem:[%s3006 + $0x178] sm:$0xff]
    %v3055 = vld [vmem:[%s3006 + $0x180] sm:$0xff]
    %v3056 = vld [vmem:[%s3006 + $0x188] sm:$0xff]
    %v3057 = vld [vmem:[%s3006 + $0x190] sm:$0xff]
    %v3058 = vld [vmem:[%s3006 + $0x198] sm:$0xff]
    %v3059 = vld [vmem:[%s3006 + $0x1a0] sm:$0xff]
    %v3060 = vld [vmem:[%s3006 + $0x1a8] sm:$0xff]
    %v3061 = vld [vmem:[%s3006 + $0x1b0] sm:$0xff]
    %v3062 = vld [vmem:[%s3006 + $0x1b8] sm:$0xff]
    %v3063 = vld [vmem:[%s3006 + $0x1c0] sm:$0xff]
    %v3064 = vld [vmem:[%s3006 + $0x1c8] sm:$0xff]
    %v3065 = vld [vmem:[%s3006 + $0x1d0] sm:$0xff]
    %v3066 = vld [vmem:[%s3006 + $0x1d8] sm:$0xff]
    %v3067 = vld [vmem:[%s3006 + $0x1e0] sm:$0xff]
    %v3068 = vld [vmem:[%s3006 + $0x1e8] sm:$0xff]
    %v3069 = vld [vmem:[%s3006 + $0x1f0] sm:$0xff]
    %v3070 = vld [vmem:[%s3006 + $0x1f8] sm:$0xff]
    %v3071 = vld [vmem:[%s3006 + $0x200] sm:$0xff]
    %v3072 = vld [vmem:[%s3006 + $0x208] sm:$0xff]
    %v3073 = vld [vmem:[%s3006 + $0x210] sm:$0xff]
    %v3074 = vld [vmem:[%s3006 + $0x218] sm:$0xff]
    %v3075 = vld [vmem:[%s3006 + $0x220] sm:$0xff]
    %v3076 = vld [vmem:[%s3006 + $0x228] sm:$0xff]
    %v3077 = vld [vmem:[%s3006 + $0x230] sm:$0xff]
    %v3078 = vld [vmem:[%s3006 + $0x238] sm:$0xff]
    %v3079 = vld [vmem:[%s3006 + $0x240] sm:$0xff]
    %v3080 = vld [vmem:[%s3006 + $0x248] sm:$0xff]
    %v3081 = vld [vmem:[%s3006 + $0x250] sm:$0xff]
    %v3082 = vld [vmem:[%s3006 + $0x258] sm:$0xff]
    %v3083 = vld [vmem:[%s3006 + $0x260] sm:$0xff]
    %v3084 = vld [vmem:[%s3006 + $0x268] sm:$0xff]
    %v3085 = vld [vmem:[%s3006 + $0x270] sm:$0xff]
    %v3086 = vld [vmem:[%s3006 + $0x278] sm:$0xff]
    %s3087 = scalar_lea.vmem [#allocation13], 4480
    %v3088 = vld [vmem:[%s3087] sm:$0xff]
    %v3089 = vld [vmem:[%s3087 + $0x8] sm:$0xff]
    %v3090 = vld [vmem:[%s3087 + $0x10] sm:$0xff]
    %v3091 = vld [vmem:[%s3087 + $0x18] sm:$0xff]
    %v3092 = vld [vmem:[%s3087 + $0x20] sm:$0xff]
    %v3093 = vld [vmem:[%s3087 + $0x28] sm:$0xff]
    %v3094 = vld [vmem:[%s3087 + $0x30] sm:$0xff]
    %v3095 = vld [vmem:[%s3087 + $0x38] sm:$0xff]
    %v3096 = vld [vmem:[%s3087 + $0x40] sm:$0xff]
    %v3097 = vld [vmem:[%s3087 + $0x48] sm:$0xff]
    %v3098 = vld [vmem:[%s3087 + $0x50] sm:$0xff]
    %v3099 = vld [vmem:[%s3087 + $0x58] sm:$0xff]
    %v3100 = vld [vmem:[%s3087 + $0x60] sm:$0xff]
    %v3101 = vld [vmem:[%s3087 + $0x68] sm:$0xff]
    %v3102 = vld [vmem:[%s3087 + $0x70] sm:$0xff]
    %v3103 = vld [vmem:[%s3087 + $0x78] sm:$0xff]
    %v3104 = vld [vmem:[%s3087 + $0x80] sm:$0xff]
    %v3105 = vld [vmem:[%s3087 + $0x88] sm:$0xff]
    %v3106 = vld [vmem:[%s3087 + $0x90] sm:$0xff]
    %v3107 = vld [vmem:[%s3087 + $0x98] sm:$0xff]
    %v3108 = vld [vmem:[%s3087 + $0xa0] sm:$0xff]
    %v3109 = vld [vmem:[%s3087 + $0xa8] sm:$0xff]
    %v3110 = vld [vmem:[%s3087 + $0xb0] sm:$0xff]
    %v3111 = vld [vmem:[%s3087 + $0xb8] sm:$0xff]
    %v3112 = vld [vmem:[%s3087 + $0xc0] sm:$0xff]
    %v3113 = vld [vmem:[%s3087 + $0xc8] sm:$0xff]
    %v3114 = vld [vmem:[%s3087 + $0xd0] sm:$0xff]
    %v3115 = vld [vmem:[%s3087 + $0xd8] sm:$0xff]
    %v3116 = vld [vmem:[%s3087 + $0xe0] sm:$0xff]
    %v3117 = vld [vmem:[%s3087 + $0xe8] sm:$0xff]
    %v3118 = vld [vmem:[%s3087 + $0xf0] sm:$0xff]
    %v3119 = vld [vmem:[%s3087 + $0xf8] sm:$0xff]
    %v3120 = vld [vmem:[%s3087 + $0x100] sm:$0xff]
    %v3121 = vld [vmem:[%s3087 + $0x108] sm:$0xff]
    %v3122 = vld [vmem:[%s3087 + $0x110] sm:$0xff]
    %v3123 = vld [vmem:[%s3087 + $0x118] sm:$0xff]
    %v3124 = vld [vmem:[%s3087 + $0x120] sm:$0xff]
    %v3125 = vld [vmem:[%s3087 + $0x128] sm:$0xff]
    %v3126 = vld [vmem:[%s3087 + $0x130] sm:$0xff]
    %v3127 = vld [vmem:[%s3087 + $0x138] sm:$0xff]
    %v3128 = vld [vmem:[%s3087 + $0x140] sm:$0xff]
    %v3129 = vld [vmem:[%s3087 + $0x148] sm:$0xff]
    %v3130 = vld [vmem:[%s3087 + $0x150] sm:$0xff]
    %v3131 = vld [vmem:[%s3087 + $0x158] sm:$0xff]
    %v3132 = vld [vmem:[%s3087 + $0x160] sm:$0xff]
    %v3133 = vld [vmem:[%s3087 + $0x168] sm:$0xff]
    %v3134 = vld [vmem:[%s3087 + $0x170] sm:$0xff]
    %v3135 = vld [vmem:[%s3087 + $0x178] sm:$0xff]
    %v3136 = vld [vmem:[%s3087 + $0x180] sm:$0xff]
    %v3137 = vld [vmem:[%s3087 + $0x188] sm:$0xff]
    %v3138 = vld [vmem:[%s3087 + $0x190] sm:$0xff]
    %v3139 = vld [vmem:[%s3087 + $0x198] sm:$0xff]
    %v3140 = vld [vmem:[%s3087 + $0x1a0] sm:$0xff]
    %v3141 = vld [vmem:[%s3087 + $0x1a8] sm:$0xff]
    %v3142 = vld [vmem:[%s3087 + $0x1b0] sm:$0xff]
    %v3143 = vld [vmem:[%s3087 + $0x1b8] sm:$0xff]
    %v3144 = vld [vmem:[%s3087 + $0x1c0] sm:$0xff]
    %v3145 = vld [vmem:[%s3087 + $0x1c8] sm:$0xff]
    %v3146 = vld [vmem:[%s3087 + $0x1d0] sm:$0xff]
    %v3147 = vld [vmem:[%s3087 + $0x1d8] sm:$0xff]
    %v3148 = vld [vmem:[%s3087 + $0x1e0] sm:$0xff]
    %v3149 = vld [vmem:[%s3087 + $0x1e8] sm:$0xff]
    %v3150 = vld [vmem:[%s3087 + $0x1f0] sm:$0xff]
    %v3151 = vld [vmem:[%s3087 + $0x1f8] sm:$0xff]
    %v3152 = vld [vmem:[%s3087 + $0x200] sm:$0xff]
    %v3153 = vld [vmem:[%s3087 + $0x208] sm:$0xff]
    %v3154 = vld [vmem:[%s3087 + $0x210] sm:$0xff]
    %v3155 = vld [vmem:[%s3087 + $0x218] sm:$0xff]
    %v3156 = vld [vmem:[%s3087 + $0x220] sm:$0xff]
    %v3157 = vld [vmem:[%s3087 + $0x228] sm:$0xff]
    %v3158 = vld [vmem:[%s3087 + $0x230] sm:$0xff]
    %v3159 = vld [vmem:[%s3087 + $0x238] sm:$0xff]
    %v3160 = vld [vmem:[%s3087 + $0x240] sm:$0xff]
    %v3161 = vld [vmem:[%s3087 + $0x248] sm:$0xff]
    %v3162 = vld [vmem:[%s3087 + $0x250] sm:$0xff]
    %v3163 = vld [vmem:[%s3087 + $0x258] sm:$0xff]
    %v3164 = vld [vmem:[%s3087 + $0x260] sm:$0xff]
    %v3165 = vld [vmem:[%s3087 + $0x268] sm:$0xff]
    %v3166 = vld [vmem:[%s3087 + $0x270] sm:$0xff]
    %v3167 = vld [vmem:[%s3087 + $0x278] sm:$0xff]
    %3168 = vmatprep.subr.mxu0 %v3089
    %3169 = vmatpush1.msra.mxu0 %v3088
    %3170 = vmatprep.subr.mxu0 %v3094
    %3171 = vmatpush1.msra.mxu0 %v3093
    %3172 = vmatprep.subr.mxu0 %v3099
    %3173 = vmatpush1.msra.mxu0 %v3098
    %3174 = vmatprep.subr.mxu0 %v3104
    %3175 = vmatpush1.msra.mxu0 %v3103
    %3176 = vmatprep.subr.mxu0 %v3109
    %3177 = vmatpush1.msra.mxu0 %v3108
    %3178 = vmatprep.subr.mxu0 %v3114
    %3179 = vmatpush1.msra.mxu0 %v3113
    %3180 = vmatprep.subr.mxu0 %v3119
    %3181 = vmatpush1.msra.mxu0 %v3118
    %3182 = vmatprep.subr.mxu0 %v3124
    %3183 = vmatpush1.msra.mxu0 %v3123
    %3184 = vmatprep.subr.mxu0 %v3129
    %3185 = vmatpush1.msra.mxu0 %v3128
    %3186 = vmatprep.subr.mxu0 %v3134
    %3187 = vmatpush1.msra.mxu0 %v3133
    %3188 = vmatprep.subr.mxu0 %v3139
    %3189 = vmatpush1.msra.mxu0 %v3138
    %3190 = vmatprep.subr.mxu0 %v3144
    %3191 = vmatpush1.msra.mxu0 %v3143
    %3192 = vmatprep.subr.mxu0 %v3149
    %3193 = vmatpush1.msra.mxu0 %v3148
    %3194 = vmatprep.subr.mxu0 %v3154
    %3195 = vmatpush1.msra.mxu0 %v3153
    %3196 = vmatprep.subr.mxu0 %v3159
    %3197 = vmatpush1.msra.mxu0 %v3158
    %3198 = vmatprep.subr.mxu0 %v3164
    %3199 = vmatpush1.msra.mxu0 %v3163
    %3200 = vmatprep.subr.mxu0 0.0
    %3201 = vmatpush1.msra.mxu0 0.0
    %3202 = vmatprep.subr.mxu0 0.0
    %3203 = vmatpush1.msra.mxu0 0.0
    %3204 = vmatprep.subr.mxu0 0.0
    %3205 = vmatpush1.msra.mxu0 0.0
    %3206 = vmatprep.subr.mxu0 0.0
    %3207 = vmatpush1.msra.mxu0 0.0
    %3208 = vmatprep.subr.mxu0 0.0
    %3209 = vmatpush1.msra.mxu0 0.0
    %3210 = vmatprep.subr.mxu0 0.0
    %3211 = vmatpush1.msra.mxu0 0.0
    %3212 = vmatprep.subr.mxu0 0.0
    %3213 = vmatpush1.msra.mxu0 0.0
    %3214 = vmatprep.subr.mxu0 0.0
    %3215 = vmatpush1.msra.mxu0 0.0
    %3216 = vmatprep.subr.mxu0 0.0
    %3217 = vmatpush1.msra.mxu0 0.0
    %3218 = vmatprep.subr.mxu0 0.0
    %3219 = vmatpush1.msra.mxu0 0.0
    %3220 = vmatprep.subr.mxu0 0.0
    %3221 = vmatpush1.msra.mxu0 0.0
    %3222 = vmatprep.subr.mxu0 0.0
    %3223 = vmatpush1.msra.mxu0 0.0
    %3224 = vmatprep.subr.mxu0 0.0
    %3225 = vmatpush1.msra.mxu0 0.0
    %3226 = vmatprep.subr.mxu0 0.0
    %3227 = vmatpush1.msra.mxu0 0.0
    %3228 = vmatprep.subr.mxu0 0.0
    %3229 = vmatpush1.msra.mxu0 0.0
    %3230 = vmatprep.subr.mxu0 0.0
    %3231 = vmatpush1.msra.mxu0 0.0
    %3232 = vmatprep.mubr.f32.mxu0 0.0
    %3233 = vmatmul.mubr.f32.gmra.mrb[0].mxu0 %v3005
    %v3234 = vpop.f32.mrb[0].mxu0
    %v3235 = vadd.f32 0.0, %v3234
    %v3236 = vpop.f32.mrb[0].mxu0
    %v3237 = vadd.f32 0.0, %v3236
    %3238 = vdwg.mxu0
    %3239 = vmatprep.subr.mxu0 %v3091
    %3240 = vmatpush1.msra.mxu0 %v3090
    %3241 = vmatprep.subr.mxu0 %v3096
    %3242 = vmatpush1.msra.mxu0 %v3095
    %3243 = vmatprep.subr.mxu0 %v3101
    %3244 = vmatpush1.msra.mxu0 %v3100
    %3245 = vmatprep.subr.mxu0 %v3106
    %3246 = vmatpush1.msra.mxu0 %v3105
    %3247 = vmatprep.subr.mxu0 %v3111
    %3248 = vmatpush1.msra.mxu0 %v3110
    %3249 = vmatprep.subr.mxu0 %v3116
    %3250 = vmatpush1.msra.mxu0 %v3115
    %3251 = vmatprep.subr.mxu0 %v3121
    %3252 = vmatpush1.msra.mxu0 %v3120
    %3253 = vmatprep.subr.mxu0 %v3126
    %3254 = vmatpush1.msra.mxu0 %v3125
    %3255 = vmatprep.subr.mxu0 %v3131
    %3256 = vmatpush1.msra.mxu0 %v3130
    %3257 = vmatprep.subr.mxu0 %v3136
    %3258 = vmatpush1.msra.mxu0 %v3135
    %3259 = vmatprep.subr.mxu0 %v3141
    %3260 = vmatpush1.msra.mxu0 %v3140
    %3261 = vmatprep.subr.mxu0 %v3146
    %3262 = vmatpush1.msra.mxu0 %v3145
    %3263 = vmatprep.subr.mxu0 %v3151
    %3264 = vmatpush1.msra.mxu0 %v3150
    %3265 = vmatprep.subr.mxu0 %v3156
    %3266 = vmatpush1.msra.mxu0 %v3155
    %3267 = vmatprep.subr.mxu0 %v3161
    %3268 = vmatpush1.msra.mxu0 %v3160
    %3269 = vmatprep.subr.mxu0 %v3166
    %3270 = vmatpush1.msra.mxu0 %v3165
    %3271 = vmatprep.subr.mxu0 0.0
    %3272 = vmatpush1.msra.mxu0 0.0
    %3273 = vmatprep.subr.mxu0 0.0
    %3274 = vmatpush1.msra.mxu0 0.0
    %3275 = vmatprep.subr.mxu0 0.0
    %3276 = vmatpush1.msra.mxu0 0.0
    %3277 = vmatprep.subr.mxu0 0.0
    %3278 = vmatpush1.msra.mxu0 0.0
    %3279 = vmatprep.subr.mxu0 0.0
    %3280 = vmatpush1.msra.mxu0 0.0
    %3281 = vmatprep.subr.mxu0 0.0
    %3282 = vmatpush1.msra.mxu0 0.0
    %3283 = vmatprep.subr.mxu0 0.0
    %3284 = vmatpush1.msra.mxu0 0.0
    %3285 = vmatprep.subr.mxu0 0.0
    %3286 = vmatpush1.msra.mxu0 0.0
    %3287 = vmatprep.subr.mxu0 0.0
    %3288 = vmatpush1.msra.mxu0 0.0
    %3289 = vmatprep.subr.mxu0 0.0
    %3290 = vmatpush1.msra.mxu0 0.0
    %3291 = vmatprep.subr.mxu0 0.0
    %3292 = vmatpush1.msra.mxu0 0.0
    %3293 = vmatprep.subr.mxu0 0.0
    %3294 = vmatpush1.msra.mxu0 0.0
    %3295 = vmatprep.subr.mxu0 0.0
    %3296 = vmatpush1.msra.mxu0 0.0
    %3297 = vmatprep.subr.mxu0 0.0
    %3298 = vmatpush1.msra.mxu0 0.0
    %3299 = vmatprep.subr.mxu0 0.0
    %3300 = vmatpush1.msra.mxu0 0.0
    %3301 = vmatprep.subr.mxu0 0.0
    %3302 = vmatpush1.msra.mxu0 0.0
    %3303 = vmatprep.mubr.f32.mxu0 0.0
    %3304 = vmatmul.mubr.f32.gmra.mrb[0].mxu0 %v3005
    %v3305 = vpop.f32.mrb[0].mxu0
    %v3306 = vadd.f32 0.0, %v3305
    %v3307 = vpop.f32.mrb[0].mxu0
    %v3308 = vadd.f32 0.0, %v3307
    %3309 = vdwg.mxu0
    %3310 = vmatprep.subr.mxu0 0.0
    %3311 = vmatpush1.msra.mxu0 %v3092
    %3312 = vmatprep.subr.mxu0 0.0
    %3313 = vmatpush1.msra.mxu0 %v3097
    %3314 = vmatprep.subr.mxu0 0.0
    %3315 = vmatpush1.msra.mxu0 %v3102
    %3316 = vmatprep.subr.mxu0 0.0
    %3317 = vmatpush1.msra.mxu0 %v3107
    %3318 = vmatprep.subr.mxu0 0.0
    %3319 = vmatpush1.msra.mxu0 %v3112
    %3320 = vmatprep.subr.mxu0 0.0
    %3321 = vmatpush1.msra.mxu0 %v3117
    %3322 = vmatprep.subr.mxu0 0.0
    %3323 = vmatpush1.msra.mxu0 %v3122
    %3324 = vmatprep.subr.mxu0 0.0
    %3325 = vmatpush1.msra.mxu0 %v3127
    %3326 = vmatprep.subr.mxu0 0.0
    %3327 = vmatpush1.msra.mxu0 %v3132
    %3328 = vmatprep.subr.mxu0 0.0
    %3329 = vmatpush1.msra.mxu0 %v3137
    %3330 = vmatprep.subr.mxu0 0.0
    %3331 = vmatpush1.msra.mxu0 %v3142
    %3332 = vmatprep.subr.mxu0 0.0
    %3333 = vmatpush1.msra.mxu0 %v3147
    %3334 = vmatprep.subr.mxu0 0.0
    %3335 = vmatpush1.msra.mxu0 %v3152
    %3336 = vmatprep.subr.mxu0 0.0
    %3337 = vmatpush1.msra.mxu0 %v3157
    %3338 = vmatprep.subr.mxu0 0.0
    %3339 = vmatpush1.msra.mxu0 %v3162
    %3340 = vmatprep.subr.mxu0 0.0
    %3341 = vmatpush1.msra.mxu0 %v3167
    %3342 = vmatprep.subr.mxu0 0.0
    %3343 = vmatpush1.msra.mxu0 0.0
    %3344 = vmatprep.subr.mxu0 0.0
    %3345 = vmatpush1.msra.mxu0 0.0
    %3346 = vmatprep.subr.mxu0 0.0
    %3347 = vmatpush1.msra.mxu0 0.0
    %3348 = vmatprep.subr.mxu0 0.0
    %3349 = vmatpush1.msra.mxu0 0.0
    %3350 = vmatprep.subr.mxu0 0.0
    %3351 = vmatpush1.msra.mxu0 0.0
    %3352 = vmatprep.subr.mxu0 0.0
    %3353 = vmatpush1.msra.mxu0 0.0
    %3354 = vmatprep.subr.mxu0 0.0
    %3355 = vmatpush1.msra.mxu0 0.0
    %3356 = vmatprep.subr.mxu0 0.0
    %3357 = vmatpush1.msra.mxu0 0.0
    %3358 = vmatprep.subr.mxu0 0.0
    %3359 = vmatpush1.msra.mxu0 0.0
    %3360 = vmatprep.subr.mxu0 0.0
    %3361 = vmatpush1.msra.mxu0 0.0
    %3362 = vmatprep.subr.mxu0 0.0
    %3363 = vmatpush1.msra.mxu0 0.0
    %3364 = vmatprep.subr.mxu0 0.0
    %3365 = vmatpush1.msra.mxu0 0.0
    %3366 = vmatprep.subr.mxu0 0.0
    %3367 = vmatpush1.msra.mxu0 0.0
    %3368 = vmatprep.subr.mxu0 0.0
    %3369 = vmatpush1.msra.mxu0 0.0
    %3370 = vmatprep.subr.mxu0 0.0
    %3371 = vmatpush1.msra.mxu0 0.0
    %3372 = vmatprep.subr.mxu0 0.0
    %3373 = vmatpush1.msra.mxu0 0.0
    %3374 = vmatprep.mubr.f32.mxu0 0.0
    %3375 = vmatmul.mubr.f32.gmra.mrb[0].mxu0 %v3005
    %v3376 = vpop.f32.mrb[0].mxu0
    %v3377 = vadd.f32 0.0, %v3376
    %v3378 = vpop.f32.mrb[0].mxu0
    %3379 = vdwg.mxu0
    %3380 = vmatprep.subr.mxu0 %v3008
    %3381 = vmatpush1.msra.mxu0 %v3007
    %3382 = vmatprep.subr.mxu0 %v3013
    %3383 = vmatpush1.msra.mxu0 %v3012
    %3384 = vmatprep.subr.mxu0 %v3018
    %3385 = vmatpush1.msra.mxu0 %v3017
    %3386 = vmatprep.subr.mxu0 %v3023
    %3387 = vmatpush1.msra.mxu0 %v3022
    %3388 = vmatprep.subr.mxu0 %v3028
    %3389 = vmatpush1.msra.mxu0 %v3027
    %3390 = vmatprep.subr.mxu0 %v3033
    %3391 = vmatpush1.msra.mxu0 %v3032
    %3392 = vmatprep.subr.mxu0 %v3038
    %3393 = vmatpush1.msra.mxu0 %v3037
    %3394 = vmatprep.subr.mxu0 %v3043
    %3395 = vmatpush1.msra.mxu0 %v3042
    %3396 = vmatprep.subr.mxu0 %v3048
    %3397 = vmatpush1.msra.mxu0 %v3047
    %3398 = vmatprep.subr.mxu0 %v3053
    %3399 = vmatpush1.msra.mxu0 %v3052
    %3400 = vmatprep.subr.mxu0 %v3058
    %3401 = vmatpush1.msra.mxu0 %v3057
    %3402 = vmatprep.subr.mxu0 %v3063
    %3403 = vmatpush1.msra.mxu0 %v3062
    %3404 = vmatprep.subr.mxu0 %v3068
    %3405 = vmatpush1.msra.mxu0 %v3067
    %3406 = vmatprep.subr.mxu0 %v3073
    %3407 = vmatpush1.msra.mxu0 %v3072
    %3408 = vmatprep.subr.mxu0 %v3078
    %3409 = vmatpush1.msra.mxu0 %v3077
    %3410 = vmatprep.subr.mxu0 %v3083
    %3411 = vmatpush1.msra.mxu0 %v3082
    %3412 = vmatprep.subr.mxu0 0.0
    %3413 = vmatpush1.msra.mxu0 0.0
    %3414 = vmatprep.subr.mxu0 0.0
    %3415 = vmatpush1.msra.mxu0 0.0
    %3416 = vmatprep.subr.mxu0 0.0
    %3417 = vmatpush1.msra.mxu0 0.0
    %3418 = vmatprep.subr.mxu0 0.0
    %3419 = vmatpush1.msra.mxu0 0.0
    %3420 = vmatprep.subr.mxu0 0.0
    %3421 = vmatpush1.msra.mxu0 0.0
    %3422 = vmatprep.subr.mxu0 0.0
    %3423 = vmatpush1.msra.mxu0 0.0
    %3424 = vmatprep.subr.mxu0 0.0
    %3425 = vmatpush1.msra.mxu0 0.0
    %3426 = vmatprep.subr.mxu0 0.0
    %3427 = vmatpush1.msra.mxu0 0.0
    %3428 = vmatprep.subr.mxu0 0.0
    %3429 = vmatpush1.msra.mxu0 0.0
    %3430 = vmatprep.subr.mxu0 0.0
    %3431 = vmatpush1.msra.mxu0 0.0
    %3432 = vmatprep.subr.mxu0 0.0
    %3433 = vmatpush1.msra.mxu0 0.0
    %3434 = vmatprep.subr.mxu0 0.0
    %3435 = vmatpush1.msra.mxu0 0.0
    %3436 = vmatprep.subr.mxu0 0.0
    %3437 = vmatpush1.msra.mxu0 0.0
    %3438 = vmatprep.subr.mxu0 0.0
    %3439 = vmatpush1.msra.mxu0 0.0
    %3440 = vmatprep.subr.mxu0 0.0
    %3441 = vmatpush1.msra.mxu0 0.0
    %3442 = vmatprep.subr.mxu0 0.0
    %3443 = vmatpush1.msra.mxu0 0.0
    %3444 = vmatprep.mubr.f32.mxu0 0.0
    %3445 = vmatmul.mubr.f32.gmra.mrb[0].mxu0 %v264
    %v3446 = vpop.f32.mrb[0].mxu0
    %v3447 = vadd.f32 %v3235, %v3446
    %v3448 = vpop.f32.mrb[0].mxu0
    %v3449 = vadd.f32 %v3237, %v3448
    %3450 = vdwg.mxu0
    %3451 = vmatprep.subr.mxu0 %v3010
    %3452 = vmatpush1.msra.mxu0 %v3009
    %3453 = vmatprep.subr.mxu0 %v3015
    %3454 = vmatpush1.msra.mxu0 %v3014
    %3455 = vmatprep.subr.mxu0 %v3020
    %3456 = vmatpush1.msra.mxu0 %v3019
    %3457 = vmatprep.subr.mxu0 %v3025
    %3458 = vmatpush1.msra.mxu0 %v3024
    %3459 = vmatprep.subr.mxu0 %v3030
    %3460 = vmatpush1.msra.mxu0 %v3029
    %3461 = vmatprep.subr.mxu0 %v3035
    %3462 = vmatpush1.msra.mxu0 %v3034
    %3463 = vmatprep.subr.mxu0 %v3040
    %3464 = vmatpush1.msra.mxu0 %v3039
    %3465 = vmatprep.subr.mxu0 %v3045
    %3466 = vmatpush1.msra.mxu0 %v3044
    %3467 = vmatprep.subr.mxu0 %v3050
    %3468 = vmatpush1.msra.mxu0 %v3049
    %3469 = vmatprep.subr.mxu0 %v3055
    %3470 = vmatpush1.msra.mxu0 %v3054
    %3471 = vmatprep.subr.mxu0 %v3060
    %3472 = vmatpush1.msra.mxu0 %v3059
    %3473 = vmatprep.subr.mxu0 %v3065
    %3474 = vmatpush1.msra.mxu0 %v3064
    %3475 = vmatprep.subr.mxu0 %v3070
    %3476 = vmatpush1.msra.mxu0 %v3069
    %3477 = vmatprep.subr.mxu0 %v3075
    %3478 = vmatpush1.msra.mxu0 %v3074
    %3479 = vmatprep.subr.mxu0 %v3080
    %3480 = vmatpush1.msra.mxu0 %v3079
    %3481 = vmatprep.subr.mxu0 %v3085
    %3482 = vmatpush1.msra.mxu0 %v3084
    %3483 = vmatprep.subr.mxu0 0.0
    %3484 = vmatpush1.msra.mxu0 0.0
    %3485 = vmatprep.subr.mxu0 0.0
    %3486 = vmatpush1.msra.mxu0 0.0
    %3487 = vmatprep.subr.mxu0 0.0
    %3488 = vmatpush1.msra.mxu0 0.0
    %3489 = vmatprep.subr.mxu0 0.0
    %3490 = vmatpush1.msra.mxu0 0.0
    %3491 = vmatprep.subr.mxu0 0.0
    %3492 = vmatpush1.msra.mxu0 0.0
    %3493 = vmatprep.subr.mxu0 0.0
    %3494 = vmatpush1.msra.mxu0 0.0
    %3495 = vmatprep.subr.mxu0 0.0
    %3496 = vmatpush1.msra.mxu0 0.0
    %3497 = vmatprep.subr.mxu0 0.0
    %3498 = vmatpush1.msra.mxu0 0.0
    %3499 = vmatprep.subr.mxu0 0.0
    %3500 = vmatpush1.msra.mxu0 0.0
    %3501 = vmatprep.subr.mxu0 0.0
    %3502 = vmatpush1.msra.mxu0 0.0
    %3503 = vmatprep.subr.mxu0 0.0
    %3504 = vmatpush1.msra.mxu0 0.0
    %3505 = vmatprep.subr.mxu0 0.0
    %3506 = vmatpush1.msra.mxu0 0.0
    %3507 = vmatprep.subr.mxu0 0.0
    %3508 = vmatpush1.msra.mxu0 0.0
    %3509 = vmatprep.subr.mxu0 0.0
    %3510 = vmatpush1.msra.mxu0 0.0
    %3511 = vmatprep.subr.mxu0 0.0
    %3512 = vmatpush1.msra.mxu0 0.0
    %3513 = vmatprep.subr.mxu0 0.0
    %3514 = vmatpush1.msra.mxu0 0.0
    %3515 = vmatprep.mubr.f32.mxu0 0.0
    %3516 = vmatmul.mubr.f32.gmra.mrb[0].mxu0 %v264
    %v3517 = vpop.f32.mrb[0].mxu0
    %v3518 = vadd.f32 %v3306, %v3517
    %v3519 = vpop.f32.mrb[0].mxu0
    %v3520 = vadd.f32 %v3308, %v3519
    %3521 = vdwg.mxu0
    %3522 = vmatprep.subr.mxu0 0.0
    %3523 = vmatpush1.msra.mxu0 %v3011
    %3524 = vmatprep.subr.mxu0 0.0
    %3525 = vmatpush1.msra.mxu0 %v3016
    %3526 = vmatprep.subr.mxu0 0.0
    %3527 = vmatpush1.msra.mxu0 %v3021
    %3528 = vmatprep.subr.mxu0 0.0
    %3529 = vmatpush1.msra.mxu0 %v3026
    %3530 = vmatprep.subr.mxu0 0.0
    %3531 = vmatpush1.msra.mxu0 %v3031
    %3532 = vmatprep.subr.mxu0 0.0
    %3533 = vmatpush1.msra.mxu0 %v3036
    %3534 = vmatprep.subr.mxu0 0.0
    %3535 = vmatpush1.msra.mxu0 %v3041
    %3536 = vmatprep.subr.mxu0 0.0
    %3537 = vmatpush1.msra.mxu0 %v3046
    %3538 = vmatprep.subr.mxu0 0.0
    %3539 = vmatpush1.msra.mxu0 %v3051
    %3540 = vmatprep.subr.mxu0 0.0
    %3541 = vmatpush1.msra.mxu0 %v3056
    %3542 = vmatprep.subr.mxu0 0.0
    %3543 = vmatpush1.msra.mxu0 %v3061
    %3544 = vmatprep.subr.mxu0 0.0
    %3545 = vmatpush1.msra.mxu0 %v3066
    %3546 = vmatprep.subr.mxu0 0.0
    %3547 = vmatpush1.msra.mxu0 %v3071
    %3548 = vmatprep.subr.mxu0 0.0
    %3549 = vmatpush1.msra.mxu0 %v3076
    %3550 = vmatprep.subr.mxu0 0.0
    %3551 = vmatpush1.msra.mxu0 %v3081
    %3552 = vmatprep.subr.mxu0 0.0
    %3553 = vmatpush1.msra.mxu0 %v3086
    %3554 = vmatprep.subr.mxu0 0.0
    %3555 = vmatpush1.msra.mxu0 0.0
    %3556 = vmatprep.subr.mxu0 0.0
    %3557 = vmatpush1.msra.mxu0 0.0
    %3558 = vmatprep.subr.mxu0 0.0
    %3559 = vmatpush1.msra.mxu0 0.0
    %3560 = vmatprep.subr.mxu0 0.0
    %3561 = vmatpush1.msra.mxu0 0.0
    %3562 = vmatprep.subr.mxu0 0.0
    %3563 = vmatpush1.msra.mxu0 0.0
    %3564 = vmatprep.subr.mxu0 0.0
    %3565 = vmatpush1.msra.mxu0 0.0
    %3566 = vmatprep.subr.mxu0 0.0
    %3567 = vmatpush1.msra.mxu0 0.0
    %3568 = vmatprep.subr.mxu0 0.0
    %3569 = vmatpush1.msra.mxu0 0.0
    %3570 = vmatprep.subr.mxu0 0.0
    %3571 = vmatpush1.msra.mxu0 0.0
    %3572 = vmatprep.subr.mxu0 0.0
    %3573 = vmatpush1.msra.mxu0 0.0
    %3574 = vmatprep.subr.mxu0 0.0
    %3575 = vmatpush1.msra.mxu0 0.0
    %3576 = vmatprep.subr.mxu0 0.0
    %3577 = vmatpush1.msra.mxu0 0.0
    %3578 = vmatprep.subr.mxu0 0.0
    %3579 = vmatpush1.msra.mxu0 0.0
    %3580 = vmatprep.subr.mxu0 0.0
    %3581 = vmatpush1.msra.mxu0 0.0
    %3582 = vmatprep.subr.mxu0 0.0
    %3583 = vmatpush1.msra.mxu0 0.0
    %3584 = vmatprep.subr.mxu0 0.0
    %3585 = vmatpush1.msra.mxu0 0.0
    %3586 = vmatprep.mubr.f32.mxu0 0.0
    %3587 = vmatmul.mubr.f32.gmra.mrb[0].mxu0 %v264
    %v3588 = vpop.f32.mrb[0].mxu0
    %v3589 = vadd.f32 %v3377, %v3588
    %v3590 = vpop.f32.mrb[0].mxu0
    %3591 = vdwg.mxu0
    %s3592 = scalar_lea.vmem [#allocation13], 5120
    %v3593 = vld [vmem:[%s3592] sm:$0xff]
    %v3594 = vld [vmem:[%s3592 + $0x8] sm:$0xff]
    %v3595 = vld [vmem:[%s3592 + $0x10] sm:$0xff]
    %v3596 = vld [vmem:[%s3592 + $0x18] sm:$0xff]
    %v3597 = vld [vmem:[%s3592 + $0x20] sm:$0xff]
    %v3598 = vld [vmem:[%s3592 + $0x28] sm:$0xff]
    %v3599 = vld [vmem:[%s3592 + $0x30] sm:$0xff]
    %v3600 = vld [vmem:[%s3592 + $0x38] sm:$0xff]
    %v3601 = vld [vmem:[%s3592 + $0x40] sm:$0xff]
    %v3602 = vld [vmem:[%s3592 + $0x48] sm:$0xff]
    %v3603 = vld [vmem:[%s3592 + $0x50] sm:$0xff]
    %v3604 = vld [vmem:[%s3592 + $0x58] sm:$0xff]
    %v3605 = vld [vmem:[%s3592 + $0x60] sm:$0xff]
    %v3606 = vld [vmem:[%s3592 + $0x68] sm:$0xff]
    %v3607 = vld [vmem:[%s3592 + $0x70] sm:$0xff]
    %v3608 = vld [vmem:[%s3592 + $0x78] sm:$0xff]
    %v3609 = vld [vmem:[%s3592 + $0x80] sm:$0xff]
    %v3610 = vld [vmem:[%s3592 + $0x88] sm:$0xff]
    %v3611 = vld [vmem:[%s3592 + $0x90] sm:$0xff]
    %v3612 = vld [vmem:[%s3592 + $0x98] sm:$0xff]
    %v3613 = vld [vmem:[%s3592 + $0xa0] sm:$0xff]
    %v3614 = vld [vmem:[%s3592 + $0xa8] sm:$0xff]
    %v3615 = vld [vmem:[%s3592 + $0xb0] sm:$0xff]
    %v3616 = vld [vmem:[%s3592 + $0xb8] sm:$0xff]
    %v3617 = vld [vmem:[%s3592 + $0xc0] sm:$0xff]
    %v3618 = vld [vmem:[%s3592 + $0xc8] sm:$0xff]
    %v3619 = vld [vmem:[%s3592 + $0xd0] sm:$0xff]
    %v3620 = vld [vmem:[%s3592 + $0xd8] sm:$0xff]
    %v3621 = vld [vmem:[%s3592 + $0xe0] sm:$0xff]
    %v3622 = vld [vmem:[%s3592 + $0xe8] sm:$0xff]
    %v3623 = vld [vmem:[%s3592 + $0xf0] sm:$0xff]
    %v3624 = vld [vmem:[%s3592 + $0xf8] sm:$0xff]
    %v3625 = vld [vmem:[%s3592 + $0x100] sm:$0xff]
    %v3626 = vld [vmem:[%s3592 + $0x108] sm:$0xff]
    %v3627 = vld [vmem:[%s3592 + $0x110] sm:$0xff]
    %v3628 = vld [vmem:[%s3592 + $0x118] sm:$0xff]
    %v3629 = vld [vmem:[%s3592 + $0x120] sm:$0xff]
    %v3630 = vld [vmem:[%s3592 + $0x128] sm:$0xff]
    %v3631 = vld [vmem:[%s3592 + $0x130] sm:$0xff]
    %v3632 = vld [vmem:[%s3592 + $0x138] sm:$0xff]
    %v3633 = vld [vmem:[%s3592 + $0x140] sm:$0xff]
    %v3634 = vld [vmem:[%s3592 + $0x148] sm:$0xff]
    %v3635 = vld [vmem:[%s3592 + $0x150] sm:$0xff]
    %v3636 = vld [vmem:[%s3592 + $0x158] sm:$0xff]
    %v3637 = vld [vmem:[%s3592 + $0x160] sm:$0xff]
    %v3638 = vld [vmem:[%s3592 + $0x168] sm:$0xff]
    %v3639 = vld [vmem:[%s3592 + $0x170] sm:$0xff]
    %v3640 = vld [vmem:[%s3592 + $0x178] sm:$0xff]
    %v3641 = vld [vmem:[%s3592 + $0x180] sm:$0xff]
    %v3642 = vld [vmem:[%s3592 + $0x188] sm:$0xff]
    %v3643 = vld [vmem:[%s3592 + $0x190] sm:$0xff]
    %v3644 = vld [vmem:[%s3592 + $0x198] sm:$0xff]
    %v3645 = vld [vmem:[%s3592 + $0x1a0] sm:$0xff]
    %v3646 = vld [vmem:[%s3592 + $0x1a8] sm:$0xff]
    %v3647 = vld [vmem:[%s3592 + $0x1b0] sm:$0xff]
    %v3648 = vld [vmem:[%s3592 + $0x1b8] sm:$0xff]
    %v3649 = vld [vmem:[%s3592 + $0x1c0] sm:$0xff]
    %v3650 = vld [vmem:[%s3592 + $0x1c8] sm:$0xff]
    %v3651 = vld [vmem:[%s3592 + $0x1d0] sm:$0xff]
    %v3652 = vld [vmem:[%s3592 + $0x1d8] sm:$0xff]
    %v3653 = vld [vmem:[%s3592 + $0x1e0] sm:$0xff]
    %v3654 = vld [vmem:[%s3592 + $0x1e8] sm:$0xff]
    %v3655 = vld [vmem:[%s3592 + $0x1f0] sm:$0xff]
    %v3656 = vld [vmem:[%s3592 + $0x1f8] sm:$0xff]
    %v3657 = vld [vmem:[%s3592 + $0x200] sm:$0xff]
    %v3658 = vld [vmem:[%s3592 + $0x208] sm:$0xff]
    %v3659 = vld [vmem:[%s3592 + $0x210] sm:$0xff]
    %v3660 = vld [vmem:[%s3592 + $0x218] sm:$0xff]
    %v3661 = vld [vmem:[%s3592 + $0x220] sm:$0xff]
    %v3662 = vld [vmem:[%s3592 + $0x228] sm:$0xff]
    %v3663 = vld [vmem:[%s3592 + $0x230] sm:$0xff]
    %v3664 = vld [vmem:[%s3592 + $0x238] sm:$0xff]
    %v3665 = vld [vmem:[%s3592 + $0x240] sm:$0xff]
    %v3666 = vld [vmem:[%s3592 + $0x248] sm:$0xff]
    %v3667 = vld [vmem:[%s3592 + $0x250] sm:$0xff]
    %v3668 = vld [vmem:[%s3592 + $0x258] sm:$0xff]
    %v3669 = vld [vmem:[%s3592 + $0x260] sm:$0xff]
    %v3670 = vld [vmem:[%s3592 + $0x268] sm:$0xff]
    %v3671 = vld [vmem:[%s3592 + $0x270] sm:$0xff]
    %v3672 = vld [vmem:[%s3592 + $0x278] sm:$0xff]
    %3673 = vmatprep.subr.mxu0 %v3594
    %3674 = vmatpush1.msra.mxu0 %v3593
    %3675 = vmatprep.subr.mxu0 %v3599
    %3676 = vmatpush1.msra.mxu0 %v3598
    %3677 = vmatprep.subr.mxu0 %v3604
    %3678 = vmatpush1.msra.mxu0 %v3603
    %3679 = vmatprep.subr.mxu0 %v3609
    %3680 = vmatpush1.msra.mxu0 %v3608
    %3681 = vmatprep.subr.mxu0 %v3614
    %3682 = vmatpush1.msra.mxu0 %v3613
    %3683 = vmatprep.subr.mxu0 %v3619
    %3684 = vmatpush1.msra.mxu0 %v3618
    %3685 = vmatprep.subr.mxu0 %v3624
    %3686 = vmatpush1.msra.mxu0 %v3623
    %3687 = vmatprep.subr.mxu0 %v3629
    %3688 = vmatpush1.msra.mxu0 %v3628
    %3689 = vmatprep.subr.mxu0 %v3634
    %3690 = vmatpush1.msra.mxu0 %v3633
    %3691 = vmatprep.subr.mxu0 %v3639
    %3692 = vmatpush1.msra.mxu0 %v3638
    %3693 = vmatprep.subr.mxu0 %v3644
    %3694 = vmatpush1.msra.mxu0 %v3643
    %3695 = vmatprep.subr.mxu0 %v3649
    %3696 = vmatpush1.msra.mxu0 %v3648
    %3697 = vmatprep.subr.mxu0 %v3654
    %3698 = vmatpush1.msra.mxu0 %v3653
    %3699 = vmatprep.subr.mxu0 %v3659
    %3700 = vmatpush1.msra.mxu0 %v3658
    %3701 = vmatprep.subr.mxu0 %v3664
    %3702 = vmatpush1.msra.mxu0 %v3663
    %3703 = vmatprep.subr.mxu0 %v3669
    %3704 = vmatpush1.msra.mxu0 %v3668
    %3705 = vmatprep.subr.mxu0 0.0
    %3706 = vmatpush1.msra.mxu0 0.0
    %3707 = vmatprep.subr.mxu0 0.0
    %3708 = vmatpush1.msra.mxu0 0.0
    %3709 = vmatprep.subr.mxu0 0.0
    %3710 = vmatpush1.msra.mxu0 0.0
    %3711 = vmatprep.subr.mxu0 0.0
    %3712 = vmatpush1.msra.mxu0 0.0
    %3713 = vmatprep.subr.mxu0 0.0
    %3714 = vmatpush1.msra.mxu0 0.0
    %3715 = vmatprep.subr.mxu0 0.0
    %3716 = vmatpush1.msra.mxu0 0.0
    %3717 = vmatprep.subr.mxu0 0.0
    %3718 = vmatpush1.msra.mxu0 0.0
    %3719 = vmatprep.subr.mxu0 0.0
    %3720 = vmatpush1.msra.mxu0 0.0
    %3721 = vmatprep.subr.mxu0 0.0
    %3722 = vmatpush1.msra.mxu0 0.0
    %3723 = vmatprep.subr.mxu0 0.0
    %3724 = vmatpush1.msra.mxu0 0.0
    %3725 = vmatprep.subr.mxu0 0.0
    %3726 = vmatpush1.msra.mxu0 0.0
    %3727 = vmatprep.subr.mxu0 0.0
    %3728 = vmatpush1.msra.mxu0 0.0
    %3729 = vmatprep.subr.mxu0 0.0
    %3730 = vmatpush1.msra.mxu0 0.0
    %3731 = vmatprep.subr.mxu0 0.0
    %3732 = vmatpush1.msra.mxu0 0.0
    %3733 = vmatprep.subr.mxu0 0.0
    %3734 = vmatpush1.msra.mxu0 0.0
    %3735 = vmatprep.subr.mxu0 0.0
    %3736 = vmatpush1.msra.mxu0 0.0
    %3737 = vmatprep.mubr.f32.mxu0 0.0
    %3738 = vmatmul.mubr.f32.gmra.mrb[0].mxu0 %v2934
    %v3739 = vpop.f32.mrb[0].mxu0
    %v3740 = vadd.f32 0.0, %v3739
    %v3741 = vpop.f32.mrb[0].mxu0
    %v3742 = vadd.f32 0.0, %v3741
    %3743 = vdwg.mxu0
    %3744 = vmatprep.subr.mxu0 %v3596
    %3745 = vmatpush1.msra.mxu0 %v3595
    %3746 = vmatprep.subr.mxu0 %v3601
    %3747 = vmatpush1.msra.mxu0 %v3600
    %3748 = vmatprep.subr.mxu0 %v3606
    %3749 = vmatpush1.msra.mxu0 %v3605
    %3750 = vmatprep.subr.mxu0 %v3611
    %3751 = vmatpush1.msra.mxu0 %v3610
    %3752 = vmatprep.subr.mxu0 %v3616
    %3753 = vmatpush1.msra.mxu0 %v3615
    %3754 = vmatprep.subr.mxu0 %v3621
    %3755 = vmatpush1.msra.mxu0 %v3620
    %3756 = vmatprep.subr.mxu0 %v3626
    %3757 = vmatpush1.msra.mxu0 %v3625
    %3758 = vmatprep.subr.mxu0 %v3631
    %3759 = vmatpush1.msra.mxu0 %v3630
    %3760 = vmatprep.subr.mxu0 %v3636
    %3761 = vmatpush1.msra.mxu0 %v3635
    %3762 = vmatprep.subr.mxu0 %v3641
    %3763 = vmatpush1.msra.mxu0 %v3640
    %3764 = vmatprep.subr.mxu0 %v3646
    %3765 = vmatpush1.msra.mxu0 %v3645
    %3766 = vmatprep.subr.mxu0 %v3651
    %3767 = vmatpush1.msra.mxu0 %v3650
    %3768 = vmatprep.subr.mxu0 %v3656
    %3769 = vmatpush1.msra.mxu0 %v3655
    %3770 = vmatprep.subr.mxu0 %v3661
    %3771 = vmatpush1.msra.mxu0 %v3660
    %3772 = vmatprep.subr.mxu0 %v3666
    %3773 = vmatpush1.msra.mxu0 %v3665
    %3774 = vmatprep.subr.mxu0 %v3671
    %3775 = vmatpush1.msra.mxu0 %v3670
    %3776 = vmatprep.subr.mxu0 0.0
    %3777 = vmatpush1.msra.mxu0 0.0
    %3778 = vmatprep.subr.mxu0 0.0
    %3779 = vmatpush1.msra.mxu0 0.0
    %3780 = vmatprep.subr.mxu0 0.0
    %3781 = vmatpush1.msra.mxu0 0.0
    %3782 = vmatprep.subr.mxu0 0.0
    %3783 = vmatpush1.msra.mxu0 0.0
    %3784 = vmatprep.subr.mxu0 0.0
    %3785 = vmatpush1.msra.mxu0 0.0
    %3786 = vmatprep.subr.mxu0 0.0
    %3787 = vmatpush1.msra.mxu0 0.0
    %3788 = vmatprep.subr.mxu0 0.0
    %3789 = vmatpush1.msra.mxu0 0.0
    %3790 = vmatprep.subr.mxu0 0.0
    %3791 = vmatpush1.msra.mxu0 0.0
    %3792 = vmatprep.subr.mxu0 0.0
    %3793 = vmatpush1.msra.mxu0 0.0
    %3794 = vmatprep.subr.mxu0 0.0
    %3795 = vmatpush1.msra.mxu0 0.0
    %3796 = vmatprep.subr.mxu0 0.0
    %3797 = vmatpush1.msra.mxu0 0.0
    %3798 = vmatprep.subr.mxu0 0.0
    %3799 = vmatpush1.msra.mxu0 0.0
    %3800 = vmatprep.subr.mxu0 0.0
    %3801 = vmatpush1.msra.mxu0 0.0
    %3802 = vmatprep.subr.mxu0 0.0
    %3803 = vmatpush1.msra.mxu0 0.0
    %3804 = vmatprep.subr.mxu0 0.0
    %3805 = vmatpush1.msra.mxu0 0.0
    %3806 = vmatprep.subr.mxu0 0.0
    %3807 = vmatpush1.msra.mxu0 0.0
    %3808 = vmatprep.mubr.f32.mxu0 0.0
    %3809 = vmatmul.mubr.f32.gmra.mrb[0].mxu0 %v2934
    %v3810 = vpop.f32.mrb[0].mxu0
    %v3811 = vadd.f32 0.0, %v3810
    %v3812 = vpop.f32.mrb[0].mxu0
    %v3813 = vadd.f32 0.0, %v3812
    %3814 = vdwg.mxu0
    %3815 = vmatprep.subr.mxu0 0.0
    %3816 = vmatpush1.msra.mxu0 %v3597
    %3817 = vmatprep.subr.mxu0 0.0
    %3818 = vmatpush1.msra.mxu0 %v3602
    %3819 = vmatprep.subr.mxu0 0.0
    %3820 = vmatpush1.msra.mxu0 %v3607
    %3821 = vmatprep.subr.mxu0 0.0
    %3822 = vmatpush1.msra.mxu0 %v3612
    %3823 = vmatprep.subr.mxu0 0.0
    %3824 = vmatpush1.msra.mxu0 %v3617
    %3825 = vmatprep.subr.mxu0 0.0
    %3826 = vmatpush1.msra.mxu0 %v3622
    %3827 = vmatprep.subr.mxu0 0.0
    %3828 = vmatpush1.msra.mxu0 %v3627
    %3829 = vmatprep.subr.mxu0 0.0
    %3830 = vmatpush1.msra.mxu0 %v3632
    %3831 = vmatprep.subr.mxu0 0.0
    %3832 = vmatpush1.msra.mxu0 %v3637
    %3833 = vmatprep.subr.mxu0 0.0
    %3834 = vmatpush1.msra.mxu0 %v3642
    %3835 = vmatprep.subr.mxu0 0.0
    %3836 = vmatpush1.msra.mxu0 %v3647
    %3837 = vmatprep.subr.mxu0 0.0
    %3838 = vmatpush1.msra.mxu0 %v3652
    %3839 = vmatprep.subr.mxu0 0.0
    %3840 = vmatpush1.msra.mxu0 %v3657
    %3841 = vmatprep.subr.mxu0 0.0
    %3842 = vmatpush1.msra.mxu0 %v3662
    %3843 = vmatprep.subr.mxu0 0.0
    %3844 = vmatpush1.msra.mxu0 %v3667
    %3845 = vmatprep.subr.mxu0 0.0
    %3846 = vmatpush1.msra.mxu0 %v3672
    %3847 = vmatprep.subr.mxu0 0.0
    %3848 = vmatpush1.msra.mxu0 0.0
    %3849 = vmatprep.subr.mxu0 0.0
    %3850 = vmatpush1.msra.mxu0 0.0
    %3851 = vmatprep.subr.mxu0 0.0
    %3852 = vmatpush1.msra.mxu0 0.0
    %3853 = vmatprep.subr.mxu0 0.0
    %3854 = vmatpush1.msra.mxu0 0.0
    %3855 = vmatprep.subr.mxu0 0.0
    %3856 = vmatpush1.msra.mxu0 0.0
    %3857 = vmatprep.subr.mxu0 0.0
    %3858 = vmatpush1.msra.mxu0 0.0
    %3859 = vmatprep.subr.mxu0 0.0
    %3860 = vmatpush1.msra.mxu0 0.0
    %3861 = vmatprep.subr.mxu0 0.0
    %3862 = vmatpush1.msra.mxu0 0.0
    %3863 = vmatprep.subr.mxu0 0.0
    %3864 = vmatpush1.msra.mxu0 0.0
    %3865 = vmatprep.subr.mxu0 0.0
    %3866 = vmatpush1.msra.mxu0 0.0
    %3867 = vmatprep.subr.mxu0 0.0
    %3868 = vmatpush1.msra.mxu0 0.0
    %3869 = vmatprep.subr.mxu0 0.0
    %3870 = vmatpush1.msra.mxu0 0.0
    %3871 = vmatprep.subr.mxu0 0.0
    %3872 = vmatpush1.msra.mxu0 0.0
    %3873 = vmatprep.subr.mxu0 0.0
    %3874 = vmatpush1.msra.mxu0 0.0
    %3875 = vmatprep.subr.mxu0 0.0
    %3876 = vmatpush1.msra.mxu0 0.0
    %3877 = vmatprep.subr.mxu0 0.0
    %3878 = vmatpush1.msra.mxu0 0.0
    %3879 = vmatprep.mubr.f32.mxu0 0.0
    %3880 = vmatmul.mubr.f32.gmra.mrb[0].mxu0 %v2934
    %v3881 = vpop.f32.mrb[0].mxu0
    %v3882 = vadd.f32 0.0, %v3881
    %v3883 = vpop.f32.mrb[0].mxu0
    %3884 = vdwg.mxu0
    %v3885 = vadd.f32 %v3447, %v3740
    %v3886 = vadd.f32 %v3449, %v3742
    %v3887 = vadd.f32 %v3518, %v3811
    %v3888 = vadd.f32 %v3520, %v3813
    %v3889 = vadd.f32 %v3589, %v3882
    %s3890 = scalar_lea.vmem [#allocation14], 10
    %v3891 = vld [vmem:[%s3890] sm:$0x1f]
    %v3893 = vlaneseq
    %v3894 = vshrl.u32 %v3893, 7
    %v3895 = vsub.s32 0, %v3894
    %v3896 = vrot.slane %v3891, %v3895
    %v3897 = vlaneseq
    %v3898 = vshrl.u32 %v3897, 7
    %v3899 = vsub.s32 1, %v3898
    %v3900 = vrot.slane %v3891, %v3899
    %v3901 = vlaneseq
    %v3902 = vshrl.u32 %v3901, 7
    %v3903 = vsub.s32 2, %v3902
    %v3904 = vrot.slane %v3891, %v3903
    %v3905 = vlaneseq
    %v3906 = vshrl.u32 %v3905, 7
    %v3907 = vsub.s32 3, %v3906
    %v3908 = vrot.slane %v3891, %v3907
    %v3909 = vlaneseq
    %v3910 = vshrl.u32 %v3909, 7
    %v3911 = vsub.s32 4, %v3910
    %v3912 = vrot.slane %v3891, %v3911
    %v3918 = vadd.f32 %v3885, %v3896
    %v3919 = vadd.f32 %v3886, %v3900
    %v3920 = vadd.f32 %v3887, %v3904
    %v3921 = vadd.f32 %v3888, %v3908
    %v3922 = vadd.f32 %v3889, %v3912
    %v3923 = vxor.u32 %v3918, 2147483648
    %v3924 = vmul.f32 %v3923, 1.442695
    %v3925 = vpow.pop %v3924
    %v3926 = vadd.f32 %v3925, 1.0
    %v3927 = vrcp.pop %v3926
    %v3928 = vmul.f32 1.0, %v3927
    %v3929 = vxor.u32 %v3919, 2147483648
    %v3930 = vmul.f32 %v3929, 1.442695
    %v3931 = vpow.pop %v3930
    %v3932 = vadd.f32 %v3931, 1.0
    %v3933 = vrcp.pop %v3932
    %v3934 = vmul.f32 1.0, %v3933
    %v3935 = vxor.u32 %v3920, 2147483648
    %v3936 = vmul.f32 %v3935, 1.442695
    %v3937 = vpow.pop %v3936
    %v3938 = vadd.f32 %v3937, 1.0
    %v3939 = vrcp.pop %v3938
    %v3940 = vmul.f32 1.0, %v3939
    %v3941 = vxor.u32 %v3921, 2147483648
    %v3942 = vmul.f32 %v3941, 1.442695
    %v3943 = vpow.pop %v3942
    %v3944 = vadd.f32 %v3943, 1.0
    %v3945 = vrcp.pop %v3944
    %v3946 = vmul.f32 1.0, %v3945
    %v3947 = vmul.f32 %v3934, %v264
    %s3948 = scalar_lea.vmem [#allocation16], 768
    %v3949 = vld [vmem:[%s3948] sm:$0xff]
    %v3950 = vld [vmem:[%s3948 + $0x8] sm:$0xff]
    %v3951 = vld [vmem:[%s3948 + $0x10] sm:$0xff]
    %v3952 = vld [vmem:[%s3948 + $0x18] sm:$0xff]
    %v3953 = vld [vmem:[%s3948 + $0x20] sm:$0xff]
    %v3954 = vld [vmem:[%s3948 + $0x28] sm:$0xff]
    %v3955 = vld [vmem:[%s3948 + $0x30] sm:$0xff]
    %v3956 = vld [vmem:[%s3948 + $0x38] sm:$0xff]
    %v3957 = vld [vmem:[%s3948 + $0x40] sm:$0xff]
    %v3958 = vld [vmem:[%s3948 + $0x48] sm:$0xff]
    %v3959 = vld [vmem:[%s3948 + $0x50] sm:$0xff]
    %v3960 = vld [vmem:[%s3948 + $0x58] sm:$0xff]
    %v3961 = vld [vmem:[%s3948 + $0x60] sm:$0xff]
    %v3962 = vld [vmem:[%s3948 + $0x68] sm:$0xff]
    %v3963 = vld [vmem:[%s3948 + $0x70] sm:$0xff]
    %v3964 = vld [vmem:[%s3948 + $0x78] sm:$0xff]
    %v3965 = vmul.f32 %v3928, %v3005
    %s3966 = scalar_lea.vmem [#allocation16], 896
    %v3967 = vld [vmem:[%s3966] sm:$0xff]
    %v3968 = vld [vmem:[%s3966 + $0x8] sm:$0xff]
    %v3969 = vld [vmem:[%s3966 + $0x10] sm:$0xff]
    %v3970 = vld [vmem:[%s3966 + $0x18] sm:$0xff]
    %v3971 = vld [vmem:[%s3966 + $0x20] sm:$0xff]
    %v3972 = vld [vmem:[%s3966 + $0x28] sm:$0xff]
    %v3973 = vld [vmem:[%s3966 + $0x30] sm:$0xff]
    %v3974 = vld [vmem:[%s3966 + $0x38] sm:$0xff]
    %v3975 = vld [vmem:[%s3966 + $0x40] sm:$0xff]
    %v3976 = vld [vmem:[%s3966 + $0x48] sm:$0xff]
    %v3977 = vld [vmem:[%s3966 + $0x50] sm:$0xff]
    %v3978 = vld [vmem:[%s3966 + $0x58] sm:$0xff]
    %v3979 = vld [vmem:[%s3966 + $0x60] sm:$0xff]
    %v3980 = vld [vmem:[%s3966 + $0x68] sm:$0xff]
    %v3981 = vld [vmem:[%s3966 + $0x70] sm:$0xff]
    %v3982 = vld [vmem:[%s3966 + $0x78] sm:$0xff]
    %3983 = vmatprep.subr.mxu0 0.0
    %3984 = vmatpush1.msra.mxu0 %v3967
    %3985 = vmatprep.subr.mxu0 0.0
    %3986 = vmatpush1.msra.mxu0 %v3968
    %3987 = vmatprep.subr.mxu0 0.0
    %3988 = vmatpush1.msra.mxu0 %v3969
    %3989 = vmatprep.subr.mxu0 0.0
    %3990 = vmatpush1.msra.mxu0 %v3970
    %3991 = vmatprep.subr.mxu0 0.0
    %3992 = vmatpush1.msra.mxu0 %v3971
    %3993 = vmatprep.subr.mxu0 0.0
    %3994 = vmatpush1.msra.mxu0 %v3972
    %3995 = vmatprep.subr.mxu0 0.0
    %3996 = vmatpush1.msra.mxu0 %v3973
    %3997 = vmatprep.subr.mxu0 0.0
    %3998 = vmatpush1.msra.mxu0 %v3974
    %3999 = vmatprep.subr.mxu0 0.0
    %4000 = vmatpush1.msra.mxu0 %v3975
    %4001 = vmatprep.subr.mxu0 0.0
    %4002 = vmatpush1.msra.mxu0 %v3976
    %4003 = vmatprep.subr.mxu0 0.0
    %4004 = vmatpush1.msra.mxu0 %v3977
    %4005 = vmatprep.subr.mxu0 0.0
    %4006 = vmatpush1.msra.mxu0 %v3978
    %4007 = vmatprep.subr.mxu0 0.0
    %4008 = vmatpush1.msra.mxu0 %v3979
    %4009 = vmatprep.subr.mxu0 0.0
    %4010 = vmatpush1.msra.mxu0 %v3980
    %4011 = vmatprep.subr.mxu0 0.0
    %4012 = vmatpush1.msra.mxu0 %v3981
    %4013 = vmatprep.subr.mxu0 0.0
    %4014 = vmatpush1.msra.mxu0 %v3982
    %4015 = vmatprep.subr.mxu0 0.0
    %4016 = vmatpush1.msra.mxu0 0.0
    %4017 = vmatprep.subr.mxu0 0.0
    %4018 = vmatpush1.msra.mxu0 0.0
    %4019 = vmatprep.subr.mxu0 0.0
    %4020 = vmatpush1.msra.mxu0 0.0
    %4021 = vmatprep.subr.mxu0 0.0
    %4022 = vmatpush1.msra.mxu0 0.0
    %4023 = vmatprep.subr.mxu0 0.0
    %4024 = vmatpush1.msra.mxu0 0.0
    %4025 = vmatprep.subr.mxu0 0.0
    %4026 = vmatpush1.msra.mxu0 0.0
    %4027 = vmatprep.subr.mxu0 0.0
    %4028 = vmatpush1.msra.mxu0 0.0
    %4029 = vmatprep.subr.mxu0 0.0
    %4030 = vmatpush1.msra.mxu0 0.0
    %4031 = vmatprep.subr.mxu0 0.0
    %4032 = vmatpush1.msra.mxu0 0.0
    %4033 = vmatprep.subr.mxu0 0.0
    %4034 = vmatpush1.msra.mxu0 0.0
    %4035 = vmatprep.subr.mxu0 0.0
    %4036 = vmatpush1.msra.mxu0 0.0
    %4037 = vmatprep.subr.mxu0 0.0
    %4038 = vmatpush1.msra.mxu0 0.0
    %4039 = vmatprep.subr.mxu0 0.0
    %4040 = vmatpush1.msra.mxu0 0.0
    %4041 = vmatprep.subr.mxu0 0.0
    %4042 = vmatpush1.msra.mxu0 0.0
    %4043 = vmatprep.subr.mxu0 0.0
    %4044 = vmatpush1.msra.mxu0 0.0
    %4045 = vmatprep.subr.mxu0 0.0
    %4046 = vmatpush1.msra.mxu0 0.0
    %4047 = vmatprep.mubr.f32.mxu0 0.0
    %4048 = vmatmul.mubr.f32.gmra.mrb[0].mxu0 %v3965
    %v4049 = vpop.f32.mrb[0].mxu0
    %v4050 = vadd.f32 0.0, %v4049
    %v4051 = vpop.f32.mrb[0].mxu0
    %4052 = vdwg.mxu0
    %4053 = vmatprep.subr.mxu0 0.0
    %4054 = vmatpush1.msra.mxu0 %v3949
    %4055 = vmatprep.subr.mxu0 0.0
    %4056 = vmatpush1.msra.mxu0 %v3950
    %4057 = vmatprep.subr.mxu0 0.0
    %4058 = vmatpush1.msra.mxu0 %v3951
    %4059 = vmatprep.subr.mxu0 0.0
    %4060 = vmatpush1.msra.mxu0 %v3952
    %4061 = vmatprep.subr.mxu0 0.0
    %4062 = vmatpush1.msra.mxu0 %v3953
    %4063 = vmatprep.subr.mxu0 0.0
    %4064 = vmatpush1.msra.mxu0 %v3954
    %4065 = vmatprep.subr.mxu0 0.0
    %4066 = vmatpush1.msra.mxu0 %v3955
    %4067 = vmatprep.subr.mxu0 0.0
    %4068 = vmatpush1.msra.mxu0 %v3956
    %4069 = vmatprep.subr.mxu0 0.0
    %4070 = vmatpush1.msra.mxu0 %v3957
    %4071 = vmatprep.subr.mxu0 0.0
    %4072 = vmatpush1.msra.mxu0 %v3958
    %4073 = vmatprep.subr.mxu0 0.0
    %4074 = vmatpush1.msra.mxu0 %v3959
    %4075 = vmatprep.subr.mxu0 0.0
    %4076 = vmatpush1.msra.mxu0 %v3960
    %4077 = vmatprep.subr.mxu0 0.0
    %4078 = vmatpush1.msra.mxu0 %v3961
    %4079 = vmatprep.subr.mxu0 0.0
    %4080 = vmatpush1.msra.mxu0 %v3962
    %4081 = vmatprep.subr.mxu0 0.0
    %4082 = vmatpush1.msra.mxu0 %v3963
    %4083 = vmatprep.subr.mxu0 0.0
    %4084 = vmatpush1.msra.mxu0 %v3964
    %4085 = vmatprep.subr.mxu0 0.0
    %4086 = vmatpush1.msra.mxu0 0.0
    %4087 = vmatprep.subr.mxu0 0.0
    %4088 = vmatpush1.msra.mxu0 0.0
    %4089 = vmatprep.subr.mxu0 0.0
    %4090 = vmatpush1.msra.mxu0 0.0
    %4091 = vmatprep.subr.mxu0 0.0
    %4092 = vmatpush1.msra.mxu0 0.0
    %4093 = vmatprep.subr.mxu0 0.0
    %4094 = vmatpush1.msra.mxu0 0.0
    %4095 = vmatprep.subr.mxu0 0.0
    %4096 = vmatpush1.msra.mxu0 0.0
    %4097 = vmatprep.subr.mxu0 0.0
    %4098 = vmatpush1.msra.mxu0 0.0
    %4099 = vmatprep.subr.mxu0 0.0
    %4100 = vmatpush1.msra.mxu0 0.0
    %4101 = vmatprep.subr.mxu0 0.0
    %4102 = vmatpush1.msra.mxu0 0.0
    %4103 = vmatprep.subr.mxu0 0.0
    %4104 = vmatpush1.msra.mxu0 0.0
    %4105 = vmatprep.subr.mxu0 0.0
    %4106 = vmatpush1.msra.mxu0 0.0
    %4107 = vmatprep.subr.mxu0 0.0
    %4108 = vmatpush1.msra.mxu0 0.0
    %4109 = vmatprep.subr.mxu0 0.0
    %4110 = vmatpush1.msra.mxu0 0.0
    %4111 = vmatprep.subr.mxu0 0.0
    %4112 = vmatpush1.msra.mxu0 0.0
    %4113 = vmatprep.subr.mxu0 0.0
    %4114 = vmatpush1.msra.mxu0 0.0
    %4115 = vmatprep.subr.mxu0 0.0
    %4116 = vmatpush1.msra.mxu0 0.0
    %4117 = vmatprep.mubr.f32.mxu0 0.0
    %4118 = vmatmul.mubr.f32.gmra.mrb[0].mxu0 %v3947
    %v4119 = vpop.f32.mrb[0].mxu0
    %v4120 = vadd.f32 %v4050, %v4119
    %v4121 = vpop.f32.mrb[0].mxu0
    %4122 = vdwg.mxu0
    %s4123 = scalar_lea.vmem [#allocation16], 1024
    %v4124 = vld [vmem:[%s4123] sm:$0xff]
    %v4125 = vld [vmem:[%s4123 + $0x8] sm:$0xff]
    %v4126 = vld [vmem:[%s4123 + $0x10] sm:$0xff]
    %v4127 = vld [vmem:[%s4123 + $0x18] sm:$0xff]
    %v4128 = vld [vmem:[%s4123 + $0x20] sm:$0xff]
    %v4129 = vld [vmem:[%s4123 + $0x28] sm:$0xff]
    %v4130 = vld [vmem:[%s4123 + $0x30] sm:$0xff]
    %v4131 = vld [vmem:[%s4123 + $0x38] sm:$0xff]
    %v4132 = vld [vmem:[%s4123 + $0x40] sm:$0xff]
    %v4133 = vld [vmem:[%s4123 + $0x48] sm:$0xff]
    %v4134 = vld [vmem:[%s4123 + $0x50] sm:$0xff]
    %v4135 = vld [vmem:[%s4123 + $0x58] sm:$0xff]
    %v4136 = vld [vmem:[%s4123 + $0x60] sm:$0xff]
    %v4137 = vld [vmem:[%s4123 + $0x68] sm:$0xff]
    %v4138 = vld [vmem:[%s4123 + $0x70] sm:$0xff]
    %v4139 = vld [vmem:[%s4123 + $0x78] sm:$0xff]
    %4140 = vmatprep.subr.mxu0 0.0
    %4141 = vmatpush1.msra.mxu0 %v4124
    %4142 = vmatprep.subr.mxu0 0.0
    %4143 = vmatpush1.msra.mxu0 %v4125
    %4144 = vmatprep.subr.mxu0 0.0
    %4145 = vmatpush1.msra.mxu0 %v4126
    %4146 = vmatprep.subr.mxu0 0.0
    %4147 = vmatpush1.msra.mxu0 %v4127
    %4148 = vmatprep.subr.mxu0 0.0
    %4149 = vmatpush1.msra.mxu0 %v4128
    %4150 = vmatprep.subr.mxu0 0.0
    %4151 = vmatpush1.msra.mxu0 %v4129
    %4152 = vmatprep.subr.mxu0 0.0
    %4153 = vmatpush1.msra.mxu0 %v4130
    %4154 = vmatprep.subr.mxu0 0.0
    %4155 = vmatpush1.msra.mxu0 %v4131
    %4156 = vmatprep.subr.mxu0 0.0
    %4157 = vmatpush1.msra.mxu0 %v4132
    %4158 = vmatprep.subr.mxu0 0.0
    %4159 = vmatpush1.msra.mxu0 %v4133
    %4160 = vmatprep.subr.mxu0 0.0
    %4161 = vmatpush1.msra.mxu0 %v4134
    %4162 = vmatprep.subr.mxu0 0.0
    %4163 = vmatpush1.msra.mxu0 %v4135
    %4164 = vmatprep.subr.mxu0 0.0
    %4165 = vmatpush1.msra.mxu0 %v4136
    %4166 = vmatprep.subr.mxu0 0.0
    %4167 = vmatpush1.msra.mxu0 %v4137
    %4168 = vmatprep.subr.mxu0 0.0
    %4169 = vmatpush1.msra.mxu0 %v4138
    %4170 = vmatprep.subr.mxu0 0.0
    %4171 = vmatpush1.msra.mxu0 %v4139
    %4172 = vmatprep.subr.mxu0 0.0
    %4173 = vmatpush1.msra.mxu0 0.0
    %4174 = vmatprep.subr.mxu0 0.0
    %4175 = vmatpush1.msra.mxu0 0.0
    %4176 = vmatprep.subr.mxu0 0.0
    %4177 = vmatpush1.msra.mxu0 0.0
    %4178 = vmatprep.subr.mxu0 0.0
    %4179 = vmatpush1.msra.mxu0 0.0
    %4180 = vmatprep.subr.mxu0 0.0
    %4181 = vmatpush1.msra.mxu0 0.0
    %4182 = vmatprep.subr.mxu0 0.0
    %4183 = vmatpush1.msra.mxu0 0.0
    %4184 = vmatprep.subr.mxu0 0.0
    %4185 = vmatpush1.msra.mxu0 0.0
    %4186 = vmatprep.subr.mxu0 0.0
    %4187 = vmatpush1.msra.mxu0 0.0
    %4188 = vmatprep.subr.mxu0 0.0
    %4189 = vmatpush1.msra.mxu0 0.0
    %4190 = vmatprep.subr.mxu0 0.0
    %4191 = vmatpush1.msra.mxu0 0.0
    %4192 = vmatprep.subr.mxu0 0.0
    %4193 = vmatpush1.msra.mxu0 0.0
    %4194 = vmatprep.subr.mxu0 0.0
    %4195 = vmatpush1.msra.mxu0 0.0
    %4196 = vmatprep.subr.mxu0 0.0
    %4197 = vmatpush1.msra.mxu0 0.0
    %4198 = vmatprep.subr.mxu0 0.0
    %4199 = vmatpush1.msra.mxu0 0.0
    %4200 = vmatprep.subr.mxu0 0.0
    %4201 = vmatpush1.msra.mxu0 0.0
    %4202 = vmatprep.subr.mxu0 0.0
    %4203 = vmatpush1.msra.mxu0 0.0
    %4204 = vmatprep.mubr.f32.mxu0 0.0
    %4205 = vmatmul.mubr.f32.gmra.mrb[0].mxu0 %v2934
    %v4206 = vpop.f32.mrb[0].mxu0
    %v4207 = vadd.f32 0.0, %v4206
    %v4208 = vpop.f32.mrb[0].mxu0
    %4209 = vdwg.mxu0
    %v4210 = vadd.f32 %v4120, %v4207
    %s4211 = scalar_lea.vmem [#allocation17], 2
    %v4212 = vld [vmem:[%s4211] sm:$0x1]
    %v4214 = vlaneseq
    %v4215 = vshrl.u32 %v4214, 7
    %v4216 = vsub.s32 0, %v4215
    %v4217 = vrot.slane %v4212, %v4216
    %v4219 = vadd.f32 %v4210, %v4217
    %v4220 = vtanh.pop %v4219
    %v4221 = vmul.f32 %v3940, %v4220
    %v4222 = vmul.f32 %v3946, %v3922
    %v4223 = vadd.f32 %v4221, %v4222
    %v4224 = vlaneseq
    %v4225 = vand.u32 %v4224, 127
    %vm4226 = vcmp.lt.s32.totalorder %v4225, 8
    %v4227 = vsel %vm4226, %v4223, -1e+30
    %4228 = vmax.xlane.f32.xlu0 %v4227
    %v4229 = vpop.xlane.xlu0 %4228
    %v4230 = vsub.f32 %v4227, %v4229
    %v4231 = vmul.f32 %v4230, 1.442695
    %v4232 = vpow.pop %v4231
    %4233 = vadd.xlane.f32.xlu0 %v4232
    %v4234 = vpop.xlane.xlu0 %4233
    %v4235 = vlog2.pop %v4234
    %v4236 = vmul.f32 %v4235, 0.6931472
    %v4237 = vsub.f32 %v4230, %v4236
    %4238 = vst [vmem:[#allocation19] sm:$0xff] %v4237
    // Predicated region
    $region82: #{difnet_forward.1} parent=1 // pred_check
      _
    $region83: #{difnet_forward.1} parent=1 // pred_check_branch
      %4240 = sbr.rel (0) target = $region85
    $region84: #{difnet_forward.1} parent=1 // pred_region
      %s4242 = ssub.s32 128, 128
      %4243 = vsyncadd [#allocation4], %s4242
      %s4245 = sshll.u32 [#allocation19], 4
      %s4246 = int_to_ptr.vmem [resolvable:$true] %s4245
      %4248 = dma.vmem_to_hbm [thread:$0]  %s4246, 128, %s10, [#allocation4]
    $region85: #{difnet_forward.1} parent=1 // pred_fallthru
      _
    // Predicated region
    $region86: #{difnet_forward.1} parent=1 // pred_check
      _
    $region87: #{difnet_forward.1} parent=1 // pred_check_branch
      %4250 = sbr.rel (0) target = $region89
    $region88: #{difnet_forward.1} parent=1 // pred_region
      %4251 = dma.done [#allocation4], 128
    $region89: #{difnet_forward.1} parent=1 // pred_fallthru
      _
    %4252 = vsyncpa [#allocation3], 1
    %4253 = vsyncpa [#allocation6], 1
    %4254 = vsyncpa [#allocation9], 1
    %4255 = vsyncpa [#allocation12], 1
    %4256 = vsyncpa [#allocation15], 1
    %4257 = vsyncpa [#allocation18], 1
    %4258 = vsyncpa [#allocation4], 1

</llo_original>
